<compile_context>
chip_gen: v6e
topology: v6e:2x2x1
jax: 0.10.0
libtpu: 0.0.40
codegen_flags: <defaults>
</compile_context>

<pallas_src>
import jax
import jax.numpy as jnp
from jax.experimental import pallas as pl
from jax.experimental.pallas import tpu as pltpu


def mlp_kernel(x_ref, w1_ref, b1_ref, w2_ref, b2_ref, w3_ref, b3_ref, o_ref):
    # fc1 + ReLU: bf16 operands, f32 accumulate on the MXU.
    h1 = jnp.dot(x_ref[...], w1_ref[...], preferred_element_type=jnp.float32)
    h1 = jnp.maximum(h1 + b1_ref[...], 0.0)

    # fc2 + ReLU.
    h2 = jnp.dot(h1.astype(jnp.bfloat16), w2_ref[...],
                 preferred_element_type=jnp.float32)
    h2 = jnp.maximum(h2 + b2_ref[...], 0.0)

    # fc3: out_features == 1 -> VPU multiply + cross-lane (XLU) reduction
    # instead of a 1-lane-wide MXU push; bias is a scalar read from SMEM.
    y = jnp.sum(h2 * w3_ref[...], axis=-1) + b3_ref[0]   # (TB,)

    # Lane-dense store: one (1, 1, TB) row per grid step (TB % 128 == 0).
    o_ref[...] = y.reshape(o_ref.shape).astype(o_ref.dtype)


def simple_nn_forward(x, params, *, tb=512):
    """x: (B, input_size) float32. Returns (B, 1) float32."""
    w1, b1, w2, b2, w3, b3 = params
    B, D = x.shape

    num_tiles = pl.cdiv(B, tb)
    Bp = num_tiles * tb
    if Bp != B:
        x = jnp.pad(x, ((0, Bp - B), (0, 0)))

    # bf16 operands for the MXU; biases and the fc3 weight row stay f32
    # (all epilogues run in f32 on the VPU).
    xb = x.astype(jnp.bfloat16)
    w1b = w1.astype(jnp.bfloat16)
    w2b = w2.astype(jnp.bfloat16)
    w3f = w3.reshape(1, -1).astype(jnp.float32)    # (1, 64) row for the VPU reduce
    b3s = b3.reshape(1)                            # scalar bias -> SMEM

    out = pl.pallas_call(
        mlp_kernel,
        out_shape=jax.ShapeDtypeStruct((num_tiles, 1, tb), jnp.float32),
        grid=(num_tiles,),
        in_specs=[
            pl.BlockSpec((tb, D), lambda i: (i, 0)),            # streamed activations
            pl.BlockSpec(w1b.shape, lambda i: (0, 0)),          # VMEM-resident weights
            pl.BlockSpec(b1.shape, lambda i: (0, 0)),
            pl.BlockSpec(w2b.shape, lambda i: (0, 0)),
            pl.BlockSpec(b2.shape, lambda i: (0, 0)),
            pl.BlockSpec(w3f.shape, lambda i: (0, 0)),
            pl.BlockSpec(memory_space=pltpu.MemorySpace.SMEM),  # b3 scalar
        ],
        out_specs=pl.BlockSpec((1, 1, tb), lambda i: (i, 0, 0)),
        compiler_params=pltpu.CompilerParams(
            dimension_semantics=("parallel",),
        ),
    )(xb, w1b, b1, w2b, b2, w3f, b3s)

    return out.reshape(Bp, 1)[:B]


def init_params(key, input_size):
    """Deterministic init mimicking nn.Linear's U(-1/sqrt(fan_in), 1/sqrt(fan_in))."""
    dims = [(input_size, 128), (128, 64), (64, 1)]
    params = []
    for i, (fan_in, fan_out) in enumerate(dims):
        kw, kb, key = jax.random.split(jax.random.fold_in(key, i), 3)
        bound = 1.0 / jnp.sqrt(float(fan_in))
        w = jax.random.uniform(kw, (fan_in, fan_out), jnp.float32, -bound, bound)
        b = jax.random.uniform(kb, (1, fan_out), jnp.float32, -bound, bound)
        params += [w, b]
    return tuple(params)


def reference_forward(x, params, use_bf16):
    """Plain-JAX reference. use_bf16=True mirrors the kernel's mixed precision."""
    w1, b1, w2, b2, w3, b3 = params
    cast = (lambda a: a.astype(jnp.bfloat16)) if use_bf16 else (lambda a: a)
    h1 = jnp.maximum(
        jnp.dot(cast(x), cast(w1), preferred_element_type=jnp.float32) + b1, 0.0)
    h2 = jnp.maximum(
        jnp.dot(cast(h1), cast(w2), preferred_element_type=jnp.float32) + b2, 0.0)
    return jnp.dot(h2, w3.astype(jnp.float32),
                   preferred_element_type=jnp.float32) + b3


if __name__ == "__main__":
    key = jax.random.PRNGKey(0)
    input_size = 32
    batch = 8

    kx, kp = jax.random.split(key)
    x = jax.random.normal(kx, (batch, input_size), jnp.float32)
    params = init_params(kp, input_size)

    out = jax.block_until_ready(simple_nn_forward(x, params))
    assert out.shape == (batch, 1)

    # Exact-semantics check (same bf16 casts as the kernel).
    ref_bf16 = reference_forward(x, params, use_bf16=True)
    assert jnp.allclose(out, ref_bf16, atol=2e-3, rtol=2e-3)

    # Sanity check against full-f32 PyTorch-equivalent math (looser tol for bf16).
    ref_f32 = reference_forward(x, params, use_bf16=False)
    assert jnp.allclose(out, ref_f32, atol=5e-2, rtol=5e-2)

    # Exercise the multi-tile grid + ragged-batch padding path (300 -> 3 tiles of 128).
    x2 = jax.random.normal(jax.random.fold_in(kx, 1), (300, input_size), jnp.float32)
    out2 = jax.block_until_ready(simple_nn_forward(x2, params, tb=128))
    ref2 = reference_forward(x2, params, use_bf16=True)
    assert out2.shape == (300, 1)
    assert jnp.allclose(out2, ref2, atol=2e-3, rtol=2e-3)

    print("KERNEL_OK")
</pallas_src>

<mosaic_0001>
module attributes {stable_mosaic.version = 11 : i64} {
  func.func @mlp_kernel(%arg0: i32, %arg1: memref<512x32xbf16, #tpu.memory_space<vmem>>, %arg2: memref<32x128xbf16, #tpu.memory_space<vmem>>, %arg3: memref<1x128xf32, #tpu.memory_space<vmem>>, %arg4: memref<128x64xbf16, #tpu.memory_space<vmem>>, %arg5: memref<1x64xf32, #tpu.memory_space<vmem>>, %arg6: memref<1x64xf32, #tpu.memory_space<vmem>>, %arg7: memref<1xf32, #tpu.memory_space<smem>>, %arg8: memref<1x1x512xf32, #tpu.memory_space<vmem>>) attributes {dimension_semantics = [#tpu.dimension_semantics<parallel>], iteration_bounds = array<i64: 1>, scalar_prefetch = 0 : i64, scratch_operands = 0 : i64, tpu.core_type = #tpu.core_type<tc>, window_params = [{transform_indices = @transform_0, window_bounds = array<i64: 512, 32>}, {pipeline_mode = #tpu.pipeline_mode<synchronous>, transform_indices = @transform_1, window_bounds = array<i64: 32, 128>}, {pipeline_mode = #tpu.pipeline_mode<synchronous>, transform_indices = @transform_2, window_bounds = array<i64: 1, 128>}, {pipeline_mode = #tpu.pipeline_mode<synchronous>, transform_indices = @transform_3, window_bounds = array<i64: 128, 64>}, {pipeline_mode = #tpu.pipeline_mode<synchronous>, transform_indices = @transform_4, window_bounds = array<i64: 1, 64>}, {pipeline_mode = #tpu.pipeline_mode<synchronous>, transform_indices = @transform_5, window_bounds = array<i64: 1, 64>}, {transform_indices = @transform_6, window_bounds = array<i64: 1>}, {transform_indices = @transform_7, window_bounds = array<i64: 1, 1, 512>}]} {
    %c0 = arith.constant 0 : index
    %c0_0 = arith.constant 0 : index
    %0 = vector.load %arg1[%c0, %c0_0] : memref<512x32xbf16, #tpu.memory_space<vmem>>, vector<512x32xbf16>
    %c0_1 = arith.constant 0 : index
    %c0_2 = arith.constant 0 : index
    %1 = vector.load %arg2[%c0_1, %c0_2] : memref<32x128xbf16, #tpu.memory_space<vmem>>, vector<32x128xbf16>
    %cst = arith.constant dense<0.000000e+00> : vector<512x128xf32>
    %2 = tpu.matmul %0, %1, %cst {dimension_numbers = #tpu.dot_dimension_numbers<[1], [0], [0], [1], [0, 0, 1, 1], [], []>} : vector<512x32xbf16>, vector<32x128xbf16>, vector<512x128xf32> -> vector<512x128xf32>
    %c0_3 = arith.constant 0 : index
    %c0_4 = arith.constant 0 : index
    %3 = vector.load %arg3[%c0_3, %c0_4] : memref<1x128xf32, #tpu.memory_space<vmem>>, vector<1x128xf32>
    %4 = vector.broadcast %3 : vector<1x128xf32> to vector<512x128xf32>
    %5 = arith.addf %2, %4 : vector<512x128xf32>
    %cst_5 = arith.constant 0.000000e+00 : f32
    %6 = vector.broadcast %cst_5 : f32 to vector<512x128xf32>
    %7 = arith.maximumf %5, %6 : vector<512x128xf32>
    %8 = arith.truncf %7 : vector<512x128xf32> to vector<512x128xbf16>
    %c0_6 = arith.constant 0 : index
    %c0_7 = arith.constant 0 : index
    %9 = vector.load %arg4[%c0_6, %c0_7] : memref<128x64xbf16, #tpu.memory_space<vmem>>, vector<128x64xbf16>
    %cst_8 = arith.constant dense<0.000000e+00> : vector<512x64xf32>
    %10 = tpu.matmul %8, %9, %cst_8 {dimension_numbers = #tpu.dot_dimension_numbers<[1], [0], [0], [1], [0, 0, 1, 1], [], []>} : vector<512x128xbf16>, vector<128x64xbf16>, vector<512x64xf32> -> vector<512x64xf32>
    %c0_9 = arith.constant 0 : index
    %c0_10 = arith.constant 0 : index
    %11 = vector.load %arg5[%c0_9, %c0_10] : memref<1x64xf32, #tpu.memory_space<vmem>>, vector<1x64xf32>
    %12 = vector.broadcast %11 : vector<1x64xf32> to vector<512x64xf32>
    %13 = arith.addf %10, %12 : vector<512x64xf32>
    %cst_11 = arith.constant 0.000000e+00 : f32
    %14 = vector.broadcast %cst_11 : f32 to vector<512x64xf32>
    %15 = arith.maximumf %13, %14 : vector<512x64xf32>
    %c0_12 = arith.constant 0 : index
    %c0_13 = arith.constant 0 : index
    %16 = vector.load %arg6[%c0_12, %c0_13] : memref<1x64xf32, #tpu.memory_space<vmem>>, vector<1x64xf32>
    %17 = vector.broadcast %16 : vector<1x64xf32> to vector<512x64xf32>
    %18 = arith.mulf %15, %17 : vector<512x64xf32>
    %cst_14 = arith.constant dense<0.000000e+00> : vector<512xf32>
    %19 = vector.multi_reduction <add>, %18, %cst_14 [1] : vector<512x64xf32> to vector<512xf32>
    %c0_15 = arith.constant 0 : index
    %20 = memref.load %arg7[%c0_15] : memref<1xf32, #tpu.memory_space<smem>>
    %21 = vector.broadcast %20 : f32 to vector<512xf32>
    %22 = arith.addf %19, %21 : vector<512xf32>
    %23 = vector.shape_cast %22 : vector<512xf32> to vector<1x1x512xf32>
    %c0_16 = arith.constant 0 : index
    %c0_17 = arith.constant 0 : index
    %c0_18 = arith.constant 0 : index
    %24 = vector.load %arg8[%c0_16, %c0_17, %c0_18] : memref<1x1x512xf32, #tpu.memory_space<vmem>>, vector<1x1x512xf32>
    tpu.vector_store %arg8[%c0_16, %c0_17, %c0_18], %23 {strides = array<i32>} : memref<1x1x512xf32, #tpu.memory_space<vmem>>, vector<1x1x512xf32>,
    return
  }
  func.func @transform_0(%arg0: i32) -> (i32, i32) {
    %c0_i32 = arith.constant 0 : i32
    %c0_i32_0 = arith.constant 0 : i32
    return %arg0, %c0_i32 : i32, i32
  }
  func.func @transform_1(%arg0: i32) -> (i32, i32) {
    %c0_i32 = arith.constant 0 : i32
    %c0_i32_0 = arith.constant 0 : i32
    %c0_i32_1 = arith.constant 0 : i32
    return %c0_i32, %c0_i32_0 : i32, i32
  }
  func.func @transform_2(%arg0: i32) -> (i32, i32) {
    %c0_i32 = arith.constant 0 : i32
    %c0_i32_0 = arith.constant 0 : i32
    %c0_i32_1 = arith.constant 0 : i32
    return %c0_i32, %c0_i32_0 : i32, i32
  }
  func.func @transform_3(%arg0: i32) -> (i32, i32) {
    %c0_i32 = arith.constant 0 : i32
    %c0_i32_0 = arith.constant 0 : i32
    %c0_i32_1 = arith.constant 0 : i32
    return %c0_i32, %c0_i32_0 : i32, i32
  }
  func.func @transform_4(%arg0: i32) -> (i32, i32) {
    %c0_i32 = arith.constant 0 : i32
    %c0_i32_0 = arith.constant 0 : i32
    %c0_i32_1 = arith.constant 0 : i32
    return %c0_i32, %c0_i32_0 : i32, i32
  }
  func.func @transform_5(%arg0: i32) -> (i32, i32) {
    %c0_i32 = arith.constant 0 : i32
    %c0_i32_0 = arith.constant 0 : i32
    %c0_i32_1 = arith.constant 0 : i32
    return %c0_i32, %c0_i32_0 : i32, i32
  }
  func.func @transform_6(%arg0: i32) -> i32 {
    %c0_i32 = arith.constant 0 : i32
    %c0_i32_0 = arith.constant 0 : i32
    return %c0_i32 : i32
  }
  func.func @transform_7(%arg0: i32) -> (i32, i32, i32) {
    %c0_i32 = arith.constant 0 : i32
    %c0_i32_0 = arith.constant 0 : i32
    %c0_i32_1 = arith.constant 0 : i32
    return %arg0, %c0_i32, %c0_i32_0 : i32, i32, i32
  }
}

</mosaic_0001>

<llo_original>
// kernel: tpu_custom_call.1
$region0: #{tpu_custom_call.1}
  #allocation0 [shape = 'u32[]', space=smem, size = 0x4, offset = 0x4, fixed_abs, tag = 'smem constant byte address 0x4 - core index']
  #allocation1 [shape = 'u32[144,128]{1,0:T(1,128)}', space=vmem, size = 0x12000, scoped, tag = 'internal scratch']
  #allocation2 [shape = 'f32[1]{0:T(128)S(6)}', space=smem, size = 0x200, scoped, tag = 'scoped memory for tpu_custom_call.1']
  %s0 = inlined_call_operand.vmem [shape: bf16[512,32], index: 0, kind: input, shape index: {}]
  %s1 = inlined_call_operand.vmem [shape: bf16[32,128], index: 1, kind: input, shape index: {}]
  %s2 = inlined_call_operand.vmem [shape: f32[1,128], index: 2, kind: input, shape index: {}]
  %s3 = inlined_call_operand.vmem [shape: bf16[128,64], index: 3, kind: input, shape index: {}]
  %s4 = inlined_call_operand.vmem [shape: f32[1,64], index: 4, kind: input, shape index: {}]
  %s5 = inlined_call_operand.vmem [shape: f32[1,64], index: 5, kind: input, shape index: {}]
  %s6 = inlined_call_operand.<no memory space> [shape: f32[1], index: 6, kind: input, shape index: {}]
  %s7 = inlined_call_operand.hbm [shape: f32[1,1,512], index: 7, kind: output, shape index: {}]
  %s8 = sld [smem:[#allocation0]]
  $region38: #{tpu_custom_call.1} parent=0
    _
  %s10 = ssub.s32 1, %s8
  %s11 = scalar_select 0, %s10, %s8
  %12 = sst [smem:[#allocation2]] %s6
  $region1: #{tpu_custom_call.1} parent=0
    #allocation3 [shape = 'u8[2048]{0}', space=vmem, size = 0x800, scoped, tag = 'output window, operand 0, single buffered']
    #allocation4 [shape = 's32[1]{0}', space=sflag, size = 0x4, scoped, tag = 'scoped memory for tpu_custom_call.1']
    %13 = vsyncpa [#allocation4], 0
    // Predicated region
    $region2: #{tpu_custom_call.1} parent=1 // pred_check
      _
    $region3: #{tpu_custom_call.1} parent=1 // pred_check_branch
      %15 = sbr.rel (0) target = $region5
    $region4: #{tpu_custom_call.1} parent=1 // pred_region
      _
    $region5: #{tpu_custom_call.1} parent=1 // pred_fallthru
      _
    // Predicated region
    $region6: #{tpu_custom_call.1} parent=1 // pred_check
      _
    $region7: #{tpu_custom_call.1} parent=1 // pred_check_branch
      %17 = sbr.rel (0) target = $region9
    $region8: #{tpu_custom_call.1} parent=1 // pred_region
      _
    $region9: #{tpu_custom_call.1} parent=1 // pred_fallthru
      _
    // Predicated region
    $region10: #{tpu_custom_call.1} parent=1 // pred_check
      _
    $region11: #{tpu_custom_call.1} parent=1 // pred_check_branch
      %19 = sbr.rel (0) target = $region13
    $region12: #{tpu_custom_call.1} parent=1 // pred_region
      _
    $region13: #{tpu_custom_call.1} parent=1 // pred_fallthru
      _
    // Predicated region
    $region14: #{tpu_custom_call.1} parent=1 // pred_check
      _
    $region15: #{tpu_custom_call.1} parent=1 // pred_check_branch
      %21 = sbr.rel (0) target = $region17
    $region16: #{tpu_custom_call.1} parent=1 // pred_region
      _
    $region17: #{tpu_custom_call.1} parent=1 // pred_fallthru
      _
    // Predicated region
    $region18: #{tpu_custom_call.1} parent=1 // pred_check
      _
    $region19: #{tpu_custom_call.1} parent=1 // pred_check_branch
      %23 = sbr.rel (0) target = $region21
    $region20: #{tpu_custom_call.1} parent=1 // pred_region
      _
    $region21: #{tpu_custom_call.1} parent=1 // pred_fallthru
      _
    // Predicated region
    $region22: #{tpu_custom_call.1} parent=1 // pred_check
      _
    $region23: #{tpu_custom_call.1} parent=1 // pred_check_branch
      %25 = sbr.rel (0) target = $region25
    $region24: #{tpu_custom_call.1} parent=1 // pred_region
      _
    $region25: #{tpu_custom_call.1} parent=1 // pred_fallthru
      _
    // Predicated region
    $region26: #{tpu_custom_call.1} parent=1 // pred_check
      _
    $region27: #{tpu_custom_call.1} parent=1 // pred_check_branch
      %27 = sbr.rel (0) target = $region29
    $region28: #{tpu_custom_call.1} parent=1 // pred_region
      _
    $region29: #{tpu_custom_call.1} parent=1 // pred_fallthru
      _
    %v29 = vld [vmem:[%s0] sm:$0xf]
    %v30 = vld [vmem:[%s0 + $0x4] sm:$0xf]
    %v31 = vld [vmem:[%s0 + $0x8] sm:$0xf]
    %v32 = vld [vmem:[%s0 + $0xc] sm:$0xf]
    %v33 = vld [vmem:[%s0 + $0x10] sm:$0xf]
    %v34 = vld [vmem:[%s0 + $0x14] sm:$0xf]
    %v35 = vld [vmem:[%s0 + $0x18] sm:$0xf]
    %v36 = vld [vmem:[%s0 + $0x1c] sm:$0xf]
    %v37 = vld [vmem:[%s0 + $0x20] sm:$0xf]
    %v38 = vld [vmem:[%s0 + $0x24] sm:$0xf]
    %v39 = vld [vmem:[%s0 + $0x28] sm:$0xf]
    %v40 = vld [vmem:[%s0 + $0x2c] sm:$0xf]
    %v41 = vld [vmem:[%s0 + $0x30] sm:$0xf]
    %v42 = vld [vmem:[%s0 + $0x34] sm:$0xf]
    %v43 = vld [vmem:[%s0 + $0x38] sm:$0xf]
    %v44 = vld [vmem:[%s0 + $0x3c] sm:$0xf]
    %v45 = vld [vmem:[%s0 + $0x40] sm:$0xf]
    %v46 = vld [vmem:[%s0 + $0x44] sm:$0xf]
    %v47 = vld [vmem:[%s0 + $0x48] sm:$0xf]
    %v48 = vld [vmem:[%s0 + $0x4c] sm:$0xf]
    %v49 = vld [vmem:[%s0 + $0x50] sm:$0xf]
    %v50 = vld [vmem:[%s0 + $0x54] sm:$0xf]
    %v51 = vld [vmem:[%s0 + $0x58] sm:$0xf]
    %v52 = vld [vmem:[%s0 + $0x5c] sm:$0xf]
    %v53 = vld [vmem:[%s0 + $0x60] sm:$0xf]
    %v54 = vld [vmem:[%s0 + $0x64] sm:$0xf]
    %v55 = vld [vmem:[%s0 + $0x68] sm:$0xf]
    %v56 = vld [vmem:[%s0 + $0x6c] sm:$0xf]
    %v57 = vld [vmem:[%s0 + $0x70] sm:$0xf]
    %v58 = vld [vmem:[%s0 + $0x74] sm:$0xf]
    %v59 = vld [vmem:[%s0 + $0x78] sm:$0xf]
    %v60 = vld [vmem:[%s0 + $0x7c] sm:$0xf]
    %v61 = vld [vmem:[%s0 + $0x80] sm:$0xf]
    %v62 = vld [vmem:[%s0 + $0x84] sm:$0xf]
    %v63 = vld [vmem:[%s0 + $0x88] sm:$0xf]
    %v64 = vld [vmem:[%s0 + $0x8c] sm:$0xf]
    %v65 = vld [vmem:[%s0 + $0x90] sm:$0xf]
    %v66 = vld [vmem:[%s0 + $0x94] sm:$0xf]
    %v67 = vld [vmem:[%s0 + $0x98] sm:$0xf]
    %v68 = vld [vmem:[%s0 + $0x9c] sm:$0xf]
    %v69 = vld [vmem:[%s0 + $0xa0] sm:$0xf]
    %v70 = vld [vmem:[%s0 + $0xa4] sm:$0xf]
    %v71 = vld [vmem:[%s0 + $0xa8] sm:$0xf]
    %v72 = vld [vmem:[%s0 + $0xac] sm:$0xf]
    %v73 = vld [vmem:[%s0 + $0xb0] sm:$0xf]
    %v74 = vld [vmem:[%s0 + $0xb4] sm:$0xf]
    %v75 = vld [vmem:[%s0 + $0xb8] sm:$0xf]
    %v76 = vld [vmem:[%s0 + $0xbc] sm:$0xf]
    %v77 = vld [vmem:[%s0 + $0xc0] sm:$0xf]
    %v78 = vld [vmem:[%s0 + $0xc4] sm:$0xf]
    %v79 = vld [vmem:[%s0 + $0xc8] sm:$0xf]
    %v80 = vld [vmem:[%s0 + $0xcc] sm:$0xf]
    %v81 = vld [vmem:[%s0 + $0xd0] sm:$0xf]
    %v82 = vld [vmem:[%s0 + $0xd4] sm:$0xf]
    %v83 = vld [vmem:[%s0 + $0xd8] sm:$0xf]
    %v84 = vld [vmem:[%s0 + $0xdc] sm:$0xf]
    %v85 = vld [vmem:[%s0 + $0xe0] sm:$0xf]
    %v86 = vld [vmem:[%s0 + $0xe4] sm:$0xf]
    %v87 = vld [vmem:[%s0 + $0xe8] sm:$0xf]
    %v88 = vld [vmem:[%s0 + $0xec] sm:$0xf]
    %v89 = vld [vmem:[%s0 + $0xf0] sm:$0xf]
    %v90 = vld [vmem:[%s0 + $0xf4] sm:$0xf]
    %v91 = vld [vmem:[%s0 + $0xf8] sm:$0xf]
    %v92 = vld [vmem:[%s0 + $0xfc] sm:$0xf]
    %v93 = vld [vmem:[%s1] sm:$0xf]
    %v94 = vld [vmem:[%s1 + $0x4] sm:$0xf]
    %v95 = vld [vmem:[%s1 + $0x8] sm:$0xf]
    %v96 = vld [vmem:[%s1 + $0xc] sm:$0xf]
    %v97 = vld [vmem:[%s2] sm:$0x1]
    %v99 = vlaneseq
    %v100 = vshrl.u32 %v99, 7
    %v101 = vsub.s32 0, %v100
    %v102 = vrot.slane %v97, %v101
    %v168 = vunpack.c.l.b16 %v29
    %v169 = vunpack.c.l.b16 %v30
    %v170 = vunpack.c.l.b16 %v31
    %v171 = vunpack.c.l.b16 %v32
    %v172 = vunpack.c.l.b16 %v33
    %v173 = vunpack.c.l.b16 %v34
    %v174 = vunpack.c.l.b16 %v35
    %v175 = vunpack.c.l.b16 %v36
    %v176 = vunpack.c.l.b16 %v37
    %v177 = vunpack.c.l.b16 %v38
    %v178 = vunpack.c.l.b16 %v39
    %v179 = vunpack.c.l.b16 %v40
    %v180 = vunpack.c.l.b16 %v41
    %v181 = vunpack.c.l.b16 %v42
    %v182 = vunpack.c.l.b16 %v43
    %v183 = vunpack.c.l.b16 %v44
    %v184 = vunpack.c.l.b16 %v45
    %v185 = vunpack.c.l.b16 %v46
    %v186 = vunpack.c.l.b16 %v47
    %v187 = vunpack.c.l.b16 %v48
    %v188 = vunpack.c.l.b16 %v49
    %v189 = vunpack.c.l.b16 %v50
    %v190 = vunpack.c.l.b16 %v51
    %v191 = vunpack.c.l.b16 %v52
    %v192 = vunpack.c.l.b16 %v53
    %v193 = vunpack.c.l.b16 %v54
    %v194 = vunpack.c.l.b16 %v55
    %v195 = vunpack.c.l.b16 %v56
    %v196 = vunpack.c.l.b16 %v57
    %v197 = vunpack.c.l.b16 %v58
    %v198 = vunpack.c.l.b16 %v59
    %v199 = vunpack.c.l.b16 %v60
    %v200 = vunpack.c.l.b16 %v61
    %v201 = vunpack.c.l.b16 %v62
    %v202 = vunpack.c.l.b16 %v63
    %v203 = vunpack.c.l.b16 %v64
    %v204 = vunpack.c.l.b16 %v65
    %v205 = vunpack.c.l.b16 %v66
    %v206 = vunpack.c.l.b16 %v67
    %v207 = vunpack.c.l.b16 %v68
    %v208 = vunpack.c.l.b16 %v69
    %v209 = vunpack.c.l.b16 %v70
    %v210 = vunpack.c.l.b16 %v71
    %v211 = vunpack.c.l.b16 %v72
    %v212 = vunpack.c.l.b16 %v73
    %v213 = vunpack.c.l.b16 %v74
    %v214 = vunpack.c.l.b16 %v75
    %v215 = vunpack.c.l.b16 %v76
    %v216 = vunpack.c.l.b16 %v77
    %v217 = vunpack.c.l.b16 %v78
    %v218 = vunpack.c.l.b16 %v79
    %v219 = vunpack.c.l.b16 %v80
    %v220 = vunpack.c.l.b16 %v81
    %v221 = vunpack.c.l.b16 %v82
    %v222 = vunpack.c.l.b16 %v83
    %v223 = vunpack.c.l.b16 %v84
    %v224 = vunpack.c.l.b16 %v85
    %v225 = vunpack.c.l.b16 %v86
    %v226 = vunpack.c.l.b16 %v87
    %v227 = vunpack.c.l.b16 %v88
    %v228 = vunpack.c.l.b16 %v89
    %v229 = vunpack.c.l.b16 %v90
    %v230 = vunpack.c.l.b16 %v91
    %v231 = vunpack.c.l.b16 %v92
    %v232 = vpack.c.b16 %v169, %v168
    %v233 = vpack.c.b16 %v171, %v170
    %v234 = vpack.c.b16 %v173, %v172
    %v235 = vpack.c.b16 %v175, %v174
    %v236 = vpack.c.b16 %v177, %v176
    %v237 = vpack.c.b16 %v179, %v178
    %v238 = vpack.c.b16 %v181, %v180
    %v239 = vpack.c.b16 %v183, %v182
    %v240 = vpack.c.b16 %v185, %v184
    %v241 = vpack.c.b16 %v187, %v186
    %v242 = vpack.c.b16 %v189, %v188
    %v243 = vpack.c.b16 %v191, %v190
    %v244 = vpack.c.b16 %v193, %v192
    %v245 = vpack.c.b16 %v195, %v194
    %v246 = vpack.c.b16 %v197, %v196
    %v247 = vpack.c.b16 %v199, %v198
    %v248 = vpack.c.b16 %v201, %v200
    %v249 = vpack.c.b16 %v203, %v202
    %v250 = vpack.c.b16 %v205, %v204
    %v251 = vpack.c.b16 %v207, %v206
    %v252 = vpack.c.b16 %v209, %v208
    %v253 = vpack.c.b16 %v211, %v210
    %v254 = vpack.c.b16 %v213, %v212
    %v255 = vpack.c.b16 %v215, %v214
    %v256 = vpack.c.b16 %v217, %v216
    %v257 = vpack.c.b16 %v219, %v218
    %v258 = vpack.c.b16 %v221, %v220
    %v259 = vpack.c.b16 %v223, %v222
    %v260 = vpack.c.b16 %v225, %v224
    %v261 = vpack.c.b16 %v227, %v226
    %v262 = vpack.c.b16 %v229, %v228
    %v263 = vpack.c.b16 %v231, %v230
    %v268 = vunpack.c.l.b16 %v93
    %v269 = vunpack.c.l.b16 %v94
    %v270 = vunpack.c.l.b16 %v95
    %v271 = vunpack.c.l.b16 %v96
    %v272 = vpack.c.b16 %v269, %v268
    %v273 = vpack.c.b16 %v271, %v270
    %vm276 = vcmask 261120
    %v278 = vsel %vm276, %v232, 0
    %v281 = vsel %vm276, %v233, 0
    %v284 = vsel %vm276, %v234, 0
    %v287 = vsel %vm276, %v235, 0
    %v290 = vsel %vm276, %v236, 0
    %v293 = vsel %vm276, %v237, 0
    %v296 = vsel %vm276, %v238, 0
    %v299 = vsel %vm276, %v239, 0
    %v302 = vsel %vm276, %v240, 0
    %v305 = vsel %vm276, %v241, 0
    %v308 = vsel %vm276, %v242, 0
    %v311 = vsel %vm276, %v243, 0
    %v314 = vsel %vm276, %v244, 0
    %v317 = vsel %vm276, %v245, 0
    %v320 = vsel %vm276, %v246, 0
    %v323 = vsel %vm276, %v247, 0
    %v326 = vsel %vm276, %v248, 0
    %v329 = vsel %vm276, %v249, 0
    %v332 = vsel %vm276, %v250, 0
    %v335 = vsel %vm276, %v251, 0
    %v338 = vsel %vm276, %v252, 0
    %v341 = vsel %vm276, %v253, 0
    %v344 = vsel %vm276, %v254, 0
    %v347 = vsel %vm276, %v255, 0
    %v350 = vsel %vm276, %v256, 0
    %v353 = vsel %vm276, %v257, 0
    %v356 = vsel %vm276, %v258, 0
    %v359 = vsel %vm276, %v259, 0
    %v362 = vsel %vm276, %v260, 0
    %v365 = vsel %vm276, %v261, 0
    %v368 = vsel %vm276, %v262, 0
    %v371 = vsel %vm276, %v263, 0
    %373 = vmatprep.subr.bf16.mxu0 0
    %374 = vmatpush1.bf16.msra.mxu0 0
    %375 = vmatprep.subr.bf16.mxu0 0
    %376 = vmatpush1.bf16.msra.mxu0 0
    %377 = vmatprep.subr.bf16.mxu0 0
    %378 = vmatpush1.bf16.msra.mxu0 0
    %379 = vmatprep.subr.bf16.mxu0 0
    %380 = vmatpush1.bf16.msra.mxu0 0
    %381 = vmatprep.subr.bf16.mxu0 0
    %382 = vmatpush1.bf16.msra.mxu0 0
    %383 = vmatprep.subr.bf16.mxu0 0
    %384 = vmatpush1.bf16.msra.mxu0 0
    %385 = vmatprep.subr.bf16.mxu0 0
    %386 = vmatpush1.bf16.msra.mxu0 %v273
    %387 = vmatprep.subr.bf16.mxu0 0
    %388 = vmatpush1.bf16.msra.mxu0 %v272
    %389 = vmatprep.subr.bf16.mxu0 0
    %390 = vmatpush2.bf16.msra.mxu0 0
    %391 = vmatprep.subr.bf16.mxu0 0
    %392 = vmatpush2.bf16.msra.mxu0 0
    %393 = vmatprep.subr.bf16.mxu0 0
    %394 = vmatpush2.bf16.msra.mxu0 0
    %395 = vmatprep.subr.bf16.mxu0 0
    %396 = vmatpush2.bf16.msra.mxu0 0
    %397 = vmatprep.subr.bf16.mxu0 0
    %398 = vmatpush2.bf16.msra.mxu0 0
    %399 = vmatprep.subr.bf16.mxu0 0
    %400 = vmatpush2.bf16.msra.mxu0 0
    %401 = vmatprep.subr.bf16.mxu0 0
    %402 = vmatpush2.bf16.msra.mxu0 0
    %403 = vmatprep.subr.bf16.mxu0 0
    %404 = vmatpush2.bf16.msra.mxu0 0
    %405 = vmatprep.mubr.bf16.mxu0 0
    %406 = vmatmul.mubr.bf16.gmra.mxu0 %v278
    %v407 = vpop.f32.mrf.mxu0
    %v408 = vadd.f32 %v102, %v407
    %v409 = vpop.f32.mrf.mxu0
    %v410 = vpop.f32.mrf.mxu0
    %v411 = vadd.f32 %v102, %v410
    %v412 = vpop.f32.mrf.mxu0
    %413 = vmatprep.mubr.bf16.mxu0 0
    %414 = vmatmul.mubr.bf16.gmra.mxu0 %v281
    %v415 = vpop.f32.mrf.mxu0
    %v416 = vadd.f32 %v102, %v415
    %v417 = vpop.f32.mrf.mxu0
    %v418 = vpop.f32.mrf.mxu0
    %v419 = vadd.f32 %v102, %v418
    %v420 = vpop.f32.mrf.mxu0
    %421 = vmatprep.mubr.bf16.mxu0 0
    %422 = vmatmul.mubr.bf16.gmra.mxu0 %v284
    %v423 = vpop.f32.mrf.mxu0
    %v424 = vadd.f32 %v102, %v423
    %v425 = vpop.f32.mrf.mxu0
    %v426 = vpop.f32.mrf.mxu0
    %v427 = vadd.f32 %v102, %v426
    %v428 = vpop.f32.mrf.mxu0
    %429 = vmatprep.mubr.bf16.mxu0 0
    %430 = vmatmul.mubr.bf16.gmra.mxu0 %v287
    %v431 = vpop.f32.mrf.mxu0
    %v432 = vadd.f32 %v102, %v431
    %v433 = vpop.f32.mrf.mxu0
    %v434 = vpop.f32.mrf.mxu0
    %v435 = vadd.f32 %v102, %v434
    %v436 = vpop.f32.mrf.mxu0
    %437 = vmatprep.mubr.bf16.mxu0 0
    %438 = vmatmul.mubr.bf16.gmra.mxu0 %v290
    %v439 = vpop.f32.mrf.mxu0
    %v440 = vadd.f32 %v102, %v439
    %v441 = vpop.f32.mrf.mxu0
    %v442 = vpop.f32.mrf.mxu0
    %v443 = vadd.f32 %v102, %v442
    %v444 = vpop.f32.mrf.mxu0
    %445 = vmatprep.mubr.bf16.mxu0 0
    %446 = vmatmul.mubr.bf16.gmra.mxu0 %v293
    %v447 = vpop.f32.mrf.mxu0
    %v448 = vadd.f32 %v102, %v447
    %v449 = vpop.f32.mrf.mxu0
    %v450 = vpop.f32.mrf.mxu0
    %v451 = vadd.f32 %v102, %v450
    %v452 = vpop.f32.mrf.mxu0
    %453 = vmatprep.mubr.bf16.mxu0 0
    %454 = vmatmul.mubr.bf16.gmra.mxu0 %v296
    %v455 = vpop.f32.mrf.mxu0
    %v456 = vadd.f32 %v102, %v455
    %v457 = vpop.f32.mrf.mxu0
    %v458 = vpop.f32.mrf.mxu0
    %v459 = vadd.f32 %v102, %v458
    %v460 = vpop.f32.mrf.mxu0
    %461 = vmatprep.mubr.bf16.mxu0 0
    %462 = vmatmul.mubr.bf16.gmra.mxu0 %v299
    %v463 = vpop.f32.mrf.mxu0
    %v464 = vadd.f32 %v102, %v463
    %v465 = vpop.f32.mrf.mxu0
    %v466 = vpop.f32.mrf.mxu0
    %v467 = vadd.f32 %v102, %v466
    %v468 = vpop.f32.mrf.mxu0
    %469 = vmatprep.mubr.bf16.mxu0 0
    %470 = vmatmul.mubr.bf16.gmra.mxu0 %v302
    %v471 = vpop.f32.mrf.mxu0
    %v472 = vadd.f32 %v102, %v471
    %v473 = vpop.f32.mrf.mxu0
    %v474 = vpop.f32.mrf.mxu0
    %v475 = vadd.f32 %v102, %v474
    %v476 = vpop.f32.mrf.mxu0
    %477 = vmatprep.mubr.bf16.mxu0 0
    %478 = vmatmul.mubr.bf16.gmra.mxu0 %v305
    %v479 = vpop.f32.mrf.mxu0
    %v480 = vadd.f32 %v102, %v479
    %v481 = vpop.f32.mrf.mxu0
    %v482 = vpop.f32.mrf.mxu0
    %v483 = vadd.f32 %v102, %v482
    %v484 = vpop.f32.mrf.mxu0
    %485 = vmatprep.mubr.bf16.mxu0 0
    %486 = vmatmul.mubr.bf16.gmra.mxu0 %v308
    %v487 = vpop.f32.mrf.mxu0
    %v488 = vadd.f32 %v102, %v487
    %v489 = vpop.f32.mrf.mxu0
    %v490 = vpop.f32.mrf.mxu0
    %v491 = vadd.f32 %v102, %v490
    %v492 = vpop.f32.mrf.mxu0
    %493 = vmatprep.mubr.bf16.mxu0 0
    %494 = vmatmul.mubr.bf16.gmra.mxu0 %v311
    %v495 = vpop.f32.mrf.mxu0
    %v496 = vadd.f32 %v102, %v495
    %v497 = vpop.f32.mrf.mxu0
    %v498 = vpop.f32.mrf.mxu0
    %v499 = vadd.f32 %v102, %v498
    %v500 = vpop.f32.mrf.mxu0
    %501 = vmatprep.mubr.bf16.mxu0 0
    %502 = vmatmul.mubr.bf16.gmra.mxu0 %v314
    %v503 = vpop.f32.mrf.mxu0
    %v504 = vadd.f32 %v102, %v503
    %v505 = vpop.f32.mrf.mxu0
    %v506 = vpop.f32.mrf.mxu0
    %v507 = vadd.f32 %v102, %v506
    %v508 = vpop.f32.mrf.mxu0
    %509 = vmatprep.mubr.bf16.mxu0 0
    %510 = vmatmul.mubr.bf16.gmra.mxu0 %v317
    %v511 = vpop.f32.mrf.mxu0
    %v512 = vadd.f32 %v102, %v511
    %v513 = vpop.f32.mrf.mxu0
    %v514 = vpop.f32.mrf.mxu0
    %v515 = vadd.f32 %v102, %v514
    %v516 = vpop.f32.mrf.mxu0
    %517 = vmatprep.mubr.bf16.mxu0 0
    %518 = vmatmul.mubr.bf16.gmra.mxu0 %v320
    %v519 = vpop.f32.mrf.mxu0
    %v520 = vadd.f32 %v102, %v519
    %v521 = vpop.f32.mrf.mxu0
    %v522 = vpop.f32.mrf.mxu0
    %v523 = vadd.f32 %v102, %v522
    %v524 = vpop.f32.mrf.mxu0
    %525 = vmatprep.mubr.bf16.mxu0 0
    %526 = vmatmul.mubr.bf16.gmra.mxu0 %v323
    %v527 = vpop.f32.mrf.mxu0
    %v528 = vadd.f32 %v102, %v527
    %v529 = vpop.f32.mrf.mxu0
    %v530 = vpop.f32.mrf.mxu0
    %v531 = vadd.f32 %v102, %v530
    %v532 = vpop.f32.mrf.mxu0
    %533 = vmatprep.mubr.bf16.mxu0 0
    %534 = vmatmul.mubr.bf16.gmra.mxu0 %v326
    %v535 = vpop.f32.mrf.mxu0
    %v536 = vadd.f32 %v102, %v535
    %v537 = vpop.f32.mrf.mxu0
    %v538 = vpop.f32.mrf.mxu0
    %v539 = vadd.f32 %v102, %v538
    %v540 = vpop.f32.mrf.mxu0
    %541 = vmatprep.mubr.bf16.mxu0 0
    %542 = vmatmul.mubr.bf16.gmra.mxu0 %v329
    %v543 = vpop.f32.mrf.mxu0
    %v544 = vadd.f32 %v102, %v543
    %v545 = vpop.f32.mrf.mxu0
    %v546 = vpop.f32.mrf.mxu0
    %v547 = vadd.f32 %v102, %v546
    %v548 = vpop.f32.mrf.mxu0
    %549 = vmatprep.mubr.bf16.mxu0 0
    %550 = vmatmul.mubr.bf16.gmra.mxu0 %v332
    %v551 = vpop.f32.mrf.mxu0
    %v552 = vadd.f32 %v102, %v551
    %v553 = vpop.f32.mrf.mxu0
    %v554 = vpop.f32.mrf.mxu0
    %v555 = vadd.f32 %v102, %v554
    %v556 = vpop.f32.mrf.mxu0
    %557 = vmatprep.mubr.bf16.mxu0 0
    %558 = vmatmul.mubr.bf16.gmra.mxu0 %v335
    %v559 = vpop.f32.mrf.mxu0
    %v560 = vadd.f32 %v102, %v559
    %v561 = vpop.f32.mrf.mxu0
    %v562 = vpop.f32.mrf.mxu0
    %v563 = vadd.f32 %v102, %v562
    %v564 = vpop.f32.mrf.mxu0
    %565 = vmatprep.mubr.bf16.mxu0 0
    %566 = vmatmul.mubr.bf16.gmra.mxu0 %v338
    %v567 = vpop.f32.mrf.mxu0
    %v568 = vadd.f32 %v102, %v567
    %v569 = vpop.f32.mrf.mxu0
    %v570 = vpop.f32.mrf.mxu0
    %v571 = vadd.f32 %v102, %v570
    %v572 = vpop.f32.mrf.mxu0
    %573 = vmatprep.mubr.bf16.mxu0 0
    %574 = vmatmul.mubr.bf16.gmra.mxu0 %v341
    %v575 = vpop.f32.mrf.mxu0
    %v576 = vadd.f32 %v102, %v575
    %v577 = vpop.f32.mrf.mxu0
    %v578 = vpop.f32.mrf.mxu0
    %v579 = vadd.f32 %v102, %v578
    %v580 = vpop.f32.mrf.mxu0
    %581 = vmatprep.mubr.bf16.mxu0 0
    %582 = vmatmul.mubr.bf16.gmra.mxu0 %v344
    %v583 = vpop.f32.mrf.mxu0
    %v584 = vadd.f32 %v102, %v583
    %v585 = vpop.f32.mrf.mxu0
    %v586 = vpop.f32.mrf.mxu0
    %v587 = vadd.f32 %v102, %v586
    %v588 = vpop.f32.mrf.mxu0
    %589 = vmatprep.mubr.bf16.mxu0 0
    %590 = vmatmul.mubr.bf16.gmra.mxu0 %v347
    %v591 = vpop.f32.mrf.mxu0
    %v592 = vadd.f32 %v102, %v591
    %v593 = vpop.f32.mrf.mxu0
    %v594 = vpop.f32.mrf.mxu0
    %v595 = vadd.f32 %v102, %v594
    %v596 = vpop.f32.mrf.mxu0
    %597 = vmatprep.mubr.bf16.mxu0 0
    %598 = vmatmul.mubr.bf16.gmra.mxu0 %v350
    %v599 = vpop.f32.mrf.mxu0
    %v600 = vadd.f32 %v102, %v599
    %v601 = vpop.f32.mrf.mxu0
    %v602 = vpop.f32.mrf.mxu0
    %v603 = vadd.f32 %v102, %v602
    %v604 = vpop.f32.mrf.mxu0
    %605 = vmatprep.mubr.bf16.mxu0 0
    %606 = vmatmul.mubr.bf16.gmra.mxu0 %v353
    %v607 = vpop.f32.mrf.mxu0
    %v608 = vadd.f32 %v102, %v607
    %v609 = vpop.f32.mrf.mxu0
    %v610 = vpop.f32.mrf.mxu0
    %v611 = vadd.f32 %v102, %v610
    %v612 = vpop.f32.mrf.mxu0
    %613 = vmatprep.mubr.bf16.mxu0 0
    %614 = vmatmul.mubr.bf16.gmra.mxu0 %v356
    %v615 = vpop.f32.mrf.mxu0
    %v616 = vadd.f32 %v102, %v615
    %v617 = vpop.f32.mrf.mxu0
    %v618 = vpop.f32.mrf.mxu0
    %v619 = vadd.f32 %v102, %v618
    %v620 = vpop.f32.mrf.mxu0
    %621 = vmatprep.mubr.bf16.mxu0 0
    %622 = vmatmul.mubr.bf16.gmra.mxu0 %v359
    %v623 = vpop.f32.mrf.mxu0
    %v624 = vadd.f32 %v102, %v623
    %v625 = vpop.f32.mrf.mxu0
    %v626 = vpop.f32.mrf.mxu0
    %v627 = vadd.f32 %v102, %v626
    %v628 = vpop.f32.mrf.mxu0
    %629 = vmatprep.mubr.bf16.mxu0 0
    %630 = vmatmul.mubr.bf16.gmra.mxu0 %v362
    %v631 = vpop.f32.mrf.mxu0
    %v632 = vadd.f32 %v102, %v631
    %v633 = vpop.f32.mrf.mxu0
    %v634 = vpop.f32.mrf.mxu0
    %v635 = vadd.f32 %v102, %v634
    %v636 = vpop.f32.mrf.mxu0
    %637 = vmatprep.mubr.bf16.mxu0 0
    %638 = vmatmul.mubr.bf16.gmra.mxu0 %v365
    %v639 = vpop.f32.mrf.mxu0
    %v640 = vadd.f32 %v102, %v639
    %v641 = vpop.f32.mrf.mxu0
    %v642 = vpop.f32.mrf.mxu0
    %v643 = vadd.f32 %v102, %v642
    %v644 = vpop.f32.mrf.mxu0
    %645 = vmatprep.mubr.bf16.mxu0 0
    %646 = vmatmul.mubr.bf16.gmra.mxu0 %v368
    %v647 = vpop.f32.mrf.mxu0
    %v648 = vadd.f32 %v102, %v647
    %v649 = vpop.f32.mrf.mxu0
    %v650 = vpop.f32.mrf.mxu0
    %v651 = vadd.f32 %v102, %v650
    %v652 = vpop.f32.mrf.mxu0
    %653 = vmatprep.mubr.bf16.mxu0 0
    %654 = vmatmul.mubr.bf16.gmra.mxu0 %v371
    %v655 = vpop.f32.mrf.mxu0
    %v656 = vadd.f32 %v102, %v655
    %v657 = vpop.f32.mrf.mxu0
    %v658 = vpop.f32.mrf.mxu0
    %v659 = vadd.f32 %v102, %v658
    %v660 = vpop.f32.mrf.mxu0
    %661 = vdwg.mxu0
    %v662 = vmax.f32 %v408, 0.0
    %v663 = vmax.f32 %v411, 0.0
    %v664 = vmax.f32 %v416, 0.0
    %v665 = vmax.f32 %v419, 0.0
    %v666 = vmax.f32 %v424, 0.0
    %v667 = vmax.f32 %v427, 0.0
    %v668 = vmax.f32 %v432, 0.0
    %v669 = vmax.f32 %v435, 0.0
    %v670 = vmax.f32 %v440, 0.0
    %v671 = vmax.f32 %v443, 0.0
    %v672 = vmax.f32 %v448, 0.0
    %v673 = vmax.f32 %v451, 0.0
    %v674 = vmax.f32 %v456, 0.0
    %v675 = vmax.f32 %v459, 0.0
    %v676 = vmax.f32 %v464, 0.0
    %v677 = vmax.f32 %v467, 0.0
    %v678 = vmax.f32 %v472, 0.0
    %v679 = vmax.f32 %v475, 0.0
    %v680 = vmax.f32 %v480, 0.0
    %v681 = vmax.f32 %v483, 0.0
    %v682 = vmax.f32 %v488, 0.0
    %v683 = vmax.f32 %v491, 0.0
    %v684 = vmax.f32 %v496, 0.0
    %v685 = vmax.f32 %v499, 0.0
    %v686 = vmax.f32 %v504, 0.0
    %v687 = vmax.f32 %v507, 0.0
    %v688 = vmax.f32 %v512, 0.0
    %v689 = vmax.f32 %v515, 0.0
    %v690 = vmax.f32 %v520, 0.0
    %v691 = vmax.f32 %v523, 0.0
    %v692 = vmax.f32 %v528, 0.0
    %v693 = vmax.f32 %v531, 0.0
    %v694 = vmax.f32 %v536, 0.0
    %v695 = vmax.f32 %v539, 0.0
    %v696 = vmax.f32 %v544, 0.0
    %v697 = vmax.f32 %v547, 0.0
    %v698 = vmax.f32 %v552, 0.0
    %v699 = vmax.f32 %v555, 0.0
    %v700 = vmax.f32 %v560, 0.0
    %v701 = vmax.f32 %v563, 0.0
    %v702 = vmax.f32 %v568, 0.0
    %v703 = vmax.f32 %v571, 0.0
    %v704 = vmax.f32 %v576, 0.0
    %v705 = vmax.f32 %v579, 0.0
    %v706 = vmax.f32 %v584, 0.0
    %v707 = vmax.f32 %v587, 0.0
    %v708 = vmax.f32 %v592, 0.0
    %v709 = vmax.f32 %v595, 0.0
    %v710 = vmax.f32 %v600, 0.0
    %v711 = vmax.f32 %v603, 0.0
    %v712 = vmax.f32 %v608, 0.0
    %v713 = vmax.f32 %v611, 0.0
    %v714 = vmax.f32 %v616, 0.0
    %v715 = vmax.f32 %v619, 0.0
    %v716 = vmax.f32 %v624, 0.0
    %v717 = vmax.f32 %v627, 0.0
    %v718 = vmax.f32 %v632, 0.0
    %v719 = vmax.f32 %v635, 0.0
    %v720 = vmax.f32 %v640, 0.0
    %v721 = vmax.f32 %v643, 0.0
    %v722 = vmax.f32 %v648, 0.0
    %v723 = vmax.f32 %v651, 0.0
    %v724 = vmax.f32 %v656, 0.0
    %v725 = vmax.f32 %v659, 0.0
    %v726 = vpack.c.bf16 %v663, %v662
    %v727 = vpack.c.bf16 %v665, %v664
    %v728 = vpack.c.bf16 %v667, %v666
    %v729 = vpack.c.bf16 %v669, %v668
    %v730 = vpack.c.bf16 %v671, %v670
    %v731 = vpack.c.bf16 %v673, %v672
    %v732 = vpack.c.bf16 %v675, %v674
    %v733 = vpack.c.bf16 %v677, %v676
    %v734 = vpack.c.bf16 %v679, %v678
    %v735 = vpack.c.bf16 %v681, %v680
    %v736 = vpack.c.bf16 %v683, %v682
    %v737 = vpack.c.bf16 %v685, %v684
    %v738 = vpack.c.bf16 %v687, %v686
    %v739 = vpack.c.bf16 %v689, %v688
    %v740 = vpack.c.bf16 %v691, %v690
    %v741 = vpack.c.bf16 %v693, %v692
    %v742 = vpack.c.bf16 %v695, %v694
    %v743 = vpack.c.bf16 %v697, %v696
    %v744 = vpack.c.bf16 %v699, %v698
    %v745 = vpack.c.bf16 %v701, %v700
    %v746 = vpack.c.bf16 %v703, %v702
    %v747 = vpack.c.bf16 %v705, %v704
    %v748 = vpack.c.bf16 %v707, %v706
    %v749 = vpack.c.bf16 %v709, %v708
    %v750 = vpack.c.bf16 %v711, %v710
    %v751 = vpack.c.bf16 %v713, %v712
    %v752 = vpack.c.bf16 %v715, %v714
    %v753 = vpack.c.bf16 %v717, %v716
    %v754 = vpack.c.bf16 %v719, %v718
    %v755 = vpack.c.bf16 %v721, %v720
    %v756 = vpack.c.bf16 %v723, %v722
    %v757 = vpack.c.bf16 %v725, %v724
    %v758 = vld [vmem:[%s3] sm:$0xf]
    %v759 = vld [vmem:[%s3 + $0x4] sm:$0xf]
    %v760 = vld [vmem:[%s3 + $0x8] sm:$0xf]
    %v761 = vld [vmem:[%s3 + $0xc] sm:$0xf]
    %v762 = vld [vmem:[%s3 + $0x10] sm:$0xf]
    %v763 = vld [vmem:[%s3 + $0x14] sm:$0xf]
    %v764 = vld [vmem:[%s3 + $0x18] sm:$0xf]
    %v765 = vld [vmem:[%s3 + $0x1c] sm:$0xf]
    %v766 = vld [vmem:[%s3 + $0x20] sm:$0xf]
    %v767 = vld [vmem:[%s3 + $0x24] sm:$0xf]
    %v768 = vld [vmem:[%s3 + $0x28] sm:$0xf]
    %v769 = vld [vmem:[%s3 + $0x2c] sm:$0xf]
    %v770 = vld [vmem:[%s3 + $0x30] sm:$0xf]
    %v771 = vld [vmem:[%s3 + $0x34] sm:$0xf]
    %v772 = vld [vmem:[%s3 + $0x38] sm:$0xf]
    %v773 = vld [vmem:[%s3 + $0x3c] sm:$0xf]
    %v774 = vld [vmem:[%s4] sm:$0x1]
    %v776 = vlaneseq
    %v777 = vshrl.u32 %v776, 7
    %v778 = vsub.s32 0, %v777
    %v779 = vrot.slane %v774, %v778
    %v797 = vunpack.c.l.b16 %v758
    %v798 = vunpack.c.l.b16 %v759
    %v799 = vunpack.c.l.b16 %v760
    %v800 = vunpack.c.l.b16 %v761
    %v801 = vunpack.c.l.b16 %v762
    %v802 = vunpack.c.l.b16 %v763
    %v803 = vunpack.c.l.b16 %v764
    %v804 = vunpack.c.l.b16 %v765
    %v805 = vunpack.c.l.b16 %v766
    %v806 = vunpack.c.l.b16 %v767
    %v807 = vunpack.c.l.b16 %v768
    %v808 = vunpack.c.l.b16 %v769
    %v809 = vunpack.c.l.b16 %v770
    %v810 = vunpack.c.l.b16 %v771
    %v811 = vunpack.c.l.b16 %v772
    %v812 = vunpack.c.l.b16 %v773
    %v813 = vpack.c.b16 %v798, %v797
    %v814 = vpack.c.b16 %v800, %v799
    %v815 = vpack.c.b16 %v802, %v801
    %v816 = vpack.c.b16 %v804, %v803
    %v817 = vpack.c.b16 %v806, %v805
    %v818 = vpack.c.b16 %v808, %v807
    %v819 = vpack.c.b16 %v810, %v809
    %v820 = vpack.c.b16 %v812, %v811
    %829 = vmatprep.subr.bf16.mxu0 0
    %830 = vmatpush1.bf16.msra.mxu0 %v820
    %831 = vmatprep.subr.bf16.mxu0 0
    %832 = vmatpush1.bf16.msra.mxu0 %v819
    %833 = vmatprep.subr.bf16.mxu0 0
    %834 = vmatpush1.bf16.msra.mxu0 %v818
    %835 = vmatprep.subr.bf16.mxu0 0
    %836 = vmatpush1.bf16.msra.mxu0 %v817
    %837 = vmatprep.subr.bf16.mxu0 0
    %838 = vmatpush1.bf16.msra.mxu0 %v816
    %839 = vmatprep.subr.bf16.mxu0 0
    %840 = vmatpush1.bf16.msra.mxu0 %v815
    %841 = vmatprep.subr.bf16.mxu0 0
    %842 = vmatpush1.bf16.msra.mxu0 %v814
    %843 = vmatprep.subr.bf16.mxu0 0
    %844 = vmatpush1.bf16.msra.mxu0 %v813
    %845 = vmatprep.subr.bf16.mxu0 0
    %846 = vmatpush2.bf16.msra.mxu0 0
    %847 = vmatprep.subr.bf16.mxu0 0
    %848 = vmatpush2.bf16.msra.mxu0 0
    %849 = vmatprep.subr.bf16.mxu0 0
    %850 = vmatpush2.bf16.msra.mxu0 0
    %851 = vmatprep.subr.bf16.mxu0 0
    %852 = vmatpush2.bf16.msra.mxu0 0
    %853 = vmatprep.subr.bf16.mxu0 0
    %854 = vmatpush2.bf16.msra.mxu0 0
    %855 = vmatprep.subr.bf16.mxu0 0
    %856 = vmatpush2.bf16.msra.mxu0 0
    %857 = vmatprep.subr.bf16.mxu0 0
    %858 = vmatpush2.bf16.msra.mxu0 0
    %859 = vmatprep.subr.bf16.mxu0 0
    %860 = vmatpush2.bf16.msra.mxu0 0
    %861 = vmatprep.mubr.bf16.mxu0 0
    %862 = vmatmul.mubr.bf16.gmra.mxu0 %v726
    %v863 = vpop.f32.mrf.mxu0
    %v864 = vadd.f32 %v779, %v863
    %v865 = vpop.f32.mrf.mxu0
    %v866 = vpop.f32.mrf.mxu0
    %v867 = vadd.f32 %v779, %v866
    %v868 = vpop.f32.mrf.mxu0
    %869 = vmatprep.mubr.bf16.mxu0 0
    %870 = vmatmul.mubr.bf16.gmra.mxu0 %v727
    %v871 = vpop.f32.mrf.mxu0
    %v872 = vadd.f32 %v779, %v871
    %v873 = vpop.f32.mrf.mxu0
    %v874 = vpop.f32.mrf.mxu0
    %v875 = vadd.f32 %v779, %v874
    %v876 = vpop.f32.mrf.mxu0
    %877 = vmatprep.mubr.bf16.mxu0 0
    %878 = vmatmul.mubr.bf16.gmra.mxu0 %v728
    %v879 = vpop.f32.mrf.mxu0
    %v880 = vadd.f32 %v779, %v879
    %v881 = vpop.f32.mrf.mxu0
    %v882 = vpop.f32.mrf.mxu0
    %v883 = vadd.f32 %v779, %v882
    %v884 = vpop.f32.mrf.mxu0
    %885 = vmatprep.mubr.bf16.mxu0 0
    %886 = vmatmul.mubr.bf16.gmra.mxu0 %v729
    %v887 = vpop.f32.mrf.mxu0
    %v888 = vadd.f32 %v779, %v887
    %v889 = vpop.f32.mrf.mxu0
    %v890 = vpop.f32.mrf.mxu0
    %v891 = vadd.f32 %v779, %v890
    %v892 = vpop.f32.mrf.mxu0
    %893 = vmatprep.mubr.bf16.mxu0 0
    %894 = vmatmul.mubr.bf16.gmra.mxu0 %v730
    %v895 = vpop.f32.mrf.mxu0
    %v896 = vadd.f32 %v779, %v895
    %v897 = vpop.f32.mrf.mxu0
    %v898 = vpop.f32.mrf.mxu0
    %v899 = vadd.f32 %v779, %v898
    %v900 = vpop.f32.mrf.mxu0
    %901 = vmatprep.mubr.bf16.mxu0 0
    %902 = vmatmul.mubr.bf16.gmra.mxu0 %v731
    %v903 = vpop.f32.mrf.mxu0
    %v904 = vadd.f32 %v779, %v903
    %v905 = vpop.f32.mrf.mxu0
    %v906 = vpop.f32.mrf.mxu0
    %v907 = vadd.f32 %v779, %v906
    %v908 = vpop.f32.mrf.mxu0
    %909 = vmatprep.mubr.bf16.mxu0 0
    %910 = vmatmul.mubr.bf16.gmra.mxu0 %v732
    %v911 = vpop.f32.mrf.mxu0
    %v912 = vadd.f32 %v779, %v911
    %v913 = vpop.f32.mrf.mxu0
    %v914 = vpop.f32.mrf.mxu0
    %v915 = vadd.f32 %v779, %v914
    %v916 = vpop.f32.mrf.mxu0
    %917 = vmatprep.mubr.bf16.mxu0 0
    %918 = vmatmul.mubr.bf16.gmra.mxu0 %v733
    %v919 = vpop.f32.mrf.mxu0
    %v920 = vadd.f32 %v779, %v919
    %v921 = vpop.f32.mrf.mxu0
    %v922 = vpop.f32.mrf.mxu0
    %v923 = vadd.f32 %v779, %v922
    %v924 = vpop.f32.mrf.mxu0
    %925 = vmatprep.mubr.bf16.mxu0 0
    %926 = vmatmul.mubr.bf16.gmra.mxu0 %v734
    %v927 = vpop.f32.mrf.mxu0
    %v928 = vadd.f32 %v779, %v927
    %v929 = vpop.f32.mrf.mxu0
    %v930 = vpop.f32.mrf.mxu0
    %v931 = vadd.f32 %v779, %v930
    %v932 = vpop.f32.mrf.mxu0
    %933 = vmatprep.mubr.bf16.mxu0 0
    %934 = vmatmul.mubr.bf16.gmra.mxu0 %v735
    %v935 = vpop.f32.mrf.mxu0
    %v936 = vadd.f32 %v779, %v935
    %v937 = vpop.f32.mrf.mxu0
    %v938 = vpop.f32.mrf.mxu0
    %v939 = vadd.f32 %v779, %v938
    %v940 = vpop.f32.mrf.mxu0
    %941 = vmatprep.mubr.bf16.mxu0 0
    %942 = vmatmul.mubr.bf16.gmra.mxu0 %v736
    %v943 = vpop.f32.mrf.mxu0
    %v944 = vadd.f32 %v779, %v943
    %v945 = vpop.f32.mrf.mxu0
    %v946 = vpop.f32.mrf.mxu0
    %v947 = vadd.f32 %v779, %v946
    %v948 = vpop.f32.mrf.mxu0
    %949 = vmatprep.mubr.bf16.mxu0 0
    %950 = vmatmul.mubr.bf16.gmra.mxu0 %v737
    %v951 = vpop.f32.mrf.mxu0
    %v952 = vadd.f32 %v779, %v951
    %v953 = vpop.f32.mrf.mxu0
    %v954 = vpop.f32.mrf.mxu0
    %v955 = vadd.f32 %v779, %v954
    %v956 = vpop.f32.mrf.mxu0
    %957 = vmatprep.mubr.bf16.mxu0 0
    %958 = vmatmul.mubr.bf16.gmra.mxu0 %v738
    %v959 = vpop.f32.mrf.mxu0
    %v960 = vadd.f32 %v779, %v959
    %v961 = vpop.f32.mrf.mxu0
    %v962 = vpop.f32.mrf.mxu0
    %v963 = vadd.f32 %v779, %v962
    %v964 = vpop.f32.mrf.mxu0
    %965 = vmatprep.mubr.bf16.mxu0 0
    %966 = vmatmul.mubr.bf16.gmra.mxu0 %v739
    %v967 = vpop.f32.mrf.mxu0
    %v968 = vadd.f32 %v779, %v967
    %v969 = vpop.f32.mrf.mxu0
    %v970 = vpop.f32.mrf.mxu0
    %v971 = vadd.f32 %v779, %v970
    %v972 = vpop.f32.mrf.mxu0
    %973 = vmatprep.mubr.bf16.mxu0 0
    %974 = vmatmul.mubr.bf16.gmra.mxu0 %v740
    %v975 = vpop.f32.mrf.mxu0
    %v976 = vadd.f32 %v779, %v975
    %v977 = vpop.f32.mrf.mxu0
    %v978 = vpop.f32.mrf.mxu0
    %v979 = vadd.f32 %v779, %v978
    %v980 = vpop.f32.mrf.mxu0
    %981 = vmatprep.mubr.bf16.mxu0 0
    %982 = vmatmul.mubr.bf16.gmra.mxu0 %v741
    %v983 = vpop.f32.mrf.mxu0
    %v984 = vadd.f32 %v779, %v983
    %v985 = vpop.f32.mrf.mxu0
    %v986 = vpop.f32.mrf.mxu0
    %v987 = vadd.f32 %v779, %v986
    %v988 = vpop.f32.mrf.mxu0
    %989 = vmatprep.mubr.bf16.mxu0 0
    %990 = vmatmul.mubr.bf16.gmra.mxu0 %v742
    %v991 = vpop.f32.mrf.mxu0
    %v992 = vadd.f32 %v779, %v991
    %v993 = vpop.f32.mrf.mxu0
    %v994 = vpop.f32.mrf.mxu0
    %v995 = vadd.f32 %v779, %v994
    %v996 = vpop.f32.mrf.mxu0
    %997 = vmatprep.mubr.bf16.mxu0 0
    %998 = vmatmul.mubr.bf16.gmra.mxu0 %v743
    %v999 = vpop.f32.mrf.mxu0
    %v1000 = vadd.f32 %v779, %v999
    %v1001 = vpop.f32.mrf.mxu0
    %v1002 = vpop.f32.mrf.mxu0
    %v1003 = vadd.f32 %v779, %v1002
    %v1004 = vpop.f32.mrf.mxu0
    %1005 = vmatprep.mubr.bf16.mxu0 0
    %1006 = vmatmul.mubr.bf16.gmra.mxu0 %v744
    %v1007 = vpop.f32.mrf.mxu0
    %v1008 = vadd.f32 %v779, %v1007
    %v1009 = vpop.f32.mrf.mxu0
    %v1010 = vpop.f32.mrf.mxu0
    %v1011 = vadd.f32 %v779, %v1010
    %v1012 = vpop.f32.mrf.mxu0
    %1013 = vmatprep.mubr.bf16.mxu0 0
    %1014 = vmatmul.mubr.bf16.gmra.mxu0 %v745
    %v1015 = vpop.f32.mrf.mxu0
    %v1016 = vadd.f32 %v779, %v1015
    %v1017 = vpop.f32.mrf.mxu0
    %v1018 = vpop.f32.mrf.mxu0
    %v1019 = vadd.f32 %v779, %v1018
    %v1020 = vpop.f32.mrf.mxu0
    %1021 = vmatprep.mubr.bf16.mxu0 0
    %1022 = vmatmul.mubr.bf16.gmra.mxu0 %v746
    %v1023 = vpop.f32.mrf.mxu0
    %v1024 = vadd.f32 %v779, %v1023
    %v1025 = vpop.f32.mrf.mxu0
    %v1026 = vpop.f32.mrf.mxu0
    %v1027 = vadd.f32 %v779, %v1026
    %v1028 = vpop.f32.mrf.mxu0
    %1029 = vmatprep.mubr.bf16.mxu0 0
    %1030 = vmatmul.mubr.bf16.gmra.mxu0 %v747
    %v1031 = vpop.f32.mrf.mxu0
    %v1032 = vadd.f32 %v779, %v1031
    %v1033 = vpop.f32.mrf.mxu0
    %v1034 = vpop.f32.mrf.mxu0
    %v1035 = vadd.f32 %v779, %v1034
    %v1036 = vpop.f32.mrf.mxu0
    %1037 = vmatprep.mubr.bf16.mxu0 0
    %1038 = vmatmul.mubr.bf16.gmra.mxu0 %v748
    %v1039 = vpop.f32.mrf.mxu0
    %v1040 = vadd.f32 %v779, %v1039
    %v1041 = vpop.f32.mrf.mxu0
    %v1042 = vpop.f32.mrf.mxu0
    %v1043 = vadd.f32 %v779, %v1042
    %v1044 = vpop.f32.mrf.mxu0
    %1045 = vmatprep.mubr.bf16.mxu0 0
    %1046 = vmatmul.mubr.bf16.gmra.mxu0 %v749
    %v1047 = vpop.f32.mrf.mxu0
    %v1048 = vadd.f32 %v779, %v1047
    %v1049 = vpop.f32.mrf.mxu0
    %v1050 = vpop.f32.mrf.mxu0
    %v1051 = vadd.f32 %v779, %v1050
    %v1052 = vpop.f32.mrf.mxu0
    %1053 = vmatprep.mubr.bf16.mxu0 0
    %1054 = vmatmul.mubr.bf16.gmra.mxu0 %v750
    %v1055 = vpop.f32.mrf.mxu0
    %v1056 = vadd.f32 %v779, %v1055
    %v1057 = vpop.f32.mrf.mxu0
    %v1058 = vpop.f32.mrf.mxu0
    %v1059 = vadd.f32 %v779, %v1058
    %v1060 = vpop.f32.mrf.mxu0
    %1061 = vmatprep.mubr.bf16.mxu0 0
    %1062 = vmatmul.mubr.bf16.gmra.mxu0 %v751
    %v1063 = vpop.f32.mrf.mxu0
    %v1064 = vadd.f32 %v779, %v1063
    %v1065 = vpop.f32.mrf.mxu0
    %v1066 = vpop.f32.mrf.mxu0
    %v1067 = vadd.f32 %v779, %v1066
    %v1068 = vpop.f32.mrf.mxu0
    %1069 = vmatprep.mubr.bf16.mxu0 0
    %1070 = vmatmul.mubr.bf16.gmra.mxu0 %v752
    %v1071 = vpop.f32.mrf.mxu0
    %v1072 = vadd.f32 %v779, %v1071
    %v1073 = vpop.f32.mrf.mxu0
    %v1074 = vpop.f32.mrf.mxu0
    %v1075 = vadd.f32 %v779, %v1074
    %v1076 = vpop.f32.mrf.mxu0
    %1077 = vmatprep.mubr.bf16.mxu0 0
    %1078 = vmatmul.mubr.bf16.gmra.mxu0 %v753
    %v1079 = vpop.f32.mrf.mxu0
    %v1080 = vadd.f32 %v779, %v1079
    %v1081 = vpop.f32.mrf.mxu0
    %v1082 = vpop.f32.mrf.mxu0
    %v1083 = vadd.f32 %v779, %v1082
    %v1084 = vpop.f32.mrf.mxu0
    %1085 = vmatprep.mubr.bf16.mxu0 0
    %1086 = vmatmul.mubr.bf16.gmra.mxu0 %v754
    %v1087 = vpop.f32.mrf.mxu0
    %v1088 = vadd.f32 %v779, %v1087
    %v1089 = vpop.f32.mrf.mxu0
    %v1090 = vpop.f32.mrf.mxu0
    %v1091 = vadd.f32 %v779, %v1090
    %v1092 = vpop.f32.mrf.mxu0
    %1093 = vmatprep.mubr.bf16.mxu0 0
    %1094 = vmatmul.mubr.bf16.gmra.mxu0 %v755
    %v1095 = vpop.f32.mrf.mxu0
    %v1096 = vadd.f32 %v779, %v1095
    %v1097 = vpop.f32.mrf.mxu0
    %v1098 = vpop.f32.mrf.mxu0
    %v1099 = vadd.f32 %v779, %v1098
    %v1100 = vpop.f32.mrf.mxu0
    %1101 = vmatprep.mubr.bf16.mxu0 0
    %1102 = vmatmul.mubr.bf16.gmra.mxu0 %v756
    %v1103 = vpop.f32.mrf.mxu0
    %v1104 = vadd.f32 %v779, %v1103
    %v1105 = vpop.f32.mrf.mxu0
    %v1106 = vpop.f32.mrf.mxu0
    %v1107 = vadd.f32 %v779, %v1106
    %v1108 = vpop.f32.mrf.mxu0
    %1109 = vmatprep.mubr.bf16.mxu0 0
    %1110 = vmatmul.mubr.bf16.gmra.mxu0 %v757
    %v1111 = vpop.f32.mrf.mxu0
    %v1112 = vadd.f32 %v779, %v1111
    %v1113 = vpop.f32.mrf.mxu0
    %v1114 = vpop.f32.mrf.mxu0
    %v1115 = vadd.f32 %v779, %v1114
    %v1116 = vpop.f32.mrf.mxu0
    %1117 = vdwg.mxu0
    %v1118 = vmax.f32 %v864, 0.0
    %v1119 = vmax.f32 %v867, 0.0
    %v1120 = vmax.f32 %v872, 0.0
    %v1121 = vmax.f32 %v875, 0.0
    %v1122 = vmax.f32 %v880, 0.0
    %v1123 = vmax.f32 %v883, 0.0
    %v1124 = vmax.f32 %v888, 0.0
    %v1125 = vmax.f32 %v891, 0.0
    %v1126 = vmax.f32 %v896, 0.0
    %v1127 = vmax.f32 %v899, 0.0
    %v1128 = vmax.f32 %v904, 0.0
    %v1129 = vmax.f32 %v907, 0.0
    %v1130 = vmax.f32 %v912, 0.0
    %v1131 = vmax.f32 %v915, 0.0
    %v1132 = vmax.f32 %v920, 0.0
    %v1133 = vmax.f32 %v923, 0.0
    %v1134 = vmax.f32 %v928, 0.0
    %v1135 = vmax.f32 %v931, 0.0
    %v1136 = vmax.f32 %v936, 0.0
    %v1137 = vmax.f32 %v939, 0.0
    %v1138 = vmax.f32 %v944, 0.0
    %v1139 = vmax.f32 %v947, 0.0
    %v1140 = vmax.f32 %v952, 0.0
    %v1141 = vmax.f32 %v955, 0.0
    %v1142 = vmax.f32 %v960, 0.0
    %v1143 = vmax.f32 %v963, 0.0
    %v1144 = vmax.f32 %v968, 0.0
    %v1145 = vmax.f32 %v971, 0.0
    %v1146 = vmax.f32 %v976, 0.0
    %v1147 = vmax.f32 %v979, 0.0
    %v1148 = vmax.f32 %v984, 0.0
    %v1149 = vmax.f32 %v987, 0.0
    %v1150 = vmax.f32 %v992, 0.0
    %v1151 = vmax.f32 %v995, 0.0
    %v1152 = vmax.f32 %v1000, 0.0
    %v1153 = vmax.f32 %v1003, 0.0
    %v1154 = vmax.f32 %v1008, 0.0
    %v1155 = vmax.f32 %v1011, 0.0
    %v1156 = vmax.f32 %v1016, 0.0
    %v1157 = vmax.f32 %v1019, 0.0
    %v1158 = vmax.f32 %v1024, 0.0
    %v1159 = vmax.f32 %v1027, 0.0
    %v1160 = vmax.f32 %v1032, 0.0
    %v1161 = vmax.f32 %v1035, 0.0
    %v1162 = vmax.f32 %v1040, 0.0
    %v1163 = vmax.f32 %v1043, 0.0
    %v1164 = vmax.f32 %v1048, 0.0
    %v1165 = vmax.f32 %v1051, 0.0
    %v1166 = vmax.f32 %v1056, 0.0
    %v1167 = vmax.f32 %v1059, 0.0
    %v1168 = vmax.f32 %v1064, 0.0
    %v1169 = vmax.f32 %v1067, 0.0
    %v1170 = vmax.f32 %v1072, 0.0
    %v1171 = vmax.f32 %v1075, 0.0
    %v1172 = vmax.f32 %v1080, 0.0
    %v1173 = vmax.f32 %v1083, 0.0
    %v1174 = vmax.f32 %v1088, 0.0
    %v1175 = vmax.f32 %v1091, 0.0
    %v1176 = vmax.f32 %v1096, 0.0
    %v1177 = vmax.f32 %v1099, 0.0
    %v1178 = vmax.f32 %v1104, 0.0
    %v1179 = vmax.f32 %v1107, 0.0
    %v1180 = vmax.f32 %v1112, 0.0
    %v1181 = vmax.f32 %v1115, 0.0
    %v1182 = vld [vmem:[%s5] sm:$0x1]
    %v1184 = vlaneseq
    %v1185 = vshrl.u32 %v1184, 7
    %v1186 = vsub.s32 0, %v1185
    %v1187 = vrot.slane %v1182, %v1186
    %v1189 = vmul.f32 %v1118, %v1187
    %v1190 = vmul.f32 %v1119, %v1187
    %v1191 = vmul.f32 %v1120, %v1187
    %v1192 = vmul.f32 %v1121, %v1187
    %v1193 = vmul.f32 %v1122, %v1187
    %v1194 = vmul.f32 %v1123, %v1187
    %v1195 = vmul.f32 %v1124, %v1187
    %v1196 = vmul.f32 %v1125, %v1187
    %v1197 = vmul.f32 %v1126, %v1187
    %v1198 = vmul.f32 %v1127, %v1187
    %v1199 = vmul.f32 %v1128, %v1187
    %v1200 = vmul.f32 %v1129, %v1187
    %v1201 = vmul.f32 %v1130, %v1187
    %v1202 = vmul.f32 %v1131, %v1187
    %v1203 = vmul.f32 %v1132, %v1187
    %v1204 = vmul.f32 %v1133, %v1187
    %v1205 = vmul.f32 %v1134, %v1187
    %v1206 = vmul.f32 %v1135, %v1187
    %v1207 = vmul.f32 %v1136, %v1187
    %v1208 = vmul.f32 %v1137, %v1187
    %v1209 = vmul.f32 %v1138, %v1187
    %v1210 = vmul.f32 %v1139, %v1187
    %v1211 = vmul.f32 %v1140, %v1187
    %v1212 = vmul.f32 %v1141, %v1187
    %v1213 = vmul.f32 %v1142, %v1187
    %v1214 = vmul.f32 %v1143, %v1187
    %v1215 = vmul.f32 %v1144, %v1187
    %v1216 = vmul.f32 %v1145, %v1187
    %v1217 = vmul.f32 %v1146, %v1187
    %v1218 = vmul.f32 %v1147, %v1187
    %v1219 = vmul.f32 %v1148, %v1187
    %v1220 = vmul.f32 %v1149, %v1187
    %v1221 = vmul.f32 %v1150, %v1187
    %v1222 = vmul.f32 %v1151, %v1187
    %v1223 = vmul.f32 %v1152, %v1187
    %v1224 = vmul.f32 %v1153, %v1187
    %v1225 = vmul.f32 %v1154, %v1187
    %v1226 = vmul.f32 %v1155, %v1187
    %v1227 = vmul.f32 %v1156, %v1187
    %v1228 = vmul.f32 %v1157, %v1187
    %v1229 = vmul.f32 %v1158, %v1187
    %v1230 = vmul.f32 %v1159, %v1187
    %v1231 = vmul.f32 %v1160, %v1187
    %v1232 = vmul.f32 %v1161, %v1187
    %v1233 = vmul.f32 %v1162, %v1187
    %v1234 = vmul.f32 %v1163, %v1187
    %v1235 = vmul.f32 %v1164, %v1187
    %v1236 = vmul.f32 %v1165, %v1187
    %v1237 = vmul.f32 %v1166, %v1187
    %v1238 = vmul.f32 %v1167, %v1187
    %v1239 = vmul.f32 %v1168, %v1187
    %v1240 = vmul.f32 %v1169, %v1187
    %v1241 = vmul.f32 %v1170, %v1187
    %v1242 = vmul.f32 %v1171, %v1187
    %v1243 = vmul.f32 %v1172, %v1187
    %v1244 = vmul.f32 %v1173, %v1187
    %v1245 = vmul.f32 %v1174, %v1187
    %v1246 = vmul.f32 %v1175, %v1187
    %v1247 = vmul.f32 %v1176, %v1187
    %v1248 = vmul.f32 %v1177, %v1187
    %v1249 = vmul.f32 %v1178, %v1187
    %v1250 = vmul.f32 %v1179, %v1187
    %v1251 = vmul.f32 %v1180, %v1187
    %v1252 = vmul.f32 %v1181, %v1187
    %vm1253 = vcmask 523264
    %v1254 = vsel %vm1253, %v1189, 0.0
    %1255 = vadd.xlane.f32.xlu0 %v1254
    %v1256 = vpop.xlane.xlu0 %1255
    %v1257 = vsel %vm1253, %v1190, 0.0
    %1258 = vadd.xlane.f32.xlu0 %v1257
    %v1259 = vpop.xlane.xlu0 %1258
    %v1260 = vsel %vm1253, %v1191, 0.0
    %1261 = vadd.xlane.f32.xlu0 %v1260
    %v1262 = vpop.xlane.xlu0 %1261
    %v1263 = vsel %vm1253, %v1192, 0.0
    %1264 = vadd.xlane.f32.xlu0 %v1263
    %v1265 = vpop.xlane.xlu0 %1264
    %v1266 = vsel %vm1253, %v1193, 0.0
    %1267 = vadd.xlane.f32.xlu0 %v1266
    %v1268 = vpop.xlane.xlu0 %1267
    %v1269 = vsel %vm1253, %v1194, 0.0
    %1270 = vadd.xlane.f32.xlu0 %v1269
    %v1271 = vpop.xlane.xlu0 %1270
    %v1272 = vsel %vm1253, %v1195, 0.0
    %1273 = vadd.xlane.f32.xlu0 %v1272
    %v1274 = vpop.xlane.xlu0 %1273
    %v1275 = vsel %vm1253, %v1196, 0.0
    %1276 = vadd.xlane.f32.xlu0 %v1275
    %v1277 = vpop.xlane.xlu0 %1276
    %v1278 = vsel %vm1253, %v1197, 0.0
    %1279 = vadd.xlane.f32.xlu0 %v1278
    %v1280 = vpop.xlane.xlu0 %1279
    %v1281 = vsel %vm1253, %v1198, 0.0
    %1282 = vadd.xlane.f32.xlu0 %v1281
    %v1283 = vpop.xlane.xlu0 %1282
    %v1284 = vsel %vm1253, %v1199, 0.0
    %1285 = vadd.xlane.f32.xlu0 %v1284
    %v1286 = vpop.xlane.xlu0 %1285
    %v1287 = vsel %vm1253, %v1200, 0.0
    %1288 = vadd.xlane.f32.xlu0 %v1287
    %v1289 = vpop.xlane.xlu0 %1288
    %v1290 = vsel %vm1253, %v1201, 0.0
    %1291 = vadd.xlane.f32.xlu0 %v1290
    %v1292 = vpop.xlane.xlu0 %1291
    %v1293 = vsel %vm1253, %v1202, 0.0
    %1294 = vadd.xlane.f32.xlu0 %v1293
    %v1295 = vpop.xlane.xlu0 %1294
    %v1296 = vsel %vm1253, %v1203, 0.0
    %1297 = vadd.xlane.f32.xlu0 %v1296
    %v1298 = vpop.xlane.xlu0 %1297
    %v1299 = vsel %vm1253, %v1204, 0.0
    %1300 = vadd.xlane.f32.xlu0 %v1299
    %v1301 = vpop.xlane.xlu0 %1300
    %v1302 = vsel %vm1253, %v1205, 0.0
    %1303 = vadd.xlane.f32.xlu0 %v1302
    %v1304 = vpop.xlane.xlu0 %1303
    %v1305 = vsel %vm1253, %v1206, 0.0
    %1306 = vadd.xlane.f32.xlu0 %v1305
    %v1307 = vpop.xlane.xlu0 %1306
    %v1308 = vsel %vm1253, %v1207, 0.0
    %1309 = vadd.xlane.f32.xlu0 %v1308
    %v1310 = vpop.xlane.xlu0 %1309
    %v1311 = vsel %vm1253, %v1208, 0.0
    %1312 = vadd.xlane.f32.xlu0 %v1311
    %v1313 = vpop.xlane.xlu0 %1312
    %v1314 = vsel %vm1253, %v1209, 0.0
    %1315 = vadd.xlane.f32.xlu0 %v1314
    %v1316 = vpop.xlane.xlu0 %1315
    %v1317 = vsel %vm1253, %v1210, 0.0
    %1318 = vadd.xlane.f32.xlu0 %v1317
    %v1319 = vpop.xlane.xlu0 %1318
    %v1320 = vsel %vm1253, %v1211, 0.0
    %1321 = vadd.xlane.f32.xlu0 %v1320
    %v1322 = vpop.xlane.xlu0 %1321
    %v1323 = vsel %vm1253, %v1212, 0.0
    %1324 = vadd.xlane.f32.xlu0 %v1323
    %v1325 = vpop.xlane.xlu0 %1324
    %v1326 = vsel %vm1253, %v1213, 0.0
    %1327 = vadd.xlane.f32.xlu0 %v1326
    %v1328 = vpop.xlane.xlu0 %1327
    %v1329 = vsel %vm1253, %v1214, 0.0
    %1330 = vadd.xlane.f32.xlu0 %v1329
    %v1331 = vpop.xlane.xlu0 %1330
    %v1332 = vsel %vm1253, %v1215, 0.0
    %1333 = vadd.xlane.f32.xlu0 %v1332
    %v1334 = vpop.xlane.xlu0 %1333
    %v1335 = vsel %vm1253, %v1216, 0.0
    %1336 = vadd.xlane.f32.xlu0 %v1335
    %v1337 = vpop.xlane.xlu0 %1336
    %v1338 = vsel %vm1253, %v1217, 0.0
    %1339 = vadd.xlane.f32.xlu0 %v1338
    %v1340 = vpop.xlane.xlu0 %1339
    %v1341 = vsel %vm1253, %v1218, 0.0
    %1342 = vadd.xlane.f32.xlu0 %v1341
    %v1343 = vpop.xlane.xlu0 %1342
    %v1344 = vsel %vm1253, %v1219, 0.0
    %1345 = vadd.xlane.f32.xlu0 %v1344
    %v1346 = vpop.xlane.xlu0 %1345
    %v1347 = vsel %vm1253, %v1220, 0.0
    %1348 = vadd.xlane.f32.xlu0 %v1347
    %v1349 = vpop.xlane.xlu0 %1348
    %v1350 = vsel %vm1253, %v1221, 0.0
    %1351 = vadd.xlane.f32.xlu0 %v1350
    %v1352 = vpop.xlane.xlu0 %1351
    %v1353 = vsel %vm1253, %v1222, 0.0
    %1354 = vadd.xlane.f32.xlu0 %v1353
    %v1355 = vpop.xlane.xlu0 %1354
    %v1356 = vsel %vm1253, %v1223, 0.0
    %1357 = vadd.xlane.f32.xlu0 %v1356
    %v1358 = vpop.xlane.xlu0 %1357
    %v1359 = vsel %vm1253, %v1224, 0.0
    %1360 = vadd.xlane.f32.xlu0 %v1359
    %v1361 = vpop.xlane.xlu0 %1360
    %v1362 = vsel %vm1253, %v1225, 0.0
    %1363 = vadd.xlane.f32.xlu0 %v1362
    %v1364 = vpop.xlane.xlu0 %1363
    %v1365 = vsel %vm1253, %v1226, 0.0
    %1366 = vadd.xlane.f32.xlu0 %v1365
    %v1367 = vpop.xlane.xlu0 %1366
    %v1368 = vsel %vm1253, %v1227, 0.0
    %1369 = vadd.xlane.f32.xlu0 %v1368
    %v1370 = vpop.xlane.xlu0 %1369
    %v1371 = vsel %vm1253, %v1228, 0.0
    %1372 = vadd.xlane.f32.xlu0 %v1371
    %v1373 = vpop.xlane.xlu0 %1372
    %v1374 = vsel %vm1253, %v1229, 0.0
    %1375 = vadd.xlane.f32.xlu0 %v1374
    %v1376 = vpop.xlane.xlu0 %1375
    %v1377 = vsel %vm1253, %v1230, 0.0
    %1378 = vadd.xlane.f32.xlu0 %v1377
    %v1379 = vpop.xlane.xlu0 %1378
    %v1380 = vsel %vm1253, %v1231, 0.0
    %1381 = vadd.xlane.f32.xlu0 %v1380
    %v1382 = vpop.xlane.xlu0 %1381
    %v1383 = vsel %vm1253, %v1232, 0.0
    %1384 = vadd.xlane.f32.xlu0 %v1383
    %v1385 = vpop.xlane.xlu0 %1384
    %v1386 = vsel %vm1253, %v1233, 0.0
    %1387 = vadd.xlane.f32.xlu0 %v1386
    %v1388 = vpop.xlane.xlu0 %1387
    %v1389 = vsel %vm1253, %v1234, 0.0
    %1390 = vadd.xlane.f32.xlu0 %v1389
    %v1391 = vpop.xlane.xlu0 %1390
    %v1392 = vsel %vm1253, %v1235, 0.0
    %1393 = vadd.xlane.f32.xlu0 %v1392
    %v1394 = vpop.xlane.xlu0 %1393
    %v1395 = vsel %vm1253, %v1236, 0.0
    %1396 = vadd.xlane.f32.xlu0 %v1395
    %v1397 = vpop.xlane.xlu0 %1396
    %v1398 = vsel %vm1253, %v1237, 0.0
    %1399 = vadd.xlane.f32.xlu0 %v1398
    %v1400 = vpop.xlane.xlu0 %1399
    %v1401 = vsel %vm1253, %v1238, 0.0
    %1402 = vadd.xlane.f32.xlu0 %v1401
    %v1403 = vpop.xlane.xlu0 %1402
    %v1404 = vsel %vm1253, %v1239, 0.0
    %1405 = vadd.xlane.f32.xlu0 %v1404
    %v1406 = vpop.xlane.xlu0 %1405
    %v1407 = vsel %vm1253, %v1240, 0.0
    %1408 = vadd.xlane.f32.xlu0 %v1407
    %v1409 = vpop.xlane.xlu0 %1408
    %v1410 = vsel %vm1253, %v1241, 0.0
    %1411 = vadd.xlane.f32.xlu0 %v1410
    %v1412 = vpop.xlane.xlu0 %1411
    %v1413 = vsel %vm1253, %v1242, 0.0
    %1414 = vadd.xlane.f32.xlu0 %v1413
    %v1415 = vpop.xlane.xlu0 %1414
    %v1416 = vsel %vm1253, %v1243, 0.0
    %1417 = vadd.xlane.f32.xlu0 %v1416
    %v1418 = vpop.xlane.xlu0 %1417
    %v1419 = vsel %vm1253, %v1244, 0.0
    %1420 = vadd.xlane.f32.xlu0 %v1419
    %v1421 = vpop.xlane.xlu0 %1420
    %v1422 = vsel %vm1253, %v1245, 0.0
    %1423 = vadd.xlane.f32.xlu0 %v1422
    %v1424 = vpop.xlane.xlu0 %1423
    %v1425 = vsel %vm1253, %v1246, 0.0
    %1426 = vadd.xlane.f32.xlu0 %v1425
    %v1427 = vpop.xlane.xlu0 %1426
    %v1428 = vsel %vm1253, %v1247, 0.0
    %1429 = vadd.xlane.f32.xlu0 %v1428
    %v1430 = vpop.xlane.xlu0 %1429
    %v1431 = vsel %vm1253, %v1248, 0.0
    %1432 = vadd.xlane.f32.xlu0 %v1431
    %v1433 = vpop.xlane.xlu0 %1432
    %v1434 = vsel %vm1253, %v1249, 0.0
    %1435 = vadd.xlane.f32.xlu0 %v1434
    %v1436 = vpop.xlane.xlu0 %1435
    %v1437 = vsel %vm1253, %v1250, 0.0
    %1438 = vadd.xlane.f32.xlu0 %v1437
    %v1439 = vpop.xlane.xlu0 %1438
    %v1440 = vsel %vm1253, %v1251, 0.0
    %1441 = vadd.xlane.f32.xlu0 %v1440
    %v1442 = vpop.xlane.xlu0 %1441
    %v1443 = vsel %vm1253, %v1252, 0.0
    %1444 = vadd.xlane.f32.xlu0 %v1443
    %v1445 = vpop.xlane.xlu0 %1444
    %s1446 = sld [smem:[#allocation2]]
    %v1447 = vstv %s1446
    %v1448 = vadd.f32 %v1256, %v1447
    %v1449 = vadd.f32 %v1259, %v1447
    %v1450 = vadd.f32 %v1262, %v1447
    %v1451 = vadd.f32 %v1265, %v1447
    %v1452 = vadd.f32 %v1268, %v1447
    %v1453 = vadd.f32 %v1271, %v1447
    %v1454 = vadd.f32 %v1274, %v1447
    %v1455 = vadd.f32 %v1277, %v1447
    %v1456 = vadd.f32 %v1280, %v1447
    %v1457 = vadd.f32 %v1283, %v1447
    %v1458 = vadd.f32 %v1286, %v1447
    %v1459 = vadd.f32 %v1289, %v1447
    %v1460 = vadd.f32 %v1292, %v1447
    %v1461 = vadd.f32 %v1295, %v1447
    %v1462 = vadd.f32 %v1298, %v1447
    %v1463 = vadd.f32 %v1301, %v1447
    %v1464 = vadd.f32 %v1304, %v1447
    %v1465 = vadd.f32 %v1307, %v1447
    %v1466 = vadd.f32 %v1310, %v1447
    %v1467 = vadd.f32 %v1313, %v1447
    %v1468 = vadd.f32 %v1316, %v1447
    %v1469 = vadd.f32 %v1319, %v1447
    %v1470 = vadd.f32 %v1322, %v1447
    %v1471 = vadd.f32 %v1325, %v1447
    %v1472 = vadd.f32 %v1328, %v1447
    %v1473 = vadd.f32 %v1331, %v1447
    %v1474 = vadd.f32 %v1334, %v1447
    %v1475 = vadd.f32 %v1337, %v1447
    %v1476 = vadd.f32 %v1340, %v1447
    %v1477 = vadd.f32 %v1343, %v1447
    %v1478 = vadd.f32 %v1346, %v1447
    %v1479 = vadd.f32 %v1349, %v1447
    %v1480 = vadd.f32 %v1352, %v1447
    %v1481 = vadd.f32 %v1355, %v1447
    %v1482 = vadd.f32 %v1358, %v1447
    %v1483 = vadd.f32 %v1361, %v1447
    %v1484 = vadd.f32 %v1364, %v1447
    %v1485 = vadd.f32 %v1367, %v1447
    %v1486 = vadd.f32 %v1370, %v1447
    %v1487 = vadd.f32 %v1373, %v1447
    %v1488 = vadd.f32 %v1376, %v1447
    %v1489 = vadd.f32 %v1379, %v1447
    %v1490 = vadd.f32 %v1382, %v1447
    %v1491 = vadd.f32 %v1385, %v1447
    %v1492 = vadd.f32 %v1388, %v1447
    %v1493 = vadd.f32 %v1391, %v1447
    %v1494 = vadd.f32 %v1394, %v1447
    %v1495 = vadd.f32 %v1397, %v1447
    %v1496 = vadd.f32 %v1400, %v1447
    %v1497 = vadd.f32 %v1403, %v1447
    %v1498 = vadd.f32 %v1406, %v1447
    %v1499 = vadd.f32 %v1409, %v1447
    %v1500 = vadd.f32 %v1412, %v1447
    %v1501 = vadd.f32 %v1415, %v1447
    %v1502 = vadd.f32 %v1418, %v1447
    %v1503 = vadd.f32 %v1421, %v1447
    %v1504 = vadd.f32 %v1424, %v1447
    %v1505 = vadd.f32 %v1427, %v1447
    %v1506 = vadd.f32 %v1430, %v1447
    %v1507 = vadd.f32 %v1433, %v1447
    %v1508 = vadd.f32 %v1436, %v1447
    %v1509 = vadd.f32 %v1439, %v1447
    %v1510 = vadd.f32 %v1442, %v1447
    %v1511 = vadd.f32 %v1445, %v1447
    %v1576 = vlaneseq
    %v1577 = vshrl.u32 %v1576, 7
    %v1578 = vsub.s32 0, %v1577
    %v1579 = vrot.slane %v1448, %v1578
    %v1580 = vlaneseq
    %v1581 = vshrl.u32 %v1580, 7
    %v1582 = vsub.s32 1, %v1581
    %v1583 = vrot.slane %v1448, %v1582
    %v1584 = vlaneseq
    %v1585 = vshrl.u32 %v1584, 7
    %v1586 = vsub.s32 2, %v1585
    %v1587 = vrot.slane %v1448, %v1586
    %v1588 = vlaneseq
    %v1589 = vshrl.u32 %v1588, 7
    %v1590 = vsub.s32 3, %v1589
    %v1591 = vrot.slane %v1448, %v1590
    %v1592 = vlaneseq
    %v1593 = vshrl.u32 %v1592, 7
    %v1594 = vsub.s32 4, %v1593
    %v1595 = vrot.slane %v1448, %v1594
    %v1596 = vlaneseq
    %v1597 = vshrl.u32 %v1596, 7
    %v1598 = vsub.s32 5, %v1597
    %v1599 = vrot.slane %v1448, %v1598
    %v1600 = vlaneseq
    %v1601 = vshrl.u32 %v1600, 7
    %v1602 = vsub.s32 6, %v1601
    %v1603 = vrot.slane %v1448, %v1602
    %v1604 = vlaneseq
    %v1605 = vshrl.u32 %v1604, 7
    %v1606 = vsub.s32 7, %v1605
    %v1607 = vrot.slane %v1448, %v1606
    %v1608 = vlaneseq
    %v1609 = vshrl.u32 %v1608, 7
    %v1610 = vsub.s32 0, %v1609
    %v1611 = vrot.slane %v1449, %v1610
    %v1612 = vlaneseq
    %v1613 = vshrl.u32 %v1612, 7
    %v1614 = vsub.s32 1, %v1613
    %v1615 = vrot.slane %v1449, %v1614
    %v1616 = vlaneseq
    %v1617 = vshrl.u32 %v1616, 7
    %v1618 = vsub.s32 2, %v1617
    %v1619 = vrot.slane %v1449, %v1618
    %v1620 = vlaneseq
    %v1621 = vshrl.u32 %v1620, 7
    %v1622 = vsub.s32 3, %v1621
    %v1623 = vrot.slane %v1449, %v1622
    %v1624 = vlaneseq
    %v1625 = vshrl.u32 %v1624, 7
    %v1626 = vsub.s32 4, %v1625
    %v1627 = vrot.slane %v1449, %v1626
    %v1628 = vlaneseq
    %v1629 = vshrl.u32 %v1628, 7
    %v1630 = vsub.s32 5, %v1629
    %v1631 = vrot.slane %v1449, %v1630
    %v1632 = vlaneseq
    %v1633 = vshrl.u32 %v1632, 7
    %v1634 = vsub.s32 6, %v1633
    %v1635 = vrot.slane %v1449, %v1634
    %v1636 = vlaneseq
    %v1637 = vshrl.u32 %v1636, 7
    %v1638 = vsub.s32 7, %v1637
    %v1639 = vrot.slane %v1449, %v1638
    %v1640 = vlaneseq
    %v1641 = vshrl.u32 %v1640, 7
    %v1642 = vsub.s32 0, %v1641
    %v1643 = vrot.slane %v1450, %v1642
    %v1644 = vlaneseq
    %v1645 = vshrl.u32 %v1644, 7
    %v1646 = vsub.s32 1, %v1645
    %v1647 = vrot.slane %v1450, %v1646
    %v1648 = vlaneseq
    %v1649 = vshrl.u32 %v1648, 7
    %v1650 = vsub.s32 2, %v1649
    %v1651 = vrot.slane %v1450, %v1650
    %v1652 = vlaneseq
    %v1653 = vshrl.u32 %v1652, 7
    %v1654 = vsub.s32 3, %v1653
    %v1655 = vrot.slane %v1450, %v1654
    %v1656 = vlaneseq
    %v1657 = vshrl.u32 %v1656, 7
    %v1658 = vsub.s32 4, %v1657
    %v1659 = vrot.slane %v1450, %v1658
    %v1660 = vlaneseq
    %v1661 = vshrl.u32 %v1660, 7
    %v1662 = vsub.s32 5, %v1661
    %v1663 = vrot.slane %v1450, %v1662
    %v1664 = vlaneseq
    %v1665 = vshrl.u32 %v1664, 7
    %v1666 = vsub.s32 6, %v1665
    %v1667 = vrot.slane %v1450, %v1666
    %v1668 = vlaneseq
    %v1669 = vshrl.u32 %v1668, 7
    %v1670 = vsub.s32 7, %v1669
    %v1671 = vrot.slane %v1450, %v1670
    %v1672 = vlaneseq
    %v1673 = vshrl.u32 %v1672, 7
    %v1674 = vsub.s32 0, %v1673
    %v1675 = vrot.slane %v1451, %v1674
    %v1676 = vlaneseq
    %v1677 = vshrl.u32 %v1676, 7
    %v1678 = vsub.s32 1, %v1677
    %v1679 = vrot.slane %v1451, %v1678
    %v1680 = vlaneseq
    %v1681 = vshrl.u32 %v1680, 7
    %v1682 = vsub.s32 2, %v1681
    %v1683 = vrot.slane %v1451, %v1682
    %v1684 = vlaneseq
    %v1685 = vshrl.u32 %v1684, 7
    %v1686 = vsub.s32 3, %v1685
    %v1687 = vrot.slane %v1451, %v1686
    %v1688 = vlaneseq
    %v1689 = vshrl.u32 %v1688, 7
    %v1690 = vsub.s32 4, %v1689
    %v1691 = vrot.slane %v1451, %v1690
    %v1692 = vlaneseq
    %v1693 = vshrl.u32 %v1692, 7
    %v1694 = vsub.s32 5, %v1693
    %v1695 = vrot.slane %v1451, %v1694
    %v1696 = vlaneseq
    %v1697 = vshrl.u32 %v1696, 7
    %v1698 = vsub.s32 6, %v1697
    %v1699 = vrot.slane %v1451, %v1698
    %v1700 = vlaneseq
    %v1701 = vshrl.u32 %v1700, 7
    %v1702 = vsub.s32 7, %v1701
    %v1703 = vrot.slane %v1451, %v1702
    %v1704 = vlaneseq
    %v1705 = vshrl.u32 %v1704, 7
    %v1706 = vsub.s32 0, %v1705
    %v1707 = vrot.slane %v1452, %v1706
    %v1708 = vlaneseq
    %v1709 = vshrl.u32 %v1708, 7
    %v1710 = vsub.s32 1, %v1709
    %v1711 = vrot.slane %v1452, %v1710
    %v1712 = vlaneseq
    %v1713 = vshrl.u32 %v1712, 7
    %v1714 = vsub.s32 2, %v1713
    %v1715 = vrot.slane %v1452, %v1714
    %v1716 = vlaneseq
    %v1717 = vshrl.u32 %v1716, 7
    %v1718 = vsub.s32 3, %v1717
    %v1719 = vrot.slane %v1452, %v1718
    %v1720 = vlaneseq
    %v1721 = vshrl.u32 %v1720, 7
    %v1722 = vsub.s32 4, %v1721
    %v1723 = vrot.slane %v1452, %v1722
    %v1724 = vlaneseq
    %v1725 = vshrl.u32 %v1724, 7
    %v1726 = vsub.s32 5, %v1725
    %v1727 = vrot.slane %v1452, %v1726
    %v1728 = vlaneseq
    %v1729 = vshrl.u32 %v1728, 7
    %v1730 = vsub.s32 6, %v1729
    %v1731 = vrot.slane %v1452, %v1730
    %v1732 = vlaneseq
    %v1733 = vshrl.u32 %v1732, 7
    %v1734 = vsub.s32 7, %v1733
    %v1735 = vrot.slane %v1452, %v1734
    %v1736 = vlaneseq
    %v1737 = vshrl.u32 %v1736, 7
    %v1738 = vsub.s32 0, %v1737
    %v1739 = vrot.slane %v1453, %v1738
    %v1740 = vlaneseq
    %v1741 = vshrl.u32 %v1740, 7
    %v1742 = vsub.s32 1, %v1741
    %v1743 = vrot.slane %v1453, %v1742
    %v1744 = vlaneseq
    %v1745 = vshrl.u32 %v1744, 7
    %v1746 = vsub.s32 2, %v1745
    %v1747 = vrot.slane %v1453, %v1746
    %v1748 = vlaneseq
    %v1749 = vshrl.u32 %v1748, 7
    %v1750 = vsub.s32 3, %v1749
    %v1751 = vrot.slane %v1453, %v1750
    %v1752 = vlaneseq
    %v1753 = vshrl.u32 %v1752, 7
    %v1754 = vsub.s32 4, %v1753
    %v1755 = vrot.slane %v1453, %v1754
    %v1756 = vlaneseq
    %v1757 = vshrl.u32 %v1756, 7
    %v1758 = vsub.s32 5, %v1757
    %v1759 = vrot.slane %v1453, %v1758
    %v1760 = vlaneseq
    %v1761 = vshrl.u32 %v1760, 7
    %v1762 = vsub.s32 6, %v1761
    %v1763 = vrot.slane %v1453, %v1762
    %v1764 = vlaneseq
    %v1765 = vshrl.u32 %v1764, 7
    %v1766 = vsub.s32 7, %v1765
    %v1767 = vrot.slane %v1453, %v1766
    %v1768 = vlaneseq
    %v1769 = vshrl.u32 %v1768, 7
    %v1770 = vsub.s32 0, %v1769
    %v1771 = vrot.slane %v1454, %v1770
    %v1772 = vlaneseq
    %v1773 = vshrl.u32 %v1772, 7
    %v1774 = vsub.s32 1, %v1773
    %v1775 = vrot.slane %v1454, %v1774
    %v1776 = vlaneseq
    %v1777 = vshrl.u32 %v1776, 7
    %v1778 = vsub.s32 2, %v1777
    %v1779 = vrot.slane %v1454, %v1778
    %v1780 = vlaneseq
    %v1781 = vshrl.u32 %v1780, 7
    %v1782 = vsub.s32 3, %v1781
    %v1783 = vrot.slane %v1454, %v1782
    %v1784 = vlaneseq
    %v1785 = vshrl.u32 %v1784, 7
    %v1786 = vsub.s32 4, %v1785
    %v1787 = vrot.slane %v1454, %v1786
    %v1788 = vlaneseq
    %v1789 = vshrl.u32 %v1788, 7
    %v1790 = vsub.s32 5, %v1789
    %v1791 = vrot.slane %v1454, %v1790
    %v1792 = vlaneseq
    %v1793 = vshrl.u32 %v1792, 7
    %v1794 = vsub.s32 6, %v1793
    %v1795 = vrot.slane %v1454, %v1794
    %v1796 = vlaneseq
    %v1797 = vshrl.u32 %v1796, 7
    %v1798 = vsub.s32 7, %v1797
    %v1799 = vrot.slane %v1454, %v1798
    %v1800 = vlaneseq
    %v1801 = vshrl.u32 %v1800, 7
    %v1802 = vsub.s32 0, %v1801
    %v1803 = vrot.slane %v1455, %v1802
    %v1804 = vlaneseq
    %v1805 = vshrl.u32 %v1804, 7
    %v1806 = vsub.s32 1, %v1805
    %v1807 = vrot.slane %v1455, %v1806
    %v1808 = vlaneseq
    %v1809 = vshrl.u32 %v1808, 7
    %v1810 = vsub.s32 2, %v1809
    %v1811 = vrot.slane %v1455, %v1810
    %v1812 = vlaneseq
    %v1813 = vshrl.u32 %v1812, 7
    %v1814 = vsub.s32 3, %v1813
    %v1815 = vrot.slane %v1455, %v1814
    %v1816 = vlaneseq
    %v1817 = vshrl.u32 %v1816, 7
    %v1818 = vsub.s32 4, %v1817
    %v1819 = vrot.slane %v1455, %v1818
    %v1820 = vlaneseq
    %v1821 = vshrl.u32 %v1820, 7
    %v1822 = vsub.s32 5, %v1821
    %v1823 = vrot.slane %v1455, %v1822
    %v1824 = vlaneseq
    %v1825 = vshrl.u32 %v1824, 7
    %v1826 = vsub.s32 6, %v1825
    %v1827 = vrot.slane %v1455, %v1826
    %v1828 = vlaneseq
    %v1829 = vshrl.u32 %v1828, 7
    %v1830 = vsub.s32 7, %v1829
    %v1831 = vrot.slane %v1455, %v1830
    %v1832 = vlaneseq
    %v1833 = vshrl.u32 %v1832, 7
    %v1834 = vsub.s32 0, %v1833
    %v1835 = vrot.slane %v1456, %v1834
    %v1836 = vlaneseq
    %v1837 = vshrl.u32 %v1836, 7
    %v1838 = vsub.s32 1, %v1837
    %v1839 = vrot.slane %v1456, %v1838
    %v1840 = vlaneseq
    %v1841 = vshrl.u32 %v1840, 7
    %v1842 = vsub.s32 2, %v1841
    %v1843 = vrot.slane %v1456, %v1842
    %v1844 = vlaneseq
    %v1845 = vshrl.u32 %v1844, 7
    %v1846 = vsub.s32 3, %v1845
    %v1847 = vrot.slane %v1456, %v1846
    %v1848 = vlaneseq
    %v1849 = vshrl.u32 %v1848, 7
    %v1850 = vsub.s32 4, %v1849
    %v1851 = vrot.slane %v1456, %v1850
    %v1852 = vlaneseq
    %v1853 = vshrl.u32 %v1852, 7
    %v1854 = vsub.s32 5, %v1853
    %v1855 = vrot.slane %v1456, %v1854
    %v1856 = vlaneseq
    %v1857 = vshrl.u32 %v1856, 7
    %v1858 = vsub.s32 6, %v1857
    %v1859 = vrot.slane %v1456, %v1858
    %v1860 = vlaneseq
    %v1861 = vshrl.u32 %v1860, 7
    %v1862 = vsub.s32 7, %v1861
    %v1863 = vrot.slane %v1456, %v1862
    %v1864 = vlaneseq
    %v1865 = vshrl.u32 %v1864, 7
    %v1866 = vsub.s32 0, %v1865
    %v1867 = vrot.slane %v1457, %v1866
    %v1868 = vlaneseq
    %v1869 = vshrl.u32 %v1868, 7
    %v1870 = vsub.s32 1, %v1869
    %v1871 = vrot.slane %v1457, %v1870
    %v1872 = vlaneseq
    %v1873 = vshrl.u32 %v1872, 7
    %v1874 = vsub.s32 2, %v1873
    %v1875 = vrot.slane %v1457, %v1874
    %v1876 = vlaneseq
    %v1877 = vshrl.u32 %v1876, 7
    %v1878 = vsub.s32 3, %v1877
    %v1879 = vrot.slane %v1457, %v1878
    %v1880 = vlaneseq
    %v1881 = vshrl.u32 %v1880, 7
    %v1882 = vsub.s32 4, %v1881
    %v1883 = vrot.slane %v1457, %v1882
    %v1884 = vlaneseq
    %v1885 = vshrl.u32 %v1884, 7
    %v1886 = vsub.s32 5, %v1885
    %v1887 = vrot.slane %v1457, %v1886
    %v1888 = vlaneseq
    %v1889 = vshrl.u32 %v1888, 7
    %v1890 = vsub.s32 6, %v1889
    %v1891 = vrot.slane %v1457, %v1890
    %v1892 = vlaneseq
    %v1893 = vshrl.u32 %v1892, 7
    %v1894 = vsub.s32 7, %v1893
    %v1895 = vrot.slane %v1457, %v1894
    %v1896 = vlaneseq
    %v1897 = vshrl.u32 %v1896, 7
    %v1898 = vsub.s32 0, %v1897
    %v1899 = vrot.slane %v1458, %v1898
    %v1900 = vlaneseq
    %v1901 = vshrl.u32 %v1900, 7
    %v1902 = vsub.s32 1, %v1901
    %v1903 = vrot.slane %v1458, %v1902
    %v1904 = vlaneseq
    %v1905 = vshrl.u32 %v1904, 7
    %v1906 = vsub.s32 2, %v1905
    %v1907 = vrot.slane %v1458, %v1906
    %v1908 = vlaneseq
    %v1909 = vshrl.u32 %v1908, 7
    %v1910 = vsub.s32 3, %v1909
    %v1911 = vrot.slane %v1458, %v1910
    %v1912 = vlaneseq
    %v1913 = vshrl.u32 %v1912, 7
    %v1914 = vsub.s32 4, %v1913
    %v1915 = vrot.slane %v1458, %v1914
    %v1916 = vlaneseq
    %v1917 = vshrl.u32 %v1916, 7
    %v1918 = vsub.s32 5, %v1917
    %v1919 = vrot.slane %v1458, %v1918
    %v1920 = vlaneseq
    %v1921 = vshrl.u32 %v1920, 7
    %v1922 = vsub.s32 6, %v1921
    %v1923 = vrot.slane %v1458, %v1922
    %v1924 = vlaneseq
    %v1925 = vshrl.u32 %v1924, 7
    %v1926 = vsub.s32 7, %v1925
    %v1927 = vrot.slane %v1458, %v1926
    %v1928 = vlaneseq
    %v1929 = vshrl.u32 %v1928, 7
    %v1930 = vsub.s32 0, %v1929
    %v1931 = vrot.slane %v1459, %v1930
    %v1932 = vlaneseq
    %v1933 = vshrl.u32 %v1932, 7
    %v1934 = vsub.s32 1, %v1933
    %v1935 = vrot.slane %v1459, %v1934
    %v1936 = vlaneseq
    %v1937 = vshrl.u32 %v1936, 7
    %v1938 = vsub.s32 2, %v1937
    %v1939 = vrot.slane %v1459, %v1938
    %v1940 = vlaneseq
    %v1941 = vshrl.u32 %v1940, 7
    %v1942 = vsub.s32 3, %v1941
    %v1943 = vrot.slane %v1459, %v1942
    %v1944 = vlaneseq
    %v1945 = vshrl.u32 %v1944, 7
    %v1946 = vsub.s32 4, %v1945
    %v1947 = vrot.slane %v1459, %v1946
    %v1948 = vlaneseq
    %v1949 = vshrl.u32 %v1948, 7
    %v1950 = vsub.s32 5, %v1949
    %v1951 = vrot.slane %v1459, %v1950
    %v1952 = vlaneseq
    %v1953 = vshrl.u32 %v1952, 7
    %v1954 = vsub.s32 6, %v1953
    %v1955 = vrot.slane %v1459, %v1954
    %v1956 = vlaneseq
    %v1957 = vshrl.u32 %v1956, 7
    %v1958 = vsub.s32 7, %v1957
    %v1959 = vrot.slane %v1459, %v1958
    %v1960 = vlaneseq
    %v1961 = vshrl.u32 %v1960, 7
    %v1962 = vsub.s32 0, %v1961
    %v1963 = vrot.slane %v1460, %v1962
    %v1964 = vlaneseq
    %v1965 = vshrl.u32 %v1964, 7
    %v1966 = vsub.s32 1, %v1965
    %v1967 = vrot.slane %v1460, %v1966
    %v1968 = vlaneseq
    %v1969 = vshrl.u32 %v1968, 7
    %v1970 = vsub.s32 2, %v1969
    %v1971 = vrot.slane %v1460, %v1970
    %v1972 = vlaneseq
    %v1973 = vshrl.u32 %v1972, 7
    %v1974 = vsub.s32 3, %v1973
    %v1975 = vrot.slane %v1460, %v1974
    %v1976 = vlaneseq
    %v1977 = vshrl.u32 %v1976, 7
    %v1978 = vsub.s32 4, %v1977
    %v1979 = vrot.slane %v1460, %v1978
    %v1980 = vlaneseq
    %v1981 = vshrl.u32 %v1980, 7
    %v1982 = vsub.s32 5, %v1981
    %v1983 = vrot.slane %v1460, %v1982
    %v1984 = vlaneseq
    %v1985 = vshrl.u32 %v1984, 7
    %v1986 = vsub.s32 6, %v1985
    %v1987 = vrot.slane %v1460, %v1986
    %v1988 = vlaneseq
    %v1989 = vshrl.u32 %v1988, 7
    %v1990 = vsub.s32 7, %v1989
    %v1991 = vrot.slane %v1460, %v1990
    %v1992 = vlaneseq
    %v1993 = vshrl.u32 %v1992, 7
    %v1994 = vsub.s32 0, %v1993
    %v1995 = vrot.slane %v1461, %v1994
    %v1996 = vlaneseq
    %v1997 = vshrl.u32 %v1996, 7
    %v1998 = vsub.s32 1, %v1997
    %v1999 = vrot.slane %v1461, %v1998
    %v2000 = vlaneseq
    %v2001 = vshrl.u32 %v2000, 7
    %v2002 = vsub.s32 2, %v2001
    %v2003 = vrot.slane %v1461, %v2002
    %v2004 = vlaneseq
    %v2005 = vshrl.u32 %v2004, 7
    %v2006 = vsub.s32 3, %v2005
    %v2007 = vrot.slane %v1461, %v2006
    %v2008 = vlaneseq
    %v2009 = vshrl.u32 %v2008, 7
    %v2010 = vsub.s32 4, %v2009
    %v2011 = vrot.slane %v1461, %v2010
    %v2012 = vlaneseq
    %v2013 = vshrl.u32 %v2012, 7
    %v2014 = vsub.s32 5, %v2013
    %v2015 = vrot.slane %v1461, %v2014
    %v2016 = vlaneseq
    %v2017 = vshrl.u32 %v2016, 7
    %v2018 = vsub.s32 6, %v2017
    %v2019 = vrot.slane %v1461, %v2018
    %v2020 = vlaneseq
    %v2021 = vshrl.u32 %v2020, 7
    %v2022 = vsub.s32 7, %v2021
    %v2023 = vrot.slane %v1461, %v2022
    %v2024 = vlaneseq
    %v2025 = vshrl.u32 %v2024, 7
    %v2026 = vsub.s32 0, %v2025
    %v2027 = vrot.slane %v1462, %v2026
    %v2028 = vlaneseq
    %v2029 = vshrl.u32 %v2028, 7
    %v2030 = vsub.s32 1, %v2029
    %v2031 = vrot.slane %v1462, %v2030
    %v2032 = vlaneseq
    %v2033 = vshrl.u32 %v2032, 7
    %v2034 = vsub.s32 2, %v2033
    %v2035 = vrot.slane %v1462, %v2034
    %v2036 = vlaneseq
    %v2037 = vshrl.u32 %v2036, 7
    %v2038 = vsub.s32 3, %v2037
    %v2039 = vrot.slane %v1462, %v2038
    %v2040 = vlaneseq
    %v2041 = vshrl.u32 %v2040, 7
    %v2042 = vsub.s32 4, %v2041
    %v2043 = vrot.slane %v1462, %v2042
    %v2044 = vlaneseq
    %v2045 = vshrl.u32 %v2044, 7
    %v2046 = vsub.s32 5, %v2045
    %v2047 = vrot.slane %v1462, %v2046
    %v2048 = vlaneseq
    %v2049 = vshrl.u32 %v2048, 7
    %v2050 = vsub.s32 6, %v2049
    %v2051 = vrot.slane %v1462, %v2050
    %v2052 = vlaneseq
    %v2053 = vshrl.u32 %v2052, 7
    %v2054 = vsub.s32 7, %v2053
    %v2055 = vrot.slane %v1462, %v2054
    %v2056 = vlaneseq
    %v2057 = vshrl.u32 %v2056, 7
    %v2058 = vsub.s32 0, %v2057
    %v2059 = vrot.slane %v1463, %v2058
    %v2060 = vlaneseq
    %v2061 = vshrl.u32 %v2060, 7
    %v2062 = vsub.s32 1, %v2061
    %v2063 = vrot.slane %v1463, %v2062
    %v2064 = vlaneseq
    %v2065 = vshrl.u32 %v2064, 7
    %v2066 = vsub.s32 2, %v2065
    %v2067 = vrot.slane %v1463, %v2066
    %v2068 = vlaneseq
    %v2069 = vshrl.u32 %v2068, 7
    %v2070 = vsub.s32 3, %v2069
    %v2071 = vrot.slane %v1463, %v2070
    %v2072 = vlaneseq
    %v2073 = vshrl.u32 %v2072, 7
    %v2074 = vsub.s32 4, %v2073
    %v2075 = vrot.slane %v1463, %v2074
    %v2076 = vlaneseq
    %v2077 = vshrl.u32 %v2076, 7
    %v2078 = vsub.s32 5, %v2077
    %v2079 = vrot.slane %v1463, %v2078
    %v2080 = vlaneseq
    %v2081 = vshrl.u32 %v2080, 7
    %v2082 = vsub.s32 6, %v2081
    %v2083 = vrot.slane %v1463, %v2082
    %v2084 = vlaneseq
    %v2085 = vshrl.u32 %v2084, 7
    %v2086 = vsub.s32 7, %v2085
    %v2087 = vrot.slane %v1463, %v2086
    %v2088 = vlaneseq
    %v2089 = vshrl.u32 %v2088, 7
    %v2090 = vsub.s32 0, %v2089
    %v2091 = vrot.slane %v1464, %v2090
    %v2092 = vlaneseq
    %v2093 = vshrl.u32 %v2092, 7
    %v2094 = vsub.s32 1, %v2093
    %v2095 = vrot.slane %v1464, %v2094
    %v2096 = vlaneseq
    %v2097 = vshrl.u32 %v2096, 7
    %v2098 = vsub.s32 2, %v2097
    %v2099 = vrot.slane %v1464, %v2098
    %v2100 = vlaneseq
    %v2101 = vshrl.u32 %v2100, 7
    %v2102 = vsub.s32 3, %v2101
    %v2103 = vrot.slane %v1464, %v2102
    %v2104 = vlaneseq
    %v2105 = vshrl.u32 %v2104, 7
    %v2106 = vsub.s32 4, %v2105
    %v2107 = vrot.slane %v1464, %v2106
    %v2108 = vlaneseq
    %v2109 = vshrl.u32 %v2108, 7
    %v2110 = vsub.s32 5, %v2109
    %v2111 = vrot.slane %v1464, %v2110
    %v2112 = vlaneseq
    %v2113 = vshrl.u32 %v2112, 7
    %v2114 = vsub.s32 6, %v2113
    %v2115 = vrot.slane %v1464, %v2114
    %v2116 = vlaneseq
    %v2117 = vshrl.u32 %v2116, 7
    %v2118 = vsub.s32 7, %v2117
    %v2119 = vrot.slane %v1464, %v2118
    %v2120 = vlaneseq
    %v2121 = vshrl.u32 %v2120, 7
    %v2122 = vsub.s32 0, %v2121
    %v2123 = vrot.slane %v1465, %v2122
    %v2124 = vlaneseq
    %v2125 = vshrl.u32 %v2124, 7
    %v2126 = vsub.s32 1, %v2125
    %v2127 = vrot.slane %v1465, %v2126
    %v2128 = vlaneseq
    %v2129 = vshrl.u32 %v2128, 7
    %v2130 = vsub.s32 2, %v2129
    %v2131 = vrot.slane %v1465, %v2130
    %v2132 = vlaneseq
    %v2133 = vshrl.u32 %v2132, 7
    %v2134 = vsub.s32 3, %v2133
    %v2135 = vrot.slane %v1465, %v2134
    %v2136 = vlaneseq
    %v2137 = vshrl.u32 %v2136, 7
    %v2138 = vsub.s32 4, %v2137
    %v2139 = vrot.slane %v1465, %v2138
    %v2140 = vlaneseq
    %v2141 = vshrl.u32 %v2140, 7
    %v2142 = vsub.s32 5, %v2141
    %v2143 = vrot.slane %v1465, %v2142
    %v2144 = vlaneseq
    %v2145 = vshrl.u32 %v2144, 7
    %v2146 = vsub.s32 6, %v2145
    %v2147 = vrot.slane %v1465, %v2146
    %v2148 = vlaneseq
    %v2149 = vshrl.u32 %v2148, 7
    %v2150 = vsub.s32 7, %v2149
    %v2151 = vrot.slane %v1465, %v2150
    %v2152 = vlaneseq
    %v2153 = vshrl.u32 %v2152, 7
    %v2154 = vsub.s32 0, %v2153
    %v2155 = vrot.slane %v1466, %v2154
    %v2156 = vlaneseq
    %v2157 = vshrl.u32 %v2156, 7
    %v2158 = vsub.s32 1, %v2157
    %v2159 = vrot.slane %v1466, %v2158
    %v2160 = vlaneseq
    %v2161 = vshrl.u32 %v2160, 7
    %v2162 = vsub.s32 2, %v2161
    %v2163 = vrot.slane %v1466, %v2162
    %v2164 = vlaneseq
    %v2165 = vshrl.u32 %v2164, 7
    %v2166 = vsub.s32 3, %v2165
    %v2167 = vrot.slane %v1466, %v2166
    %v2168 = vlaneseq
    %v2169 = vshrl.u32 %v2168, 7
    %v2170 = vsub.s32 4, %v2169
    %v2171 = vrot.slane %v1466, %v2170
    %v2172 = vlaneseq
    %v2173 = vshrl.u32 %v2172, 7
    %v2174 = vsub.s32 5, %v2173
    %v2175 = vrot.slane %v1466, %v2174
    %v2176 = vlaneseq
    %v2177 = vshrl.u32 %v2176, 7
    %v2178 = vsub.s32 6, %v2177
    %v2179 = vrot.slane %v1466, %v2178
    %v2180 = vlaneseq
    %v2181 = vshrl.u32 %v2180, 7
    %v2182 = vsub.s32 7, %v2181
    %v2183 = vrot.slane %v1466, %v2182
    %v2184 = vlaneseq
    %v2185 = vshrl.u32 %v2184, 7
    %v2186 = vsub.s32 0, %v2185
    %v2187 = vrot.slane %v1467, %v2186
    %v2188 = vlaneseq
    %v2189 = vshrl.u32 %v2188, 7
    %v2190 = vsub.s32 1, %v2189
    %v2191 = vrot.slane %v1467, %v2190
    %v2192 = vlaneseq
    %v2193 = vshrl.u32 %v2192, 7
    %v2194 = vsub.s32 2, %v2193
    %v2195 = vrot.slane %v1467, %v2194
    %v2196 = vlaneseq
    %v2197 = vshrl.u32 %v2196, 7
    %v2198 = vsub.s32 3, %v2197
    %v2199 = vrot.slane %v1467, %v2198
    %v2200 = vlaneseq
    %v2201 = vshrl.u32 %v2200, 7
    %v2202 = vsub.s32 4, %v2201
    %v2203 = vrot.slane %v1467, %v2202
    %v2204 = vlaneseq
    %v2205 = vshrl.u32 %v2204, 7
    %v2206 = vsub.s32 5, %v2205
    %v2207 = vrot.slane %v1467, %v2206
    %v2208 = vlaneseq
    %v2209 = vshrl.u32 %v2208, 7
    %v2210 = vsub.s32 6, %v2209
    %v2211 = vrot.slane %v1467, %v2210
    %v2212 = vlaneseq
    %v2213 = vshrl.u32 %v2212, 7
    %v2214 = vsub.s32 7, %v2213
    %v2215 = vrot.slane %v1467, %v2214
    %v2216 = vlaneseq
    %v2217 = vshrl.u32 %v2216, 7
    %v2218 = vsub.s32 0, %v2217
    %v2219 = vrot.slane %v1468, %v2218
    %v2220 = vlaneseq
    %v2221 = vshrl.u32 %v2220, 7
    %v2222 = vsub.s32 1, %v2221
    %v2223 = vrot.slane %v1468, %v2222
    %v2224 = vlaneseq
    %v2225 = vshrl.u32 %v2224, 7
    %v2226 = vsub.s32 2, %v2225
    %v2227 = vrot.slane %v1468, %v2226
    %v2228 = vlaneseq
    %v2229 = vshrl.u32 %v2228, 7
    %v2230 = vsub.s32 3, %v2229
    %v2231 = vrot.slane %v1468, %v2230
    %v2232 = vlaneseq
    %v2233 = vshrl.u32 %v2232, 7
    %v2234 = vsub.s32 4, %v2233
    %v2235 = vrot.slane %v1468, %v2234
    %v2236 = vlaneseq
    %v2237 = vshrl.u32 %v2236, 7
    %v2238 = vsub.s32 5, %v2237
    %v2239 = vrot.slane %v1468, %v2238
    %v2240 = vlaneseq
    %v2241 = vshrl.u32 %v2240, 7
    %v2242 = vsub.s32 6, %v2241
    %v2243 = vrot.slane %v1468, %v2242
    %v2244 = vlaneseq
    %v2245 = vshrl.u32 %v2244, 7
    %v2246 = vsub.s32 7, %v2245
    %v2247 = vrot.slane %v1468, %v2246
    %v2248 = vlaneseq
    %v2249 = vshrl.u32 %v2248, 7
    %v2250 = vsub.s32 0, %v2249
    %v2251 = vrot.slane %v1469, %v2250
    %v2252 = vlaneseq
    %v2253 = vshrl.u32 %v2252, 7
    %v2254 = vsub.s32 1, %v2253
    %v2255 = vrot.slane %v1469, %v2254
    %v2256 = vlaneseq
    %v2257 = vshrl.u32 %v2256, 7
    %v2258 = vsub.s32 2, %v2257
    %v2259 = vrot.slane %v1469, %v2258
    %v2260 = vlaneseq
    %v2261 = vshrl.u32 %v2260, 7
    %v2262 = vsub.s32 3, %v2261
    %v2263 = vrot.slane %v1469, %v2262
    %v2264 = vlaneseq
    %v2265 = vshrl.u32 %v2264, 7
    %v2266 = vsub.s32 4, %v2265
    %v2267 = vrot.slane %v1469, %v2266
    %v2268 = vlaneseq
    %v2269 = vshrl.u32 %v2268, 7
    %v2270 = vsub.s32 5, %v2269
    %v2271 = vrot.slane %v1469, %v2270
    %v2272 = vlaneseq
    %v2273 = vshrl.u32 %v2272, 7
    %v2274 = vsub.s32 6, %v2273
    %v2275 = vrot.slane %v1469, %v2274
    %v2276 = vlaneseq
    %v2277 = vshrl.u32 %v2276, 7
    %v2278 = vsub.s32 7, %v2277
    %v2279 = vrot.slane %v1469, %v2278
    %v2280 = vlaneseq
    %v2281 = vshrl.u32 %v2280, 7
    %v2282 = vsub.s32 0, %v2281
    %v2283 = vrot.slane %v1470, %v2282
    %v2284 = vlaneseq
    %v2285 = vshrl.u32 %v2284, 7
    %v2286 = vsub.s32 1, %v2285
    %v2287 = vrot.slane %v1470, %v2286
    %v2288 = vlaneseq
    %v2289 = vshrl.u32 %v2288, 7
    %v2290 = vsub.s32 2, %v2289
    %v2291 = vrot.slane %v1470, %v2290
    %v2292 = vlaneseq
    %v2293 = vshrl.u32 %v2292, 7
    %v2294 = vsub.s32 3, %v2293
    %v2295 = vrot.slane %v1470, %v2294
    %v2296 = vlaneseq
    %v2297 = vshrl.u32 %v2296, 7
    %v2298 = vsub.s32 4, %v2297
    %v2299 = vrot.slane %v1470, %v2298
    %v2300 = vlaneseq
    %v2301 = vshrl.u32 %v2300, 7
    %v2302 = vsub.s32 5, %v2301
    %v2303 = vrot.slane %v1470, %v2302
    %v2304 = vlaneseq
    %v2305 = vshrl.u32 %v2304, 7
    %v2306 = vsub.s32 6, %v2305
    %v2307 = vrot.slane %v1470, %v2306
    %v2308 = vlaneseq
    %v2309 = vshrl.u32 %v2308, 7
    %v2310 = vsub.s32 7, %v2309
    %v2311 = vrot.slane %v1470, %v2310
    %v2312 = vlaneseq
    %v2313 = vshrl.u32 %v2312, 7
    %v2314 = vsub.s32 0, %v2313
    %v2315 = vrot.slane %v1471, %v2314
    %v2316 = vlaneseq
    %v2317 = vshrl.u32 %v2316, 7
    %v2318 = vsub.s32 1, %v2317
    %v2319 = vrot.slane %v1471, %v2318
    %v2320 = vlaneseq
    %v2321 = vshrl.u32 %v2320, 7
    %v2322 = vsub.s32 2, %v2321
    %v2323 = vrot.slane %v1471, %v2322
    %v2324 = vlaneseq
    %v2325 = vshrl.u32 %v2324, 7
    %v2326 = vsub.s32 3, %v2325
    %v2327 = vrot.slane %v1471, %v2326
    %v2328 = vlaneseq
    %v2329 = vshrl.u32 %v2328, 7
    %v2330 = vsub.s32 4, %v2329
    %v2331 = vrot.slane %v1471, %v2330
    %v2332 = vlaneseq
    %v2333 = vshrl.u32 %v2332, 7
    %v2334 = vsub.s32 5, %v2333
    %v2335 = vrot.slane %v1471, %v2334
    %v2336 = vlaneseq
    %v2337 = vshrl.u32 %v2336, 7
    %v2338 = vsub.s32 6, %v2337
    %v2339 = vrot.slane %v1471, %v2338
    %v2340 = vlaneseq
    %v2341 = vshrl.u32 %v2340, 7
    %v2342 = vsub.s32 7, %v2341
    %v2343 = vrot.slane %v1471, %v2342
    %v2344 = vlaneseq
    %v2345 = vshrl.u32 %v2344, 7
    %v2346 = vsub.s32 0, %v2345
    %v2347 = vrot.slane %v1472, %v2346
    %v2348 = vlaneseq
    %v2349 = vshrl.u32 %v2348, 7
    %v2350 = vsub.s32 1, %v2349
    %v2351 = vrot.slane %v1472, %v2350
    %v2352 = vlaneseq
    %v2353 = vshrl.u32 %v2352, 7
    %v2354 = vsub.s32 2, %v2353
    %v2355 = vrot.slane %v1472, %v2354
    %v2356 = vlaneseq
    %v2357 = vshrl.u32 %v2356, 7
    %v2358 = vsub.s32 3, %v2357
    %v2359 = vrot.slane %v1472, %v2358
    %v2360 = vlaneseq
    %v2361 = vshrl.u32 %v2360, 7
    %v2362 = vsub.s32 4, %v2361
    %v2363 = vrot.slane %v1472, %v2362
    %v2364 = vlaneseq
    %v2365 = vshrl.u32 %v2364, 7
    %v2366 = vsub.s32 5, %v2365
    %v2367 = vrot.slane %v1472, %v2366
    %v2368 = vlaneseq
    %v2369 = vshrl.u32 %v2368, 7
    %v2370 = vsub.s32 6, %v2369
    %v2371 = vrot.slane %v1472, %v2370
    %v2372 = vlaneseq
    %v2373 = vshrl.u32 %v2372, 7
    %v2374 = vsub.s32 7, %v2373
    %v2375 = vrot.slane %v1472, %v2374
    %v2376 = vlaneseq
    %v2377 = vshrl.u32 %v2376, 7
    %v2378 = vsub.s32 0, %v2377
    %v2379 = vrot.slane %v1473, %v2378
    %v2380 = vlaneseq
    %v2381 = vshrl.u32 %v2380, 7
    %v2382 = vsub.s32 1, %v2381
    %v2383 = vrot.slane %v1473, %v2382
    %v2384 = vlaneseq
    %v2385 = vshrl.u32 %v2384, 7
    %v2386 = vsub.s32 2, %v2385
    %v2387 = vrot.slane %v1473, %v2386
    %v2388 = vlaneseq
    %v2389 = vshrl.u32 %v2388, 7
    %v2390 = vsub.s32 3, %v2389
    %v2391 = vrot.slane %v1473, %v2390
    %v2392 = vlaneseq
    %v2393 = vshrl.u32 %v2392, 7
    %v2394 = vsub.s32 4, %v2393
    %v2395 = vrot.slane %v1473, %v2394
    %v2396 = vlaneseq
    %v2397 = vshrl.u32 %v2396, 7
    %v2398 = vsub.s32 5, %v2397
    %v2399 = vrot.slane %v1473, %v2398
    %v2400 = vlaneseq
    %v2401 = vshrl.u32 %v2400, 7
    %v2402 = vsub.s32 6, %v2401
    %v2403 = vrot.slane %v1473, %v2402
    %v2404 = vlaneseq
    %v2405 = vshrl.u32 %v2404, 7
    %v2406 = vsub.s32 7, %v2405
    %v2407 = vrot.slane %v1473, %v2406
    %v2408 = vlaneseq
    %v2409 = vshrl.u32 %v2408, 7
    %v2410 = vsub.s32 0, %v2409
    %v2411 = vrot.slane %v1474, %v2410
    %v2412 = vlaneseq
    %v2413 = vshrl.u32 %v2412, 7
    %v2414 = vsub.s32 1, %v2413
    %v2415 = vrot.slane %v1474, %v2414
    %v2416 = vlaneseq
    %v2417 = vshrl.u32 %v2416, 7
    %v2418 = vsub.s32 2, %v2417
    %v2419 = vrot.slane %v1474, %v2418
    %v2420 = vlaneseq
    %v2421 = vshrl.u32 %v2420, 7
    %v2422 = vsub.s32 3, %v2421
    %v2423 = vrot.slane %v1474, %v2422
    %v2424 = vlaneseq
    %v2425 = vshrl.u32 %v2424, 7
    %v2426 = vsub.s32 4, %v2425
    %v2427 = vrot.slane %v1474, %v2426
    %v2428 = vlaneseq
    %v2429 = vshrl.u32 %v2428, 7
    %v2430 = vsub.s32 5, %v2429
    %v2431 = vrot.slane %v1474, %v2430
    %v2432 = vlaneseq
    %v2433 = vshrl.u32 %v2432, 7
    %v2434 = vsub.s32 6, %v2433
    %v2435 = vrot.slane %v1474, %v2434
    %v2436 = vlaneseq
    %v2437 = vshrl.u32 %v2436, 7
    %v2438 = vsub.s32 7, %v2437
    %v2439 = vrot.slane %v1474, %v2438
    %v2440 = vlaneseq
    %v2441 = vshrl.u32 %v2440, 7
    %v2442 = vsub.s32 0, %v2441
    %v2443 = vrot.slane %v1475, %v2442
    %v2444 = vlaneseq
    %v2445 = vshrl.u32 %v2444, 7
    %v2446 = vsub.s32 1, %v2445
    %v2447 = vrot.slane %v1475, %v2446
    %v2448 = vlaneseq
    %v2449 = vshrl.u32 %v2448, 7
    %v2450 = vsub.s32 2, %v2449
    %v2451 = vrot.slane %v1475, %v2450
    %v2452 = vlaneseq
    %v2453 = vshrl.u32 %v2452, 7
    %v2454 = vsub.s32 3, %v2453
    %v2455 = vrot.slane %v1475, %v2454
    %v2456 = vlaneseq
    %v2457 = vshrl.u32 %v2456, 7
    %v2458 = vsub.s32 4, %v2457
    %v2459 = vrot.slane %v1475, %v2458
    %v2460 = vlaneseq
    %v2461 = vshrl.u32 %v2460, 7
    %v2462 = vsub.s32 5, %v2461
    %v2463 = vrot.slane %v1475, %v2462
    %v2464 = vlaneseq
    %v2465 = vshrl.u32 %v2464, 7
    %v2466 = vsub.s32 6, %v2465
    %v2467 = vrot.slane %v1475, %v2466
    %v2468 = vlaneseq
    %v2469 = vshrl.u32 %v2468, 7
    %v2470 = vsub.s32 7, %v2469
    %v2471 = vrot.slane %v1475, %v2470
    %v2472 = vlaneseq
    %v2473 = vshrl.u32 %v2472, 7
    %v2474 = vsub.s32 0, %v2473
    %v2475 = vrot.slane %v1476, %v2474
    %v2476 = vlaneseq
    %v2477 = vshrl.u32 %v2476, 7
    %v2478 = vsub.s32 1, %v2477
    %v2479 = vrot.slane %v1476, %v2478
    %v2480 = vlaneseq
    %v2481 = vshrl.u32 %v2480, 7
    %v2482 = vsub.s32 2, %v2481
    %v2483 = vrot.slane %v1476, %v2482
    %v2484 = vlaneseq
    %v2485 = vshrl.u32 %v2484, 7
    %v2486 = vsub.s32 3, %v2485
    %v2487 = vrot.slane %v1476, %v2486
    %v2488 = vlaneseq
    %v2489 = vshrl.u32 %v2488, 7
    %v2490 = vsub.s32 4, %v2489
    %v2491 = vrot.slane %v1476, %v2490
    %v2492 = vlaneseq
    %v2493 = vshrl.u32 %v2492, 7
    %v2494 = vsub.s32 5, %v2493
    %v2495 = vrot.slane %v1476, %v2494
    %v2496 = vlaneseq
    %v2497 = vshrl.u32 %v2496, 7
    %v2498 = vsub.s32 6, %v2497
    %v2499 = vrot.slane %v1476, %v2498
    %v2500 = vlaneseq
    %v2501 = vshrl.u32 %v2500, 7
    %v2502 = vsub.s32 7, %v2501
    %v2503 = vrot.slane %v1476, %v2502
    %v2504 = vlaneseq
    %v2505 = vshrl.u32 %v2504, 7
    %v2506 = vsub.s32 0, %v2505
    %v2507 = vrot.slane %v1477, %v2506
    %v2508 = vlaneseq
    %v2509 = vshrl.u32 %v2508, 7
    %v2510 = vsub.s32 1, %v2509
    %v2511 = vrot.slane %v1477, %v2510
    %v2512 = vlaneseq
    %v2513 = vshrl.u32 %v2512, 7
    %v2514 = vsub.s32 2, %v2513
    %v2515 = vrot.slane %v1477, %v2514
    %v2516 = vlaneseq
    %v2517 = vshrl.u32 %v2516, 7
    %v2518 = vsub.s32 3, %v2517
    %v2519 = vrot.slane %v1477, %v2518
    %v2520 = vlaneseq
    %v2521 = vshrl.u32 %v2520, 7
    %v2522 = vsub.s32 4, %v2521
    %v2523 = vrot.slane %v1477, %v2522
    %v2524 = vlaneseq
    %v2525 = vshrl.u32 %v2524, 7
    %v2526 = vsub.s32 5, %v2525
    %v2527 = vrot.slane %v1477, %v2526
    %v2528 = vlaneseq
    %v2529 = vshrl.u32 %v2528, 7
    %v2530 = vsub.s32 6, %v2529
    %v2531 = vrot.slane %v1477, %v2530
    %v2532 = vlaneseq
    %v2533 = vshrl.u32 %v2532, 7
    %v2534 = vsub.s32 7, %v2533
    %v2535 = vrot.slane %v1477, %v2534
    %v2536 = vlaneseq
    %v2537 = vshrl.u32 %v2536, 7
    %v2538 = vsub.s32 0, %v2537
    %v2539 = vrot.slane %v1478, %v2538
    %v2540 = vlaneseq
    %v2541 = vshrl.u32 %v2540, 7
    %v2542 = vsub.s32 1, %v2541
    %v2543 = vrot.slane %v1478, %v2542
    %v2544 = vlaneseq
    %v2545 = vshrl.u32 %v2544, 7
    %v2546 = vsub.s32 2, %v2545
    %v2547 = vrot.slane %v1478, %v2546
    %v2548 = vlaneseq
    %v2549 = vshrl.u32 %v2548, 7
    %v2550 = vsub.s32 3, %v2549
    %v2551 = vrot.slane %v1478, %v2550
    %v2552 = vlaneseq
    %v2553 = vshrl.u32 %v2552, 7
    %v2554 = vsub.s32 4, %v2553
    %v2555 = vrot.slane %v1478, %v2554
    %v2556 = vlaneseq
    %v2557 = vshrl.u32 %v2556, 7
    %v2558 = vsub.s32 5, %v2557
    %v2559 = vrot.slane %v1478, %v2558
    %v2560 = vlaneseq
    %v2561 = vshrl.u32 %v2560, 7
    %v2562 = vsub.s32 6, %v2561
    %v2563 = vrot.slane %v1478, %v2562
    %v2564 = vlaneseq
    %v2565 = vshrl.u32 %v2564, 7
    %v2566 = vsub.s32 7, %v2565
    %v2567 = vrot.slane %v1478, %v2566
    %v2568 = vlaneseq
    %v2569 = vshrl.u32 %v2568, 7
    %v2570 = vsub.s32 0, %v2569
    %v2571 = vrot.slane %v1479, %v2570
    %v2572 = vlaneseq
    %v2573 = vshrl.u32 %v2572, 7
    %v2574 = vsub.s32 1, %v2573
    %v2575 = vrot.slane %v1479, %v2574
    %v2576 = vlaneseq
    %v2577 = vshrl.u32 %v2576, 7
    %v2578 = vsub.s32 2, %v2577
    %v2579 = vrot.slane %v1479, %v2578
    %v2580 = vlaneseq
    %v2581 = vshrl.u32 %v2580, 7
    %v2582 = vsub.s32 3, %v2581
    %v2583 = vrot.slane %v1479, %v2582
    %v2584 = vlaneseq
    %v2585 = vshrl.u32 %v2584, 7
    %v2586 = vsub.s32 4, %v2585
    %v2587 = vrot.slane %v1479, %v2586
    %v2588 = vlaneseq
    %v2589 = vshrl.u32 %v2588, 7
    %v2590 = vsub.s32 5, %v2589
    %v2591 = vrot.slane %v1479, %v2590
    %v2592 = vlaneseq
    %v2593 = vshrl.u32 %v2592, 7
    %v2594 = vsub.s32 6, %v2593
    %v2595 = vrot.slane %v1479, %v2594
    %v2596 = vlaneseq
    %v2597 = vshrl.u32 %v2596, 7
    %v2598 = vsub.s32 7, %v2597
    %v2599 = vrot.slane %v1479, %v2598
    %v2600 = vlaneseq
    %v2601 = vshrl.u32 %v2600, 7
    %v2602 = vsub.s32 0, %v2601
    %v2603 = vrot.slane %v1480, %v2602
    %v2604 = vlaneseq
    %v2605 = vshrl.u32 %v2604, 7
    %v2606 = vsub.s32 1, %v2605
    %v2607 = vrot.slane %v1480, %v2606
    %v2608 = vlaneseq
    %v2609 = vshrl.u32 %v2608, 7
    %v2610 = vsub.s32 2, %v2609
    %v2611 = vrot.slane %v1480, %v2610
    %v2612 = vlaneseq
    %v2613 = vshrl.u32 %v2612, 7
    %v2614 = vsub.s32 3, %v2613
    %v2615 = vrot.slane %v1480, %v2614
    %v2616 = vlaneseq
    %v2617 = vshrl.u32 %v2616, 7
    %v2618 = vsub.s32 4, %v2617
    %v2619 = vrot.slane %v1480, %v2618
    %v2620 = vlaneseq
    %v2621 = vshrl.u32 %v2620, 7
    %v2622 = vsub.s32 5, %v2621
    %v2623 = vrot.slane %v1480, %v2622
    %v2624 = vlaneseq
    %v2625 = vshrl.u32 %v2624, 7
    %v2626 = vsub.s32 6, %v2625
    %v2627 = vrot.slane %v1480, %v2626
    %v2628 = vlaneseq
    %v2629 = vshrl.u32 %v2628, 7
    %v2630 = vsub.s32 7, %v2629
    %v2631 = vrot.slane %v1480, %v2630
    %v2632 = vlaneseq
    %v2633 = vshrl.u32 %v2632, 7
    %v2634 = vsub.s32 0, %v2633
    %v2635 = vrot.slane %v1481, %v2634
    %v2636 = vlaneseq
    %v2637 = vshrl.u32 %v2636, 7
    %v2638 = vsub.s32 1, %v2637
    %v2639 = vrot.slane %v1481, %v2638
    %v2640 = vlaneseq
    %v2641 = vshrl.u32 %v2640, 7
    %v2642 = vsub.s32 2, %v2641
    %v2643 = vrot.slane %v1481, %v2642
    %v2644 = vlaneseq
    %v2645 = vshrl.u32 %v2644, 7
    %v2646 = vsub.s32 3, %v2645
    %v2647 = vrot.slane %v1481, %v2646
    %v2648 = vlaneseq
    %v2649 = vshrl.u32 %v2648, 7
    %v2650 = vsub.s32 4, %v2649
    %v2651 = vrot.slane %v1481, %v2650
    %v2652 = vlaneseq
    %v2653 = vshrl.u32 %v2652, 7
    %v2654 = vsub.s32 5, %v2653
    %v2655 = vrot.slane %v1481, %v2654
    %v2656 = vlaneseq
    %v2657 = vshrl.u32 %v2656, 7
    %v2658 = vsub.s32 6, %v2657
    %v2659 = vrot.slane %v1481, %v2658
    %v2660 = vlaneseq
    %v2661 = vshrl.u32 %v2660, 7
    %v2662 = vsub.s32 7, %v2661
    %v2663 = vrot.slane %v1481, %v2662
    %v2664 = vlaneseq
    %v2665 = vshrl.u32 %v2664, 7
    %v2666 = vsub.s32 0, %v2665
    %v2667 = vrot.slane %v1482, %v2666
    %v2668 = vlaneseq
    %v2669 = vshrl.u32 %v2668, 7
    %v2670 = vsub.s32 1, %v2669
    %v2671 = vrot.slane %v1482, %v2670
    %v2672 = vlaneseq
    %v2673 = vshrl.u32 %v2672, 7
    %v2674 = vsub.s32 2, %v2673
    %v2675 = vrot.slane %v1482, %v2674
    %v2676 = vlaneseq
    %v2677 = vshrl.u32 %v2676, 7
    %v2678 = vsub.s32 3, %v2677
    %v2679 = vrot.slane %v1482, %v2678
    %v2680 = vlaneseq
    %v2681 = vshrl.u32 %v2680, 7
    %v2682 = vsub.s32 4, %v2681
    %v2683 = vrot.slane %v1482, %v2682
    %v2684 = vlaneseq
    %v2685 = vshrl.u32 %v2684, 7
    %v2686 = vsub.s32 5, %v2685
    %v2687 = vrot.slane %v1482, %v2686
    %v2688 = vlaneseq
    %v2689 = vshrl.u32 %v2688, 7
    %v2690 = vsub.s32 6, %v2689
    %v2691 = vrot.slane %v1482, %v2690
    %v2692 = vlaneseq
    %v2693 = vshrl.u32 %v2692, 7
    %v2694 = vsub.s32 7, %v2693
    %v2695 = vrot.slane %v1482, %v2694
    %v2696 = vlaneseq
    %v2697 = vshrl.u32 %v2696, 7
    %v2698 = vsub.s32 0, %v2697
    %v2699 = vrot.slane %v1483, %v2698
    %v2700 = vlaneseq
    %v2701 = vshrl.u32 %v2700, 7
    %v2702 = vsub.s32 1, %v2701
    %v2703 = vrot.slane %v1483, %v2702
    %v2704 = vlaneseq
    %v2705 = vshrl.u32 %v2704, 7
    %v2706 = vsub.s32 2, %v2705
    %v2707 = vrot.slane %v1483, %v2706
    %v2708 = vlaneseq
    %v2709 = vshrl.u32 %v2708, 7
    %v2710 = vsub.s32 3, %v2709
    %v2711 = vrot.slane %v1483, %v2710
    %v2712 = vlaneseq
    %v2713 = vshrl.u32 %v2712, 7
    %v2714 = vsub.s32 4, %v2713
    %v2715 = vrot.slane %v1483, %v2714
    %v2716 = vlaneseq
    %v2717 = vshrl.u32 %v2716, 7
    %v2718 = vsub.s32 5, %v2717
    %v2719 = vrot.slane %v1483, %v2718
    %v2720 = vlaneseq
    %v2721 = vshrl.u32 %v2720, 7
    %v2722 = vsub.s32 6, %v2721
    %v2723 = vrot.slane %v1483, %v2722
    %v2724 = vlaneseq
    %v2725 = vshrl.u32 %v2724, 7
    %v2726 = vsub.s32 7, %v2725
    %v2727 = vrot.slane %v1483, %v2726
    %v2728 = vlaneseq
    %v2729 = vshrl.u32 %v2728, 7
    %v2730 = vsub.s32 0, %v2729
    %v2731 = vrot.slane %v1484, %v2730
    %v2732 = vlaneseq
    %v2733 = vshrl.u32 %v2732, 7
    %v2734 = vsub.s32 1, %v2733
    %v2735 = vrot.slane %v1484, %v2734
    %v2736 = vlaneseq
    %v2737 = vshrl.u32 %v2736, 7
    %v2738 = vsub.s32 2, %v2737
    %v2739 = vrot.slane %v1484, %v2738
    %v2740 = vlaneseq
    %v2741 = vshrl.u32 %v2740, 7
    %v2742 = vsub.s32 3, %v2741
    %v2743 = vrot.slane %v1484, %v2742
    %v2744 = vlaneseq
    %v2745 = vshrl.u32 %v2744, 7
    %v2746 = vsub.s32 4, %v2745
    %v2747 = vrot.slane %v1484, %v2746
    %v2748 = vlaneseq
    %v2749 = vshrl.u32 %v2748, 7
    %v2750 = vsub.s32 5, %v2749
    %v2751 = vrot.slane %v1484, %v2750
    %v2752 = vlaneseq
    %v2753 = vshrl.u32 %v2752, 7
    %v2754 = vsub.s32 6, %v2753
    %v2755 = vrot.slane %v1484, %v2754
    %v2756 = vlaneseq
    %v2757 = vshrl.u32 %v2756, 7
    %v2758 = vsub.s32 7, %v2757
    %v2759 = vrot.slane %v1484, %v2758
    %v2760 = vlaneseq
    %v2761 = vshrl.u32 %v2760, 7
    %v2762 = vsub.s32 0, %v2761
    %v2763 = vrot.slane %v1485, %v2762
    %v2764 = vlaneseq
    %v2765 = vshrl.u32 %v2764, 7
    %v2766 = vsub.s32 1, %v2765
    %v2767 = vrot.slane %v1485, %v2766
    %v2768 = vlaneseq
    %v2769 = vshrl.u32 %v2768, 7
    %v2770 = vsub.s32 2, %v2769
    %v2771 = vrot.slane %v1485, %v2770
    %v2772 = vlaneseq
    %v2773 = vshrl.u32 %v2772, 7
    %v2774 = vsub.s32 3, %v2773
    %v2775 = vrot.slane %v1485, %v2774
    %v2776 = vlaneseq
    %v2777 = vshrl.u32 %v2776, 7
    %v2778 = vsub.s32 4, %v2777
    %v2779 = vrot.slane %v1485, %v2778
    %v2780 = vlaneseq
    %v2781 = vshrl.u32 %v2780, 7
    %v2782 = vsub.s32 5, %v2781
    %v2783 = vrot.slane %v1485, %v2782
    %v2784 = vlaneseq
    %v2785 = vshrl.u32 %v2784, 7
    %v2786 = vsub.s32 6, %v2785
    %v2787 = vrot.slane %v1485, %v2786
    %v2788 = vlaneseq
    %v2789 = vshrl.u32 %v2788, 7
    %v2790 = vsub.s32 7, %v2789
    %v2791 = vrot.slane %v1485, %v2790
    %v2792 = vlaneseq
    %v2793 = vshrl.u32 %v2792, 7
    %v2794 = vsub.s32 0, %v2793
    %v2795 = vrot.slane %v1486, %v2794
    %v2796 = vlaneseq
    %v2797 = vshrl.u32 %v2796, 7
    %v2798 = vsub.s32 1, %v2797
    %v2799 = vrot.slane %v1486, %v2798
    %v2800 = vlaneseq
    %v2801 = vshrl.u32 %v2800, 7
    %v2802 = vsub.s32 2, %v2801
    %v2803 = vrot.slane %v1486, %v2802
    %v2804 = vlaneseq
    %v2805 = vshrl.u32 %v2804, 7
    %v2806 = vsub.s32 3, %v2805
    %v2807 = vrot.slane %v1486, %v2806
    %v2808 = vlaneseq
    %v2809 = vshrl.u32 %v2808, 7
    %v2810 = vsub.s32 4, %v2809
    %v2811 = vrot.slane %v1486, %v2810
    %v2812 = vlaneseq
    %v2813 = vshrl.u32 %v2812, 7
    %v2814 = vsub.s32 5, %v2813
    %v2815 = vrot.slane %v1486, %v2814
    %v2816 = vlaneseq
    %v2817 = vshrl.u32 %v2816, 7
    %v2818 = vsub.s32 6, %v2817
    %v2819 = vrot.slane %v1486, %v2818
    %v2820 = vlaneseq
    %v2821 = vshrl.u32 %v2820, 7
    %v2822 = vsub.s32 7, %v2821
    %v2823 = vrot.slane %v1486, %v2822
    %v2824 = vlaneseq
    %v2825 = vshrl.u32 %v2824, 7
    %v2826 = vsub.s32 0, %v2825
    %v2827 = vrot.slane %v1487, %v2826
    %v2828 = vlaneseq
    %v2829 = vshrl.u32 %v2828, 7
    %v2830 = vsub.s32 1, %v2829
    %v2831 = vrot.slane %v1487, %v2830
    %v2832 = vlaneseq
    %v2833 = vshrl.u32 %v2832, 7
    %v2834 = vsub.s32 2, %v2833
    %v2835 = vrot.slane %v1487, %v2834
    %v2836 = vlaneseq
    %v2837 = vshrl.u32 %v2836, 7
    %v2838 = vsub.s32 3, %v2837
    %v2839 = vrot.slane %v1487, %v2838
    %v2840 = vlaneseq
    %v2841 = vshrl.u32 %v2840, 7
    %v2842 = vsub.s32 4, %v2841
    %v2843 = vrot.slane %v1487, %v2842
    %v2844 = vlaneseq
    %v2845 = vshrl.u32 %v2844, 7
    %v2846 = vsub.s32 5, %v2845
    %v2847 = vrot.slane %v1487, %v2846
    %v2848 = vlaneseq
    %v2849 = vshrl.u32 %v2848, 7
    %v2850 = vsub.s32 6, %v2849
    %v2851 = vrot.slane %v1487, %v2850
    %v2852 = vlaneseq
    %v2853 = vshrl.u32 %v2852, 7
    %v2854 = vsub.s32 7, %v2853
    %v2855 = vrot.slane %v1487, %v2854
    %v2856 = vlaneseq
    %v2857 = vshrl.u32 %v2856, 7
    %v2858 = vsub.s32 0, %v2857
    %v2859 = vrot.slane %v1488, %v2858
    %v2860 = vlaneseq
    %v2861 = vshrl.u32 %v2860, 7
    %v2862 = vsub.s32 1, %v2861
    %v2863 = vrot.slane %v1488, %v2862
    %v2864 = vlaneseq
    %v2865 = vshrl.u32 %v2864, 7
    %v2866 = vsub.s32 2, %v2865
    %v2867 = vrot.slane %v1488, %v2866
    %v2868 = vlaneseq
    %v2869 = vshrl.u32 %v2868, 7
    %v2870 = vsub.s32 3, %v2869
    %v2871 = vrot.slane %v1488, %v2870
    %v2872 = vlaneseq
    %v2873 = vshrl.u32 %v2872, 7
    %v2874 = vsub.s32 4, %v2873
    %v2875 = vrot.slane %v1488, %v2874
    %v2876 = vlaneseq
    %v2877 = vshrl.u32 %v2876, 7
    %v2878 = vsub.s32 5, %v2877
    %v2879 = vrot.slane %v1488, %v2878
    %v2880 = vlaneseq
    %v2881 = vshrl.u32 %v2880, 7
    %v2882 = vsub.s32 6, %v2881
    %v2883 = vrot.slane %v1488, %v2882
    %v2884 = vlaneseq
    %v2885 = vshrl.u32 %v2884, 7
    %v2886 = vsub.s32 7, %v2885
    %v2887 = vrot.slane %v1488, %v2886
    %v2888 = vlaneseq
    %v2889 = vshrl.u32 %v2888, 7
    %v2890 = vsub.s32 0, %v2889
    %v2891 = vrot.slane %v1489, %v2890
    %v2892 = vlaneseq
    %v2893 = vshrl.u32 %v2892, 7
    %v2894 = vsub.s32 1, %v2893
    %v2895 = vrot.slane %v1489, %v2894
    %v2896 = vlaneseq
    %v2897 = vshrl.u32 %v2896, 7
    %v2898 = vsub.s32 2, %v2897
    %v2899 = vrot.slane %v1489, %v2898
    %v2900 = vlaneseq
    %v2901 = vshrl.u32 %v2900, 7
    %v2902 = vsub.s32 3, %v2901
    %v2903 = vrot.slane %v1489, %v2902
    %v2904 = vlaneseq
    %v2905 = vshrl.u32 %v2904, 7
    %v2906 = vsub.s32 4, %v2905
    %v2907 = vrot.slane %v1489, %v2906
    %v2908 = vlaneseq
    %v2909 = vshrl.u32 %v2908, 7
    %v2910 = vsub.s32 5, %v2909
    %v2911 = vrot.slane %v1489, %v2910
    %v2912 = vlaneseq
    %v2913 = vshrl.u32 %v2912, 7
    %v2914 = vsub.s32 6, %v2913
    %v2915 = vrot.slane %v1489, %v2914
    %v2916 = vlaneseq
    %v2917 = vshrl.u32 %v2916, 7
    %v2918 = vsub.s32 7, %v2917
    %v2919 = vrot.slane %v1489, %v2918
    %v2920 = vlaneseq
    %v2921 = vshrl.u32 %v2920, 7
    %v2922 = vsub.s32 0, %v2921
    %v2923 = vrot.slane %v1490, %v2922
    %v2924 = vlaneseq
    %v2925 = vshrl.u32 %v2924, 7
    %v2926 = vsub.s32 1, %v2925
    %v2927 = vrot.slane %v1490, %v2926
    %v2928 = vlaneseq
    %v2929 = vshrl.u32 %v2928, 7
    %v2930 = vsub.s32 2, %v2929
    %v2931 = vrot.slane %v1490, %v2930
    %v2932 = vlaneseq
    %v2933 = vshrl.u32 %v2932, 7
    %v2934 = vsub.s32 3, %v2933
    %v2935 = vrot.slane %v1490, %v2934
    %v2936 = vlaneseq
    %v2937 = vshrl.u32 %v2936, 7
    %v2938 = vsub.s32 4, %v2937
    %v2939 = vrot.slane %v1490, %v2938
    %v2940 = vlaneseq
    %v2941 = vshrl.u32 %v2940, 7
    %v2942 = vsub.s32 5, %v2941
    %v2943 = vrot.slane %v1490, %v2942
    %v2944 = vlaneseq
    %v2945 = vshrl.u32 %v2944, 7
    %v2946 = vsub.s32 6, %v2945
    %v2947 = vrot.slane %v1490, %v2946
    %v2948 = vlaneseq
    %v2949 = vshrl.u32 %v2948, 7
    %v2950 = vsub.s32 7, %v2949
    %v2951 = vrot.slane %v1490, %v2950
    %v2952 = vlaneseq
    %v2953 = vshrl.u32 %v2952, 7
    %v2954 = vsub.s32 0, %v2953
    %v2955 = vrot.slane %v1491, %v2954
    %v2956 = vlaneseq
    %v2957 = vshrl.u32 %v2956, 7
    %v2958 = vsub.s32 1, %v2957
    %v2959 = vrot.slane %v1491, %v2958
    %v2960 = vlaneseq
    %v2961 = vshrl.u32 %v2960, 7
    %v2962 = vsub.s32 2, %v2961
    %v2963 = vrot.slane %v1491, %v2962
    %v2964 = vlaneseq
    %v2965 = vshrl.u32 %v2964, 7
    %v2966 = vsub.s32 3, %v2965
    %v2967 = vrot.slane %v1491, %v2966
    %v2968 = vlaneseq
    %v2969 = vshrl.u32 %v2968, 7
    %v2970 = vsub.s32 4, %v2969
    %v2971 = vrot.slane %v1491, %v2970
    %v2972 = vlaneseq
    %v2973 = vshrl.u32 %v2972, 7
    %v2974 = vsub.s32 5, %v2973
    %v2975 = vrot.slane %v1491, %v2974
    %v2976 = vlaneseq
    %v2977 = vshrl.u32 %v2976, 7
    %v2978 = vsub.s32 6, %v2977
    %v2979 = vrot.slane %v1491, %v2978
    %v2980 = vlaneseq
    %v2981 = vshrl.u32 %v2980, 7
    %v2982 = vsub.s32 7, %v2981
    %v2983 = vrot.slane %v1491, %v2982
    %v2984 = vlaneseq
    %v2985 = vshrl.u32 %v2984, 7
    %v2986 = vsub.s32 0, %v2985
    %v2987 = vrot.slane %v1492, %v2986
    %v2988 = vlaneseq
    %v2989 = vshrl.u32 %v2988, 7
    %v2990 = vsub.s32 1, %v2989
    %v2991 = vrot.slane %v1492, %v2990
    %v2992 = vlaneseq
    %v2993 = vshrl.u32 %v2992, 7
    %v2994 = vsub.s32 2, %v2993
    %v2995 = vrot.slane %v1492, %v2994
    %v2996 = vlaneseq
    %v2997 = vshrl.u32 %v2996, 7
    %v2998 = vsub.s32 3, %v2997
    %v2999 = vrot.slane %v1492, %v2998
    %v3000 = vlaneseq
    %v3001 = vshrl.u32 %v3000, 7
    %v3002 = vsub.s32 4, %v3001
    %v3003 = vrot.slane %v1492, %v3002
    %v3004 = vlaneseq
    %v3005 = vshrl.u32 %v3004, 7
    %v3006 = vsub.s32 5, %v3005
    %v3007 = vrot.slane %v1492, %v3006
    %v3008 = vlaneseq
    %v3009 = vshrl.u32 %v3008, 7
    %v3010 = vsub.s32 6, %v3009
    %v3011 = vrot.slane %v1492, %v3010
    %v3012 = vlaneseq
    %v3013 = vshrl.u32 %v3012, 7
    %v3014 = vsub.s32 7, %v3013
    %v3015 = vrot.slane %v1492, %v3014
    %v3016 = vlaneseq
    %v3017 = vshrl.u32 %v3016, 7
    %v3018 = vsub.s32 0, %v3017
    %v3019 = vrot.slane %v1493, %v3018
    %v3020 = vlaneseq
    %v3021 = vshrl.u32 %v3020, 7
    %v3022 = vsub.s32 1, %v3021
    %v3023 = vrot.slane %v1493, %v3022
    %v3024 = vlaneseq
    %v3025 = vshrl.u32 %v3024, 7
    %v3026 = vsub.s32 2, %v3025
    %v3027 = vrot.slane %v1493, %v3026
    %v3028 = vlaneseq
    %v3029 = vshrl.u32 %v3028, 7
    %v3030 = vsub.s32 3, %v3029
    %v3031 = vrot.slane %v1493, %v3030
    %v3032 = vlaneseq
    %v3033 = vshrl.u32 %v3032, 7
    %v3034 = vsub.s32 4, %v3033
    %v3035 = vrot.slane %v1493, %v3034
    %v3036 = vlaneseq
    %v3037 = vshrl.u32 %v3036, 7
    %v3038 = vsub.s32 5, %v3037
    %v3039 = vrot.slane %v1493, %v3038
    %v3040 = vlaneseq
    %v3041 = vshrl.u32 %v3040, 7
    %v3042 = vsub.s32 6, %v3041
    %v3043 = vrot.slane %v1493, %v3042
    %v3044 = vlaneseq
    %v3045 = vshrl.u32 %v3044, 7
    %v3046 = vsub.s32 7, %v3045
    %v3047 = vrot.slane %v1493, %v3046
    %v3048 = vlaneseq
    %v3049 = vshrl.u32 %v3048, 7
    %v3050 = vsub.s32 0, %v3049
    %v3051 = vrot.slane %v1494, %v3050
    %v3052 = vlaneseq
    %v3053 = vshrl.u32 %v3052, 7
    %v3054 = vsub.s32 1, %v3053
    %v3055 = vrot.slane %v1494, %v3054
    %v3056 = vlaneseq
    %v3057 = vshrl.u32 %v3056, 7
    %v3058 = vsub.s32 2, %v3057
    %v3059 = vrot.slane %v1494, %v3058
    %v3060 = vlaneseq
    %v3061 = vshrl.u32 %v3060, 7
    %v3062 = vsub.s32 3, %v3061
    %v3063 = vrot.slane %v1494, %v3062
    %v3064 = vlaneseq
    %v3065 = vshrl.u32 %v3064, 7
    %v3066 = vsub.s32 4, %v3065
    %v3067 = vrot.slane %v1494, %v3066
    %v3068 = vlaneseq
    %v3069 = vshrl.u32 %v3068, 7
    %v3070 = vsub.s32 5, %v3069
    %v3071 = vrot.slane %v1494, %v3070
    %v3072 = vlaneseq
    %v3073 = vshrl.u32 %v3072, 7
    %v3074 = vsub.s32 6, %v3073
    %v3075 = vrot.slane %v1494, %v3074
    %v3076 = vlaneseq
    %v3077 = vshrl.u32 %v3076, 7
    %v3078 = vsub.s32 7, %v3077
    %v3079 = vrot.slane %v1494, %v3078
    %v3080 = vlaneseq
    %v3081 = vshrl.u32 %v3080, 7
    %v3082 = vsub.s32 0, %v3081
    %v3083 = vrot.slane %v1495, %v3082
    %v3084 = vlaneseq
    %v3085 = vshrl.u32 %v3084, 7
    %v3086 = vsub.s32 1, %v3085
    %v3087 = vrot.slane %v1495, %v3086
    %v3088 = vlaneseq
    %v3089 = vshrl.u32 %v3088, 7
    %v3090 = vsub.s32 2, %v3089
    %v3091 = vrot.slane %v1495, %v3090
    %v3092 = vlaneseq
    %v3093 = vshrl.u32 %v3092, 7
    %v3094 = vsub.s32 3, %v3093
    %v3095 = vrot.slane %v1495, %v3094
    %v3096 = vlaneseq
    %v3097 = vshrl.u32 %v3096, 7
    %v3098 = vsub.s32 4, %v3097
    %v3099 = vrot.slane %v1495, %v3098
    %v3100 = vlaneseq
    %v3101 = vshrl.u32 %v3100, 7
    %v3102 = vsub.s32 5, %v3101
    %v3103 = vrot.slane %v1495, %v3102
    %v3104 = vlaneseq
    %v3105 = vshrl.u32 %v3104, 7
    %v3106 = vsub.s32 6, %v3105
    %v3107 = vrot.slane %v1495, %v3106
    %v3108 = vlaneseq
    %v3109 = vshrl.u32 %v3108, 7
    %v3110 = vsub.s32 7, %v3109
    %v3111 = vrot.slane %v1495, %v3110
    %v3112 = vlaneseq
    %v3113 = vshrl.u32 %v3112, 7
    %v3114 = vsub.s32 0, %v3113
    %v3115 = vrot.slane %v1496, %v3114
    %v3116 = vlaneseq
    %v3117 = vshrl.u32 %v3116, 7
    %v3118 = vsub.s32 1, %v3117
    %v3119 = vrot.slane %v1496, %v3118
    %v3120 = vlaneseq
    %v3121 = vshrl.u32 %v3120, 7
    %v3122 = vsub.s32 2, %v3121
    %v3123 = vrot.slane %v1496, %v3122
    %v3124 = vlaneseq
    %v3125 = vshrl.u32 %v3124, 7
    %v3126 = vsub.s32 3, %v3125
    %v3127 = vrot.slane %v1496, %v3126
    %v3128 = vlaneseq
    %v3129 = vshrl.u32 %v3128, 7
    %v3130 = vsub.s32 4, %v3129
    %v3131 = vrot.slane %v1496, %v3130
    %v3132 = vlaneseq
    %v3133 = vshrl.u32 %v3132, 7
    %v3134 = vsub.s32 5, %v3133
    %v3135 = vrot.slane %v1496, %v3134
    %v3136 = vlaneseq
    %v3137 = vshrl.u32 %v3136, 7
    %v3138 = vsub.s32 6, %v3137
    %v3139 = vrot.slane %v1496, %v3138
    %v3140 = vlaneseq
    %v3141 = vshrl.u32 %v3140, 7
    %v3142 = vsub.s32 7, %v3141
    %v3143 = vrot.slane %v1496, %v3142
    %v3144 = vlaneseq
    %v3145 = vshrl.u32 %v3144, 7
    %v3146 = vsub.s32 0, %v3145
    %v3147 = vrot.slane %v1497, %v3146
    %v3148 = vlaneseq
    %v3149 = vshrl.u32 %v3148, 7
    %v3150 = vsub.s32 1, %v3149
    %v3151 = vrot.slane %v1497, %v3150
    %v3152 = vlaneseq
    %v3153 = vshrl.u32 %v3152, 7
    %v3154 = vsub.s32 2, %v3153
    %v3155 = vrot.slane %v1497, %v3154
    %v3156 = vlaneseq
    %v3157 = vshrl.u32 %v3156, 7
    %v3158 = vsub.s32 3, %v3157
    %v3159 = vrot.slane %v1497, %v3158
    %v3160 = vlaneseq
    %v3161 = vshrl.u32 %v3160, 7
    %v3162 = vsub.s32 4, %v3161
    %v3163 = vrot.slane %v1497, %v3162
    %v3164 = vlaneseq
    %v3165 = vshrl.u32 %v3164, 7
    %v3166 = vsub.s32 5, %v3165
    %v3167 = vrot.slane %v1497, %v3166
    %v3168 = vlaneseq
    %v3169 = vshrl.u32 %v3168, 7
    %v3170 = vsub.s32 6, %v3169
    %v3171 = vrot.slane %v1497, %v3170
    %v3172 = vlaneseq
    %v3173 = vshrl.u32 %v3172, 7
    %v3174 = vsub.s32 7, %v3173
    %v3175 = vrot.slane %v1497, %v3174
    %v3176 = vlaneseq
    %v3177 = vshrl.u32 %v3176, 7
    %v3178 = vsub.s32 0, %v3177
    %v3179 = vrot.slane %v1498, %v3178
    %v3180 = vlaneseq
    %v3181 = vshrl.u32 %v3180, 7
    %v3182 = vsub.s32 1, %v3181
    %v3183 = vrot.slane %v1498, %v3182
    %v3184 = vlaneseq
    %v3185 = vshrl.u32 %v3184, 7
    %v3186 = vsub.s32 2, %v3185
    %v3187 = vrot.slane %v1498, %v3186
    %v3188 = vlaneseq
    %v3189 = vshrl.u32 %v3188, 7
    %v3190 = vsub.s32 3, %v3189
    %v3191 = vrot.slane %v1498, %v3190
    %v3192 = vlaneseq
    %v3193 = vshrl.u32 %v3192, 7
    %v3194 = vsub.s32 4, %v3193
    %v3195 = vrot.slane %v1498, %v3194
    %v3196 = vlaneseq
    %v3197 = vshrl.u32 %v3196, 7
    %v3198 = vsub.s32 5, %v3197
    %v3199 = vrot.slane %v1498, %v3198
    %v3200 = vlaneseq
    %v3201 = vshrl.u32 %v3200, 7
    %v3202 = vsub.s32 6, %v3201
    %v3203 = vrot.slane %v1498, %v3202
    %v3204 = vlaneseq
    %v3205 = vshrl.u32 %v3204, 7
    %v3206 = vsub.s32 7, %v3205
    %v3207 = vrot.slane %v1498, %v3206
    %v3208 = vlaneseq
    %v3209 = vshrl.u32 %v3208, 7
    %v3210 = vsub.s32 0, %v3209
    %v3211 = vrot.slane %v1499, %v3210
    %v3212 = vlaneseq
    %v3213 = vshrl.u32 %v3212, 7
    %v3214 = vsub.s32 1, %v3213
    %v3215 = vrot.slane %v1499, %v3214
    %v3216 = vlaneseq
    %v3217 = vshrl.u32 %v3216, 7
    %v3218 = vsub.s32 2, %v3217
    %v3219 = vrot.slane %v1499, %v3218
    %v3220 = vlaneseq
    %v3221 = vshrl.u32 %v3220, 7
    %v3222 = vsub.s32 3, %v3221
    %v3223 = vrot.slane %v1499, %v3222
    %v3224 = vlaneseq
    %v3225 = vshrl.u32 %v3224, 7
    %v3226 = vsub.s32 4, %v3225
    %v3227 = vrot.slane %v1499, %v3226
    %v3228 = vlaneseq
    %v3229 = vshrl.u32 %v3228, 7
    %v3230 = vsub.s32 5, %v3229
    %v3231 = vrot.slane %v1499, %v3230
    %v3232 = vlaneseq
    %v3233 = vshrl.u32 %v3232, 7
    %v3234 = vsub.s32 6, %v3233
    %v3235 = vrot.slane %v1499, %v3234
    %v3236 = vlaneseq
    %v3237 = vshrl.u32 %v3236, 7
    %v3238 = vsub.s32 7, %v3237
    %v3239 = vrot.slane %v1499, %v3238
    %v3240 = vlaneseq
    %v3241 = vshrl.u32 %v3240, 7
    %v3242 = vsub.s32 0, %v3241
    %v3243 = vrot.slane %v1500, %v3242
    %v3244 = vlaneseq
    %v3245 = vshrl.u32 %v3244, 7
    %v3246 = vsub.s32 1, %v3245
    %v3247 = vrot.slane %v1500, %v3246
    %v3248 = vlaneseq
    %v3249 = vshrl.u32 %v3248, 7
    %v3250 = vsub.s32 2, %v3249
    %v3251 = vrot.slane %v1500, %v3250
    %v3252 = vlaneseq
    %v3253 = vshrl.u32 %v3252, 7
    %v3254 = vsub.s32 3, %v3253
    %v3255 = vrot.slane %v1500, %v3254
    %v3256 = vlaneseq
    %v3257 = vshrl.u32 %v3256, 7
    %v3258 = vsub.s32 4, %v3257
    %v3259 = vrot.slane %v1500, %v3258
    %v3260 = vlaneseq
    %v3261 = vshrl.u32 %v3260, 7
    %v3262 = vsub.s32 5, %v3261
    %v3263 = vrot.slane %v1500, %v3262
    %v3264 = vlaneseq
    %v3265 = vshrl.u32 %v3264, 7
    %v3266 = vsub.s32 6, %v3265
    %v3267 = vrot.slane %v1500, %v3266
    %v3268 = vlaneseq
    %v3269 = vshrl.u32 %v3268, 7
    %v3270 = vsub.s32 7, %v3269
    %v3271 = vrot.slane %v1500, %v3270
    %v3272 = vlaneseq
    %v3273 = vshrl.u32 %v3272, 7
    %v3274 = vsub.s32 0, %v3273
    %v3275 = vrot.slane %v1501, %v3274
    %v3276 = vlaneseq
    %v3277 = vshrl.u32 %v3276, 7
    %v3278 = vsub.s32 1, %v3277
    %v3279 = vrot.slane %v1501, %v3278
    %v3280 = vlaneseq
    %v3281 = vshrl.u32 %v3280, 7
    %v3282 = vsub.s32 2, %v3281
    %v3283 = vrot.slane %v1501, %v3282
    %v3284 = vlaneseq
    %v3285 = vshrl.u32 %v3284, 7
    %v3286 = vsub.s32 3, %v3285
    %v3287 = vrot.slane %v1501, %v3286
    %v3288 = vlaneseq
    %v3289 = vshrl.u32 %v3288, 7
    %v3290 = vsub.s32 4, %v3289
    %v3291 = vrot.slane %v1501, %v3290
    %v3292 = vlaneseq
    %v3293 = vshrl.u32 %v3292, 7
    %v3294 = vsub.s32 5, %v3293
    %v3295 = vrot.slane %v1501, %v3294
    %v3296 = vlaneseq
    %v3297 = vshrl.u32 %v3296, 7
    %v3298 = vsub.s32 6, %v3297
    %v3299 = vrot.slane %v1501, %v3298
    %v3300 = vlaneseq
    %v3301 = vshrl.u32 %v3300, 7
    %v3302 = vsub.s32 7, %v3301
    %v3303 = vrot.slane %v1501, %v3302
    %v3304 = vlaneseq
    %v3305 = vshrl.u32 %v3304, 7
    %v3306 = vsub.s32 0, %v3305
    %v3307 = vrot.slane %v1502, %v3306
    %v3308 = vlaneseq
    %v3309 = vshrl.u32 %v3308, 7
    %v3310 = vsub.s32 1, %v3309
    %v3311 = vrot.slane %v1502, %v3310
    %v3312 = vlaneseq
    %v3313 = vshrl.u32 %v3312, 7
    %v3314 = vsub.s32 2, %v3313
    %v3315 = vrot.slane %v1502, %v3314
    %v3316 = vlaneseq
    %v3317 = vshrl.u32 %v3316, 7
    %v3318 = vsub.s32 3, %v3317
    %v3319 = vrot.slane %v1502, %v3318
    %v3320 = vlaneseq
    %v3321 = vshrl.u32 %v3320, 7
    %v3322 = vsub.s32 4, %v3321
    %v3323 = vrot.slane %v1502, %v3322
    %v3324 = vlaneseq
    %v3325 = vshrl.u32 %v3324, 7
    %v3326 = vsub.s32 5, %v3325
    %v3327 = vrot.slane %v1502, %v3326
    %v3328 = vlaneseq
    %v3329 = vshrl.u32 %v3328, 7
    %v3330 = vsub.s32 6, %v3329
    %v3331 = vrot.slane %v1502, %v3330
    %v3332 = vlaneseq
    %v3333 = vshrl.u32 %v3332, 7
    %v3334 = vsub.s32 7, %v3333
    %v3335 = vrot.slane %v1502, %v3334
    %v3336 = vlaneseq
    %v3337 = vshrl.u32 %v3336, 7
    %v3338 = vsub.s32 0, %v3337
    %v3339 = vrot.slane %v1503, %v3338
    %v3340 = vlaneseq
    %v3341 = vshrl.u32 %v3340, 7
    %v3342 = vsub.s32 1, %v3341
    %v3343 = vrot.slane %v1503, %v3342
    %v3344 = vlaneseq
    %v3345 = vshrl.u32 %v3344, 7
    %v3346 = vsub.s32 2, %v3345
    %v3347 = vrot.slane %v1503, %v3346
    %v3348 = vlaneseq
    %v3349 = vshrl.u32 %v3348, 7
    %v3350 = vsub.s32 3, %v3349
    %v3351 = vrot.slane %v1503, %v3350
    %v3352 = vlaneseq
    %v3353 = vshrl.u32 %v3352, 7
    %v3354 = vsub.s32 4, %v3353
    %v3355 = vrot.slane %v1503, %v3354
    %v3356 = vlaneseq
    %v3357 = vshrl.u32 %v3356, 7
    %v3358 = vsub.s32 5, %v3357
    %v3359 = vrot.slane %v1503, %v3358
    %v3360 = vlaneseq
    %v3361 = vshrl.u32 %v3360, 7
    %v3362 = vsub.s32 6, %v3361
    %v3363 = vrot.slane %v1503, %v3362
    %v3364 = vlaneseq
    %v3365 = vshrl.u32 %v3364, 7
    %v3366 = vsub.s32 7, %v3365
    %v3367 = vrot.slane %v1503, %v3366
    %v3368 = vlaneseq
    %v3369 = vshrl.u32 %v3368, 7
    %v3370 = vsub.s32 0, %v3369
    %v3371 = vrot.slane %v1504, %v3370
    %v3372 = vlaneseq
    %v3373 = vshrl.u32 %v3372, 7
    %v3374 = vsub.s32 1, %v3373
    %v3375 = vrot.slane %v1504, %v3374
    %v3376 = vlaneseq
    %v3377 = vshrl.u32 %v3376, 7
    %v3378 = vsub.s32 2, %v3377
    %v3379 = vrot.slane %v1504, %v3378
    %v3380 = vlaneseq
    %v3381 = vshrl.u32 %v3380, 7
    %v3382 = vsub.s32 3, %v3381
    %v3383 = vrot.slane %v1504, %v3382
    %v3384 = vlaneseq
    %v3385 = vshrl.u32 %v3384, 7
    %v3386 = vsub.s32 4, %v3385
    %v3387 = vrot.slane %v1504, %v3386
    %v3388 = vlaneseq
    %v3389 = vshrl.u32 %v3388, 7
    %v3390 = vsub.s32 5, %v3389
    %v3391 = vrot.slane %v1504, %v3390
    %v3392 = vlaneseq
    %v3393 = vshrl.u32 %v3392, 7
    %v3394 = vsub.s32 6, %v3393
    %v3395 = vrot.slane %v1504, %v3394
    %v3396 = vlaneseq
    %v3397 = vshrl.u32 %v3396, 7
    %v3398 = vsub.s32 7, %v3397
    %v3399 = vrot.slane %v1504, %v3398
    %v3400 = vlaneseq
    %v3401 = vshrl.u32 %v3400, 7
    %v3402 = vsub.s32 0, %v3401
    %v3403 = vrot.slane %v1505, %v3402
    %v3404 = vlaneseq
    %v3405 = vshrl.u32 %v3404, 7
    %v3406 = vsub.s32 1, %v3405
    %v3407 = vrot.slane %v1505, %v3406
    %v3408 = vlaneseq
    %v3409 = vshrl.u32 %v3408, 7
    %v3410 = vsub.s32 2, %v3409
    %v3411 = vrot.slane %v1505, %v3410
    %v3412 = vlaneseq
    %v3413 = vshrl.u32 %v3412, 7
    %v3414 = vsub.s32 3, %v3413
    %v3415 = vrot.slane %v1505, %v3414
    %v3416 = vlaneseq
    %v3417 = vshrl.u32 %v3416, 7
    %v3418 = vsub.s32 4, %v3417
    %v3419 = vrot.slane %v1505, %v3418
    %v3420 = vlaneseq
    %v3421 = vshrl.u32 %v3420, 7
    %v3422 = vsub.s32 5, %v3421
    %v3423 = vrot.slane %v1505, %v3422
    %v3424 = vlaneseq
    %v3425 = vshrl.u32 %v3424, 7
    %v3426 = vsub.s32 6, %v3425
    %v3427 = vrot.slane %v1505, %v3426
    %v3428 = vlaneseq
    %v3429 = vshrl.u32 %v3428, 7
    %v3430 = vsub.s32 7, %v3429
    %v3431 = vrot.slane %v1505, %v3430
    %v3432 = vlaneseq
    %v3433 = vshrl.u32 %v3432, 7
    %v3434 = vsub.s32 0, %v3433
    %v3435 = vrot.slane %v1506, %v3434
    %v3436 = vlaneseq
    %v3437 = vshrl.u32 %v3436, 7
    %v3438 = vsub.s32 1, %v3437
    %v3439 = vrot.slane %v1506, %v3438
    %v3440 = vlaneseq
    %v3441 = vshrl.u32 %v3440, 7
    %v3442 = vsub.s32 2, %v3441
    %v3443 = vrot.slane %v1506, %v3442
    %v3444 = vlaneseq
    %v3445 = vshrl.u32 %v3444, 7
    %v3446 = vsub.s32 3, %v3445
    %v3447 = vrot.slane %v1506, %v3446
    %v3448 = vlaneseq
    %v3449 = vshrl.u32 %v3448, 7
    %v3450 = vsub.s32 4, %v3449
    %v3451 = vrot.slane %v1506, %v3450
    %v3452 = vlaneseq
    %v3453 = vshrl.u32 %v3452, 7
    %v3454 = vsub.s32 5, %v3453
    %v3455 = vrot.slane %v1506, %v3454
    %v3456 = vlaneseq
    %v3457 = vshrl.u32 %v3456, 7
    %v3458 = vsub.s32 6, %v3457
    %v3459 = vrot.slane %v1506, %v3458
    %v3460 = vlaneseq
    %v3461 = vshrl.u32 %v3460, 7
    %v3462 = vsub.s32 7, %v3461
    %v3463 = vrot.slane %v1506, %v3462
    %v3464 = vlaneseq
    %v3465 = vshrl.u32 %v3464, 7
    %v3466 = vsub.s32 0, %v3465
    %v3467 = vrot.slane %v1507, %v3466
    %v3468 = vlaneseq
    %v3469 = vshrl.u32 %v3468, 7
    %v3470 = vsub.s32 1, %v3469
    %v3471 = vrot.slane %v1507, %v3470
    %v3472 = vlaneseq
    %v3473 = vshrl.u32 %v3472, 7
    %v3474 = vsub.s32 2, %v3473
    %v3475 = vrot.slane %v1507, %v3474
    %v3476 = vlaneseq
    %v3477 = vshrl.u32 %v3476, 7
    %v3478 = vsub.s32 3, %v3477
    %v3479 = vrot.slane %v1507, %v3478
    %v3480 = vlaneseq
    %v3481 = vshrl.u32 %v3480, 7
    %v3482 = vsub.s32 4, %v3481
    %v3483 = vrot.slane %v1507, %v3482
    %v3484 = vlaneseq
    %v3485 = vshrl.u32 %v3484, 7
    %v3486 = vsub.s32 5, %v3485
    %v3487 = vrot.slane %v1507, %v3486
    %v3488 = vlaneseq
    %v3489 = vshrl.u32 %v3488, 7
    %v3490 = vsub.s32 6, %v3489
    %v3491 = vrot.slane %v1507, %v3490
    %v3492 = vlaneseq
    %v3493 = vshrl.u32 %v3492, 7
    %v3494 = vsub.s32 7, %v3493
    %v3495 = vrot.slane %v1507, %v3494
    %v3496 = vlaneseq
    %v3497 = vshrl.u32 %v3496, 7
    %v3498 = vsub.s32 0, %v3497
    %v3499 = vrot.slane %v1508, %v3498
    %v3500 = vlaneseq
    %v3501 = vshrl.u32 %v3500, 7
    %v3502 = vsub.s32 1, %v3501
    %v3503 = vrot.slane %v1508, %v3502
    %v3504 = vlaneseq
    %v3505 = vshrl.u32 %v3504, 7
    %v3506 = vsub.s32 2, %v3505
    %v3507 = vrot.slane %v1508, %v3506
    %v3508 = vlaneseq
    %v3509 = vshrl.u32 %v3508, 7
    %v3510 = vsub.s32 3, %v3509
    %v3511 = vrot.slane %v1508, %v3510
    %v3512 = vlaneseq
    %v3513 = vshrl.u32 %v3512, 7
    %v3514 = vsub.s32 4, %v3513
    %v3515 = vrot.slane %v1508, %v3514
    %v3516 = vlaneseq
    %v3517 = vshrl.u32 %v3516, 7
    %v3518 = vsub.s32 5, %v3517
    %v3519 = vrot.slane %v1508, %v3518
    %v3520 = vlaneseq
    %v3521 = vshrl.u32 %v3520, 7
    %v3522 = vsub.s32 6, %v3521
    %v3523 = vrot.slane %v1508, %v3522
    %v3524 = vlaneseq
    %v3525 = vshrl.u32 %v3524, 7
    %v3526 = vsub.s32 7, %v3525
    %v3527 = vrot.slane %v1508, %v3526
    %v3528 = vlaneseq
    %v3529 = vshrl.u32 %v3528, 7
    %v3530 = vsub.s32 0, %v3529
    %v3531 = vrot.slane %v1509, %v3530
    %v3532 = vlaneseq
    %v3533 = vshrl.u32 %v3532, 7
    %v3534 = vsub.s32 1, %v3533
    %v3535 = vrot.slane %v1509, %v3534
    %v3536 = vlaneseq
    %v3537 = vshrl.u32 %v3536, 7
    %v3538 = vsub.s32 2, %v3537
    %v3539 = vrot.slane %v1509, %v3538
    %v3540 = vlaneseq
    %v3541 = vshrl.u32 %v3540, 7
    %v3542 = vsub.s32 3, %v3541
    %v3543 = vrot.slane %v1509, %v3542
    %v3544 = vlaneseq
    %v3545 = vshrl.u32 %v3544, 7
    %v3546 = vsub.s32 4, %v3545
    %v3547 = vrot.slane %v1509, %v3546
    %v3548 = vlaneseq
    %v3549 = vshrl.u32 %v3548, 7
    %v3550 = vsub.s32 5, %v3549
    %v3551 = vrot.slane %v1509, %v3550
    %v3552 = vlaneseq
    %v3553 = vshrl.u32 %v3552, 7
    %v3554 = vsub.s32 6, %v3553
    %v3555 = vrot.slane %v1509, %v3554
    %v3556 = vlaneseq
    %v3557 = vshrl.u32 %v3556, 7
    %v3558 = vsub.s32 7, %v3557
    %v3559 = vrot.slane %v1509, %v3558
    %v3560 = vlaneseq
    %v3561 = vshrl.u32 %v3560, 7
    %v3562 = vsub.s32 0, %v3561
    %v3563 = vrot.slane %v1510, %v3562
    %v3564 = vlaneseq
    %v3565 = vshrl.u32 %v3564, 7
    %v3566 = vsub.s32 1, %v3565
    %v3567 = vrot.slane %v1510, %v3566
    %v3568 = vlaneseq
    %v3569 = vshrl.u32 %v3568, 7
    %v3570 = vsub.s32 2, %v3569
    %v3571 = vrot.slane %v1510, %v3570
    %v3572 = vlaneseq
    %v3573 = vshrl.u32 %v3572, 7
    %v3574 = vsub.s32 3, %v3573
    %v3575 = vrot.slane %v1510, %v3574
    %v3576 = vlaneseq
    %v3577 = vshrl.u32 %v3576, 7
    %v3578 = vsub.s32 4, %v3577
    %v3579 = vrot.slane %v1510, %v3578
    %v3580 = vlaneseq
    %v3581 = vshrl.u32 %v3580, 7
    %v3582 = vsub.s32 5, %v3581
    %v3583 = vrot.slane %v1510, %v3582
    %v3584 = vlaneseq
    %v3585 = vshrl.u32 %v3584, 7
    %v3586 = vsub.s32 6, %v3585
    %v3587 = vrot.slane %v1510, %v3586
    %v3588 = vlaneseq
    %v3589 = vshrl.u32 %v3588, 7
    %v3590 = vsub.s32 7, %v3589
    %v3591 = vrot.slane %v1510, %v3590
    %v3592 = vlaneseq
    %v3593 = vshrl.u32 %v3592, 7
    %v3594 = vsub.s32 0, %v3593
    %v3595 = vrot.slane %v1511, %v3594
    %v3596 = vlaneseq
    %v3597 = vshrl.u32 %v3596, 7
    %v3598 = vsub.s32 1, %v3597
    %v3599 = vrot.slane %v1511, %v3598
    %v3600 = vlaneseq
    %v3601 = vshrl.u32 %v3600, 7
    %v3602 = vsub.s32 2, %v3601
    %v3603 = vrot.slane %v1511, %v3602
    %v3604 = vlaneseq
    %v3605 = vshrl.u32 %v3604, 7
    %v3606 = vsub.s32 3, %v3605
    %v3607 = vrot.slane %v1511, %v3606
    %v3608 = vlaneseq
    %v3609 = vshrl.u32 %v3608, 7
    %v3610 = vsub.s32 4, %v3609
    %v3611 = vrot.slane %v1511, %v3610
    %v3612 = vlaneseq
    %v3613 = vshrl.u32 %v3612, 7
    %v3614 = vsub.s32 5, %v3613
    %v3615 = vrot.slane %v1511, %v3614
    %v3616 = vlaneseq
    %v3617 = vshrl.u32 %v3616, 7
    %v3618 = vsub.s32 6, %v3617
    %v3619 = vrot.slane %v1511, %v3618
    %v3620 = vlaneseq
    %v3621 = vshrl.u32 %v3620, 7
    %v3622 = vsub.s32 7, %v3621
    %v3623 = vrot.slane %v1511, %v3622
    %v3624 = vcombine.low %v1579, %v1583
    %v3625 = vcombine.low %v1587, %v1591
    %v3626 = vcombine.low %v1595, %v1599
    %v3627 = vcombine.low %v1603, %v1607
    %v3629 = vunpack.c.l.s4 1966171168
    %v3630 = vunpack.c.0.s8 %v3629
    %v3631 = vlaneseq
    %v3632 = vshrl.u32 %v3631, 7
    %v3633 = vsub.s32 %v3630, %v3632
    %v3634 = vrot.slane %v3624, %v3633
    %v3636 = vunpack.c.l.s4 1966171168
    %v3637 = vunpack.c.0.s8 %v3636
    %v3638 = vlaneseq
    %v3639 = vshrl.u32 %v3638, 7
    %v3640 = vsub.s32 %v3637, %v3639
    %v3641 = vrot.slane %v3625, %v3640
    %v3643 = vunpack.c.l.s4 1966171168
    %v3644 = vunpack.c.0.s8 %v3643
    %v3645 = vlaneseq
    %v3646 = vshrl.u32 %v3645, 7
    %v3647 = vsub.s32 %v3644, %v3646
    %v3648 = vrot.slane %v3626, %v3647
    %v3650 = vunpack.c.l.s4 1966171168
    %v3651 = vunpack.c.0.s8 %v3650
    %v3652 = vlaneseq
    %v3653 = vshrl.u32 %v3652, 7
    %v3654 = vsub.s32 %v3651, %v3653
    %v3655 = vrot.slane %v3627, %v3654
    %v3656 = vcombine.low %v3634, %v3641
    %v3657 = vcombine.low %v3648, %v3655
    %v3659 = vunpack.c.l.s4 1966171168
    %v3660 = vunpack.c.0.s8 %v3659
    %v3661 = vlaneseq
    %v3662 = vshrl.u32 %v3661, 7
    %v3663 = vsub.s32 %v3660, %v3662
    %v3664 = vrot.slane %v3656, %v3663
    %v3666 = vunpack.c.l.s4 1966171168
    %v3667 = vunpack.c.0.s8 %v3666
    %v3668 = vlaneseq
    %v3669 = vshrl.u32 %v3668, 7
    %v3670 = vsub.s32 %v3667, %v3669
    %v3671 = vrot.slane %v3657, %v3670
    %v3672 = vcombine.low %v3664, %v3671
    %v3673 = vcombine.low %v1611, %v1615
    %v3674 = vcombine.low %v1619, %v1623
    %v3675 = vcombine.low %v1627, %v1631
    %v3676 = vcombine.low %v1635, %v1639
    %v3678 = vunpack.c.l.s4 1966171168
    %v3679 = vunpack.c.0.s8 %v3678
    %v3680 = vlaneseq
    %v3681 = vshrl.u32 %v3680, 7
    %v3682 = vsub.s32 %v3679, %v3681
    %v3683 = vrot.slane %v3673, %v3682
    %v3685 = vunpack.c.l.s4 1966171168
    %v3686 = vunpack.c.0.s8 %v3685
    %v3687 = vlaneseq
    %v3688 = vshrl.u32 %v3687, 7
    %v3689 = vsub.s32 %v3686, %v3688
    %v3690 = vrot.slane %v3674, %v3689
    %v3692 = vunpack.c.l.s4 1966171168
    %v3693 = vunpack.c.0.s8 %v3692
    %v3694 = vlaneseq
    %v3695 = vshrl.u32 %v3694, 7
    %v3696 = vsub.s32 %v3693, %v3695
    %v3697 = vrot.slane %v3675, %v3696
    %v3699 = vunpack.c.l.s4 1966171168
    %v3700 = vunpack.c.0.s8 %v3699
    %v3701 = vlaneseq
    %v3702 = vshrl.u32 %v3701, 7
    %v3703 = vsub.s32 %v3700, %v3702
    %v3704 = vrot.slane %v3676, %v3703
    %v3705 = vcombine.low %v3683, %v3690
    %v3706 = vcombine.low %v3697, %v3704
    %v3708 = vunpack.c.l.s4 1966171168
    %v3709 = vunpack.c.0.s8 %v3708
    %v3710 = vlaneseq
    %v3711 = vshrl.u32 %v3710, 7
    %v3712 = vsub.s32 %v3709, %v3711
    %v3713 = vrot.slane %v3705, %v3712
    %v3715 = vunpack.c.l.s4 1966171168
    %v3716 = vunpack.c.0.s8 %v3715
    %v3717 = vlaneseq
    %v3718 = vshrl.u32 %v3717, 7
    %v3719 = vsub.s32 %v3716, %v3718
    %v3720 = vrot.slane %v3706, %v3719
    %v3721 = vcombine.low %v3713, %v3720
    %v3722 = vcombine.low %v1643, %v1647
    %v3723 = vcombine.low %v1651, %v1655
    %v3724 = vcombine.low %v1659, %v1663
    %v3725 = vcombine.low %v1667, %v1671
    %v3727 = vunpack.c.l.s4 1966171168
    %v3728 = vunpack.c.0.s8 %v3727
    %v3729 = vlaneseq
    %v3730 = vshrl.u32 %v3729, 7
    %v3731 = vsub.s32 %v3728, %v3730
    %v3732 = vrot.slane %v3722, %v3731
    %v3734 = vunpack.c.l.s4 1966171168
    %v3735 = vunpack.c.0.s8 %v3734
    %v3736 = vlaneseq
    %v3737 = vshrl.u32 %v3736, 7
    %v3738 = vsub.s32 %v3735, %v3737
    %v3739 = vrot.slane %v3723, %v3738
    %v3741 = vunpack.c.l.s4 1966171168
    %v3742 = vunpack.c.0.s8 %v3741
    %v3743 = vlaneseq
    %v3744 = vshrl.u32 %v3743, 7
    %v3745 = vsub.s32 %v3742, %v3744
    %v3746 = vrot.slane %v3724, %v3745
    %v3748 = vunpack.c.l.s4 1966171168
    %v3749 = vunpack.c.0.s8 %v3748
    %v3750 = vlaneseq
    %v3751 = vshrl.u32 %v3750, 7
    %v3752 = vsub.s32 %v3749, %v3751
    %v3753 = vrot.slane %v3725, %v3752
    %v3754 = vcombine.low %v3732, %v3739
    %v3755 = vcombine.low %v3746, %v3753
    %v3757 = vunpack.c.l.s4 1966171168
    %v3758 = vunpack.c.0.s8 %v3757
    %v3759 = vlaneseq
    %v3760 = vshrl.u32 %v3759, 7
    %v3761 = vsub.s32 %v3758, %v3760
    %v3762 = vrot.slane %v3754, %v3761
    %v3764 = vunpack.c.l.s4 1966171168
    %v3765 = vunpack.c.0.s8 %v3764
    %v3766 = vlaneseq
    %v3767 = vshrl.u32 %v3766, 7
    %v3768 = vsub.s32 %v3765, %v3767
    %v3769 = vrot.slane %v3755, %v3768
    %v3770 = vcombine.low %v3762, %v3769
    %v3771 = vcombine.low %v1675, %v1679
    %v3772 = vcombine.low %v1683, %v1687
    %v3773 = vcombine.low %v1691, %v1695
    %v3774 = vcombine.low %v1699, %v1703
    %v3776 = vunpack.c.l.s4 1966171168
    %v3777 = vunpack.c.0.s8 %v3776
    %v3778 = vlaneseq
    %v3779 = vshrl.u32 %v3778, 7
    %v3780 = vsub.s32 %v3777, %v3779
    %v3781 = vrot.slane %v3771, %v3780
    %v3783 = vunpack.c.l.s4 1966171168
    %v3784 = vunpack.c.0.s8 %v3783
    %v3785 = vlaneseq
    %v3786 = vshrl.u32 %v3785, 7
    %v3787 = vsub.s32 %v3784, %v3786
    %v3788 = vrot.slane %v3772, %v3787
    %v3790 = vunpack.c.l.s4 1966171168
    %v3791 = vunpack.c.0.s8 %v3790
    %v3792 = vlaneseq
    %v3793 = vshrl.u32 %v3792, 7
    %v3794 = vsub.s32 %v3791, %v3793
    %v3795 = vrot.slane %v3773, %v3794
    %v3797 = vunpack.c.l.s4 1966171168
    %v3798 = vunpack.c.0.s8 %v3797
    %v3799 = vlaneseq
    %v3800 = vshrl.u32 %v3799, 7
    %v3801 = vsub.s32 %v3798, %v3800
    %v3802 = vrot.slane %v3774, %v3801
    %v3803 = vcombine.low %v3781, %v3788
    %v3804 = vcombine.low %v3795, %v3802
    %v3806 = vunpack.c.l.s4 1966171168
    %v3807 = vunpack.c.0.s8 %v3806
    %v3808 = vlaneseq
    %v3809 = vshrl.u32 %v3808, 7
    %v3810 = vsub.s32 %v3807, %v3809
    %v3811 = vrot.slane %v3803, %v3810
    %v3813 = vunpack.c.l.s4 1966171168
    %v3814 = vunpack.c.0.s8 %v3813
    %v3815 = vlaneseq
    %v3816 = vshrl.u32 %v3815, 7
    %v3817 = vsub.s32 %v3814, %v3816
    %v3818 = vrot.slane %v3804, %v3817
    %v3819 = vcombine.low %v3811, %v3818
    %v3820 = vcombine.low %v1707, %v1711
    %v3821 = vcombine.low %v1715, %v1719
    %v3822 = vcombine.low %v1723, %v1727
    %v3823 = vcombine.low %v1731, %v1735
    %v3825 = vunpack.c.l.s4 1966171168
    %v3826 = vunpack.c.0.s8 %v3825
    %v3827 = vlaneseq
    %v3828 = vshrl.u32 %v3827, 7
    %v3829 = vsub.s32 %v3826, %v3828
    %v3830 = vrot.slane %v3820, %v3829
    %v3832 = vunpack.c.l.s4 1966171168
    %v3833 = vunpack.c.0.s8 %v3832
    %v3834 = vlaneseq
    %v3835 = vshrl.u32 %v3834, 7
    %v3836 = vsub.s32 %v3833, %v3835
    %v3837 = vrot.slane %v3821, %v3836
    %v3839 = vunpack.c.l.s4 1966171168
    %v3840 = vunpack.c.0.s8 %v3839
    %v3841 = vlaneseq
    %v3842 = vshrl.u32 %v3841, 7
    %v3843 = vsub.s32 %v3840, %v3842
    %v3844 = vrot.slane %v3822, %v3843
    %v3846 = vunpack.c.l.s4 1966171168
    %v3847 = vunpack.c.0.s8 %v3846
    %v3848 = vlaneseq
    %v3849 = vshrl.u32 %v3848, 7
    %v3850 = vsub.s32 %v3847, %v3849
    %v3851 = vrot.slane %v3823, %v3850
    %v3852 = vcombine.low %v3830, %v3837
    %v3853 = vcombine.low %v3844, %v3851
    %v3855 = vunpack.c.l.s4 1966171168
    %v3856 = vunpack.c.0.s8 %v3855
    %v3857 = vlaneseq
    %v3858 = vshrl.u32 %v3857, 7
    %v3859 = vsub.s32 %v3856, %v3858
    %v3860 = vrot.slane %v3852, %v3859
    %v3862 = vunpack.c.l.s4 1966171168
    %v3863 = vunpack.c.0.s8 %v3862
    %v3864 = vlaneseq
    %v3865 = vshrl.u32 %v3864, 7
    %v3866 = vsub.s32 %v3863, %v3865
    %v3867 = vrot.slane %v3853, %v3866
    %v3868 = vcombine.low %v3860, %v3867
    %v3869 = vcombine.low %v1739, %v1743
    %v3870 = vcombine.low %v1747, %v1751
    %v3871 = vcombine.low %v1755, %v1759
    %v3872 = vcombine.low %v1763, %v1767
    %v3874 = vunpack.c.l.s4 1966171168
    %v3875 = vunpack.c.0.s8 %v3874
    %v3876 = vlaneseq
    %v3877 = vshrl.u32 %v3876, 7
    %v3878 = vsub.s32 %v3875, %v3877
    %v3879 = vrot.slane %v3869, %v3878
    %v3881 = vunpack.c.l.s4 1966171168
    %v3882 = vunpack.c.0.s8 %v3881
    %v3883 = vlaneseq
    %v3884 = vshrl.u32 %v3883, 7
    %v3885 = vsub.s32 %v3882, %v3884
    %v3886 = vrot.slane %v3870, %v3885
    %v3888 = vunpack.c.l.s4 1966171168
    %v3889 = vunpack.c.0.s8 %v3888
    %v3890 = vlaneseq
    %v3891 = vshrl.u32 %v3890, 7
    %v3892 = vsub.s32 %v3889, %v3891
    %v3893 = vrot.slane %v3871, %v3892
    %v3895 = vunpack.c.l.s4 1966171168
    %v3896 = vunpack.c.0.s8 %v3895
    %v3897 = vlaneseq
    %v3898 = vshrl.u32 %v3897, 7
    %v3899 = vsub.s32 %v3896, %v3898
    %v3900 = vrot.slane %v3872, %v3899
    %v3901 = vcombine.low %v3879, %v3886
    %v3902 = vcombine.low %v3893, %v3900
    %v3904 = vunpack.c.l.s4 1966171168
    %v3905 = vunpack.c.0.s8 %v3904
    %v3906 = vlaneseq
    %v3907 = vshrl.u32 %v3906, 7
    %v3908 = vsub.s32 %v3905, %v3907
    %v3909 = vrot.slane %v3901, %v3908
    %v3911 = vunpack.c.l.s4 1966171168
    %v3912 = vunpack.c.0.s8 %v3911
    %v3913 = vlaneseq
    %v3914 = vshrl.u32 %v3913, 7
    %v3915 = vsub.s32 %v3912, %v3914
    %v3916 = vrot.slane %v3902, %v3915
    %v3917 = vcombine.low %v3909, %v3916
    %v3918 = vcombine.low %v1771, %v1775
    %v3919 = vcombine.low %v1779, %v1783
    %v3920 = vcombine.low %v1787, %v1791
    %v3921 = vcombine.low %v1795, %v1799
    %v3923 = vunpack.c.l.s4 1966171168
    %v3924 = vunpack.c.0.s8 %v3923
    %v3925 = vlaneseq
    %v3926 = vshrl.u32 %v3925, 7
    %v3927 = vsub.s32 %v3924, %v3926
    %v3928 = vrot.slane %v3918, %v3927
    %v3930 = vunpack.c.l.s4 1966171168
    %v3931 = vunpack.c.0.s8 %v3930
    %v3932 = vlaneseq
    %v3933 = vshrl.u32 %v3932, 7
    %v3934 = vsub.s32 %v3931, %v3933
    %v3935 = vrot.slane %v3919, %v3934
    %v3937 = vunpack.c.l.s4 1966171168
    %v3938 = vunpack.c.0.s8 %v3937
    %v3939 = vlaneseq
    %v3940 = vshrl.u32 %v3939, 7
    %v3941 = vsub.s32 %v3938, %v3940
    %v3942 = vrot.slane %v3920, %v3941
    %v3944 = vunpack.c.l.s4 1966171168
    %v3945 = vunpack.c.0.s8 %v3944
    %v3946 = vlaneseq
    %v3947 = vshrl.u32 %v3946, 7
    %v3948 = vsub.s32 %v3945, %v3947
    %v3949 = vrot.slane %v3921, %v3948
    %v3950 = vcombine.low %v3928, %v3935
    %v3951 = vcombine.low %v3942, %v3949
    %v3953 = vunpack.c.l.s4 1966171168
    %v3954 = vunpack.c.0.s8 %v3953
    %v3955 = vlaneseq
    %v3956 = vshrl.u32 %v3955, 7
    %v3957 = vsub.s32 %v3954, %v3956
    %v3958 = vrot.slane %v3950, %v3957
    %v3960 = vunpack.c.l.s4 1966171168
    %v3961 = vunpack.c.0.s8 %v3960
    %v3962 = vlaneseq
    %v3963 = vshrl.u32 %v3962, 7
    %v3964 = vsub.s32 %v3961, %v3963
    %v3965 = vrot.slane %v3951, %v3964
    %v3966 = vcombine.low %v3958, %v3965
    %v3967 = vcombine.low %v1803, %v1807
    %v3968 = vcombine.low %v1811, %v1815
    %v3969 = vcombine.low %v1819, %v1823
    %v3970 = vcombine.low %v1827, %v1831
    %v3972 = vunpack.c.l.s4 1966171168
    %v3973 = vunpack.c.0.s8 %v3972
    %v3974 = vlaneseq
    %v3975 = vshrl.u32 %v3974, 7
    %v3976 = vsub.s32 %v3973, %v3975
    %v3977 = vrot.slane %v3967, %v3976
    %v3979 = vunpack.c.l.s4 1966171168
    %v3980 = vunpack.c.0.s8 %v3979
    %v3981 = vlaneseq
    %v3982 = vshrl.u32 %v3981, 7
    %v3983 = vsub.s32 %v3980, %v3982
    %v3984 = vrot.slane %v3968, %v3983
    %v3986 = vunpack.c.l.s4 1966171168
    %v3987 = vunpack.c.0.s8 %v3986
    %v3988 = vlaneseq
    %v3989 = vshrl.u32 %v3988, 7
    %v3990 = vsub.s32 %v3987, %v3989
    %v3991 = vrot.slane %v3969, %v3990
    %v3993 = vunpack.c.l.s4 1966171168
    %v3994 = vunpack.c.0.s8 %v3993
    %v3995 = vlaneseq
    %v3996 = vshrl.u32 %v3995, 7
    %v3997 = vsub.s32 %v3994, %v3996
    %v3998 = vrot.slane %v3970, %v3997
    %v3999 = vcombine.low %v3977, %v3984
    %v4000 = vcombine.low %v3991, %v3998
    %v4002 = vunpack.c.l.s4 1966171168
    %v4003 = vunpack.c.0.s8 %v4002
    %v4004 = vlaneseq
    %v4005 = vshrl.u32 %v4004, 7
    %v4006 = vsub.s32 %v4003, %v4005
    %v4007 = vrot.slane %v3999, %v4006
    %v4009 = vunpack.c.l.s4 1966171168
    %v4010 = vunpack.c.0.s8 %v4009
    %v4011 = vlaneseq
    %v4012 = vshrl.u32 %v4011, 7
    %v4013 = vsub.s32 %v4010, %v4012
    %v4014 = vrot.slane %v4000, %v4013
    %v4015 = vcombine.low %v4007, %v4014
    %v4016 = vcombine.low %v1835, %v1839
    %v4017 = vcombine.low %v1843, %v1847
    %v4018 = vcombine.low %v1851, %v1855
    %v4019 = vcombine.low %v1859, %v1863
    %v4021 = vunpack.c.l.s4 1966171168
    %v4022 = vunpack.c.0.s8 %v4021
    %v4023 = vlaneseq
    %v4024 = vshrl.u32 %v4023, 7
    %v4025 = vsub.s32 %v4022, %v4024
    %v4026 = vrot.slane %v4016, %v4025
    %v4028 = vunpack.c.l.s4 1966171168
    %v4029 = vunpack.c.0.s8 %v4028
    %v4030 = vlaneseq
    %v4031 = vshrl.u32 %v4030, 7
    %v4032 = vsub.s32 %v4029, %v4031
    %v4033 = vrot.slane %v4017, %v4032
    %v4035 = vunpack.c.l.s4 1966171168
    %v4036 = vunpack.c.0.s8 %v4035
    %v4037 = vlaneseq
    %v4038 = vshrl.u32 %v4037, 7
    %v4039 = vsub.s32 %v4036, %v4038
    %v4040 = vrot.slane %v4018, %v4039
    %v4042 = vunpack.c.l.s4 1966171168
    %v4043 = vunpack.c.0.s8 %v4042
    %v4044 = vlaneseq
    %v4045 = vshrl.u32 %v4044, 7
    %v4046 = vsub.s32 %v4043, %v4045
    %v4047 = vrot.slane %v4019, %v4046
    %v4048 = vcombine.low %v4026, %v4033
    %v4049 = vcombine.low %v4040, %v4047
    %v4051 = vunpack.c.l.s4 1966171168
    %v4052 = vunpack.c.0.s8 %v4051
    %v4053 = vlaneseq
    %v4054 = vshrl.u32 %v4053, 7
    %v4055 = vsub.s32 %v4052, %v4054
    %v4056 = vrot.slane %v4048, %v4055
    %v4058 = vunpack.c.l.s4 1966171168
    %v4059 = vunpack.c.0.s8 %v4058
    %v4060 = vlaneseq
    %v4061 = vshrl.u32 %v4060, 7
    %v4062 = vsub.s32 %v4059, %v4061
    %v4063 = vrot.slane %v4049, %v4062
    %v4064 = vcombine.low %v4056, %v4063
    %v4065 = vcombine.low %v1867, %v1871
    %v4066 = vcombine.low %v1875, %v1879
    %v4067 = vcombine.low %v1883, %v1887
    %v4068 = vcombine.low %v1891, %v1895
    %v4070 = vunpack.c.l.s4 1966171168
    %v4071 = vunpack.c.0.s8 %v4070
    %v4072 = vlaneseq
    %v4073 = vshrl.u32 %v4072, 7
    %v4074 = vsub.s32 %v4071, %v4073
    %v4075 = vrot.slane %v4065, %v4074
    %v4077 = vunpack.c.l.s4 1966171168
    %v4078 = vunpack.c.0.s8 %v4077
    %v4079 = vlaneseq
    %v4080 = vshrl.u32 %v4079, 7
    %v4081 = vsub.s32 %v4078, %v4080
    %v4082 = vrot.slane %v4066, %v4081
    %v4084 = vunpack.c.l.s4 1966171168
    %v4085 = vunpack.c.0.s8 %v4084
    %v4086 = vlaneseq
    %v4087 = vshrl.u32 %v4086, 7
    %v4088 = vsub.s32 %v4085, %v4087
    %v4089 = vrot.slane %v4067, %v4088
    %v4091 = vunpack.c.l.s4 1966171168
    %v4092 = vunpack.c.0.s8 %v4091
    %v4093 = vlaneseq
    %v4094 = vshrl.u32 %v4093, 7
    %v4095 = vsub.s32 %v4092, %v4094
    %v4096 = vrot.slane %v4068, %v4095
    %v4097 = vcombine.low %v4075, %v4082
    %v4098 = vcombine.low %v4089, %v4096
    %v4100 = vunpack.c.l.s4 1966171168
    %v4101 = vunpack.c.0.s8 %v4100
    %v4102 = vlaneseq
    %v4103 = vshrl.u32 %v4102, 7
    %v4104 = vsub.s32 %v4101, %v4103
    %v4105 = vrot.slane %v4097, %v4104
    %v4107 = vunpack.c.l.s4 1966171168
    %v4108 = vunpack.c.0.s8 %v4107
    %v4109 = vlaneseq
    %v4110 = vshrl.u32 %v4109, 7
    %v4111 = vsub.s32 %v4108, %v4110
    %v4112 = vrot.slane %v4098, %v4111
    %v4113 = vcombine.low %v4105, %v4112
    %v4114 = vcombine.low %v1899, %v1903
    %v4115 = vcombine.low %v1907, %v1911
    %v4116 = vcombine.low %v1915, %v1919
    %v4117 = vcombine.low %v1923, %v1927
    %v4119 = vunpack.c.l.s4 1966171168
    %v4120 = vunpack.c.0.s8 %v4119
    %v4121 = vlaneseq
    %v4122 = vshrl.u32 %v4121, 7
    %v4123 = vsub.s32 %v4120, %v4122
    %v4124 = vrot.slane %v4114, %v4123
    %v4126 = vunpack.c.l.s4 1966171168
    %v4127 = vunpack.c.0.s8 %v4126
    %v4128 = vlaneseq
    %v4129 = vshrl.u32 %v4128, 7
    %v4130 = vsub.s32 %v4127, %v4129
    %v4131 = vrot.slane %v4115, %v4130
    %v4133 = vunpack.c.l.s4 1966171168
    %v4134 = vunpack.c.0.s8 %v4133
    %v4135 = vlaneseq
    %v4136 = vshrl.u32 %v4135, 7
    %v4137 = vsub.s32 %v4134, %v4136
    %v4138 = vrot.slane %v4116, %v4137
    %v4140 = vunpack.c.l.s4 1966171168
    %v4141 = vunpack.c.0.s8 %v4140
    %v4142 = vlaneseq
    %v4143 = vshrl.u32 %v4142, 7
    %v4144 = vsub.s32 %v4141, %v4143
    %v4145 = vrot.slane %v4117, %v4144
    %v4146 = vcombine.low %v4124, %v4131
    %v4147 = vcombine.low %v4138, %v4145
    %v4149 = vunpack.c.l.s4 1966171168
    %v4150 = vunpack.c.0.s8 %v4149
    %v4151 = vlaneseq
    %v4152 = vshrl.u32 %v4151, 7
    %v4153 = vsub.s32 %v4150, %v4152
    %v4154 = vrot.slane %v4146, %v4153
    %v4156 = vunpack.c.l.s4 1966171168
    %v4157 = vunpack.c.0.s8 %v4156
    %v4158 = vlaneseq
    %v4159 = vshrl.u32 %v4158, 7
    %v4160 = vsub.s32 %v4157, %v4159
    %v4161 = vrot.slane %v4147, %v4160
    %v4162 = vcombine.low %v4154, %v4161
    %v4163 = vcombine.low %v1931, %v1935
    %v4164 = vcombine.low %v1939, %v1943
    %v4165 = vcombine.low %v1947, %v1951
    %v4166 = vcombine.low %v1955, %v1959
    %v4168 = vunpack.c.l.s4 1966171168
    %v4169 = vunpack.c.0.s8 %v4168
    %v4170 = vlaneseq
    %v4171 = vshrl.u32 %v4170, 7
    %v4172 = vsub.s32 %v4169, %v4171
    %v4173 = vrot.slane %v4163, %v4172
    %v4175 = vunpack.c.l.s4 1966171168
    %v4176 = vunpack.c.0.s8 %v4175
    %v4177 = vlaneseq
    %v4178 = vshrl.u32 %v4177, 7
    %v4179 = vsub.s32 %v4176, %v4178
    %v4180 = vrot.slane %v4164, %v4179
    %v4182 = vunpack.c.l.s4 1966171168
    %v4183 = vunpack.c.0.s8 %v4182
    %v4184 = vlaneseq
    %v4185 = vshrl.u32 %v4184, 7
    %v4186 = vsub.s32 %v4183, %v4185
    %v4187 = vrot.slane %v4165, %v4186
    %v4189 = vunpack.c.l.s4 1966171168
    %v4190 = vunpack.c.0.s8 %v4189
    %v4191 = vlaneseq
    %v4192 = vshrl.u32 %v4191, 7
    %v4193 = vsub.s32 %v4190, %v4192
    %v4194 = vrot.slane %v4166, %v4193
    %v4195 = vcombine.low %v4173, %v4180
    %v4196 = vcombine.low %v4187, %v4194
    %v4198 = vunpack.c.l.s4 1966171168
    %v4199 = vunpack.c.0.s8 %v4198
    %v4200 = vlaneseq
    %v4201 = vshrl.u32 %v4200, 7
    %v4202 = vsub.s32 %v4199, %v4201
    %v4203 = vrot.slane %v4195, %v4202
    %v4205 = vunpack.c.l.s4 1966171168
    %v4206 = vunpack.c.0.s8 %v4205
    %v4207 = vlaneseq
    %v4208 = vshrl.u32 %v4207, 7
    %v4209 = vsub.s32 %v4206, %v4208
    %v4210 = vrot.slane %v4196, %v4209
    %v4211 = vcombine.low %v4203, %v4210
    %v4212 = vcombine.low %v1963, %v1967
    %v4213 = vcombine.low %v1971, %v1975
    %v4214 = vcombine.low %v1979, %v1983
    %v4215 = vcombine.low %v1987, %v1991
    %v4217 = vunpack.c.l.s4 1966171168
    %v4218 = vunpack.c.0.s8 %v4217
    %v4219 = vlaneseq
    %v4220 = vshrl.u32 %v4219, 7
    %v4221 = vsub.s32 %v4218, %v4220
    %v4222 = vrot.slane %v4212, %v4221
    %v4224 = vunpack.c.l.s4 1966171168
    %v4225 = vunpack.c.0.s8 %v4224
    %v4226 = vlaneseq
    %v4227 = vshrl.u32 %v4226, 7
    %v4228 = vsub.s32 %v4225, %v4227
    %v4229 = vrot.slane %v4213, %v4228
    %v4231 = vunpack.c.l.s4 1966171168
    %v4232 = vunpack.c.0.s8 %v4231
    %v4233 = vlaneseq
    %v4234 = vshrl.u32 %v4233, 7
    %v4235 = vsub.s32 %v4232, %v4234
    %v4236 = vrot.slane %v4214, %v4235
    %v4238 = vunpack.c.l.s4 1966171168
    %v4239 = vunpack.c.0.s8 %v4238
    %v4240 = vlaneseq
    %v4241 = vshrl.u32 %v4240, 7
    %v4242 = vsub.s32 %v4239, %v4241
    %v4243 = vrot.slane %v4215, %v4242
    %v4244 = vcombine.low %v4222, %v4229
    %v4245 = vcombine.low %v4236, %v4243
    %v4247 = vunpack.c.l.s4 1966171168
    %v4248 = vunpack.c.0.s8 %v4247
    %v4249 = vlaneseq
    %v4250 = vshrl.u32 %v4249, 7
    %v4251 = vsub.s32 %v4248, %v4250
    %v4252 = vrot.slane %v4244, %v4251
    %v4254 = vunpack.c.l.s4 1966171168
    %v4255 = vunpack.c.0.s8 %v4254
    %v4256 = vlaneseq
    %v4257 = vshrl.u32 %v4256, 7
    %v4258 = vsub.s32 %v4255, %v4257
    %v4259 = vrot.slane %v4245, %v4258
    %v4260 = vcombine.low %v4252, %v4259
    %v4261 = vcombine.low %v1995, %v1999
    %v4262 = vcombine.low %v2003, %v2007
    %v4263 = vcombine.low %v2011, %v2015
    %v4264 = vcombine.low %v2019, %v2023
    %v4266 = vunpack.c.l.s4 1966171168
    %v4267 = vunpack.c.0.s8 %v4266
    %v4268 = vlaneseq
    %v4269 = vshrl.u32 %v4268, 7
    %v4270 = vsub.s32 %v4267, %v4269
    %v4271 = vrot.slane %v4261, %v4270
    %v4273 = vunpack.c.l.s4 1966171168
    %v4274 = vunpack.c.0.s8 %v4273
    %v4275 = vlaneseq
    %v4276 = vshrl.u32 %v4275, 7
    %v4277 = vsub.s32 %v4274, %v4276
    %v4278 = vrot.slane %v4262, %v4277
    %v4280 = vunpack.c.l.s4 1966171168
    %v4281 = vunpack.c.0.s8 %v4280
    %v4282 = vlaneseq
    %v4283 = vshrl.u32 %v4282, 7
    %v4284 = vsub.s32 %v4281, %v4283
    %v4285 = vrot.slane %v4263, %v4284
    %v4287 = vunpack.c.l.s4 1966171168
    %v4288 = vunpack.c.0.s8 %v4287
    %v4289 = vlaneseq
    %v4290 = vshrl.u32 %v4289, 7
    %v4291 = vsub.s32 %v4288, %v4290
    %v4292 = vrot.slane %v4264, %v4291
    %v4293 = vcombine.low %v4271, %v4278
    %v4294 = vcombine.low %v4285, %v4292
    %v4296 = vunpack.c.l.s4 1966171168
    %v4297 = vunpack.c.0.s8 %v4296
    %v4298 = vlaneseq
    %v4299 = vshrl.u32 %v4298, 7
    %v4300 = vsub.s32 %v4297, %v4299
    %v4301 = vrot.slane %v4293, %v4300
    %v4303 = vunpack.c.l.s4 1966171168
    %v4304 = vunpack.c.0.s8 %v4303
    %v4305 = vlaneseq
    %v4306 = vshrl.u32 %v4305, 7
    %v4307 = vsub.s32 %v4304, %v4306
    %v4308 = vrot.slane %v4294, %v4307
    %v4309 = vcombine.low %v4301, %v4308
    %v4310 = vcombine.low %v2027, %v2031
    %v4311 = vcombine.low %v2035, %v2039
    %v4312 = vcombine.low %v2043, %v2047
    %v4313 = vcombine.low %v2051, %v2055
    %v4315 = vunpack.c.l.s4 1966171168
    %v4316 = vunpack.c.0.s8 %v4315
    %v4317 = vlaneseq
    %v4318 = vshrl.u32 %v4317, 7
    %v4319 = vsub.s32 %v4316, %v4318
    %v4320 = vrot.slane %v4310, %v4319
    %v4322 = vunpack.c.l.s4 1966171168
    %v4323 = vunpack.c.0.s8 %v4322
    %v4324 = vlaneseq
    %v4325 = vshrl.u32 %v4324, 7
    %v4326 = vsub.s32 %v4323, %v4325
    %v4327 = vrot.slane %v4311, %v4326
    %v4329 = vunpack.c.l.s4 1966171168
    %v4330 = vunpack.c.0.s8 %v4329
    %v4331 = vlaneseq
    %v4332 = vshrl.u32 %v4331, 7
    %v4333 = vsub.s32 %v4330, %v4332
    %v4334 = vrot.slane %v4312, %v4333
    %v4336 = vunpack.c.l.s4 1966171168
    %v4337 = vunpack.c.0.s8 %v4336
    %v4338 = vlaneseq
    %v4339 = vshrl.u32 %v4338, 7
    %v4340 = vsub.s32 %v4337, %v4339
    %v4341 = vrot.slane %v4313, %v4340
    %v4342 = vcombine.low %v4320, %v4327
    %v4343 = vcombine.low %v4334, %v4341
    %v4345 = vunpack.c.l.s4 1966171168
    %v4346 = vunpack.c.0.s8 %v4345
    %v4347 = vlaneseq
    %v4348 = vshrl.u32 %v4347, 7
    %v4349 = vsub.s32 %v4346, %v4348
    %v4350 = vrot.slane %v4342, %v4349
    %v4352 = vunpack.c.l.s4 1966171168
    %v4353 = vunpack.c.0.s8 %v4352
    %v4354 = vlaneseq
    %v4355 = vshrl.u32 %v4354, 7
    %v4356 = vsub.s32 %v4353, %v4355
    %v4357 = vrot.slane %v4343, %v4356
    %v4358 = vcombine.low %v4350, %v4357
    %v4359 = vcombine.low %v2059, %v2063
    %v4360 = vcombine.low %v2067, %v2071
    %v4361 = vcombine.low %v2075, %v2079
    %v4362 = vcombine.low %v2083, %v2087
    %v4364 = vunpack.c.l.s4 1966171168
    %v4365 = vunpack.c.0.s8 %v4364
    %v4366 = vlaneseq
    %v4367 = vshrl.u32 %v4366, 7
    %v4368 = vsub.s32 %v4365, %v4367
    %v4369 = vrot.slane %v4359, %v4368
    %v4371 = vunpack.c.l.s4 1966171168
    %v4372 = vunpack.c.0.s8 %v4371
    %v4373 = vlaneseq
    %v4374 = vshrl.u32 %v4373, 7
    %v4375 = vsub.s32 %v4372, %v4374
    %v4376 = vrot.slane %v4360, %v4375
    %v4378 = vunpack.c.l.s4 1966171168
    %v4379 = vunpack.c.0.s8 %v4378
    %v4380 = vlaneseq
    %v4381 = vshrl.u32 %v4380, 7
    %v4382 = vsub.s32 %v4379, %v4381
    %v4383 = vrot.slane %v4361, %v4382
    %v4385 = vunpack.c.l.s4 1966171168
    %v4386 = vunpack.c.0.s8 %v4385
    %v4387 = vlaneseq
    %v4388 = vshrl.u32 %v4387, 7
    %v4389 = vsub.s32 %v4386, %v4388
    %v4390 = vrot.slane %v4362, %v4389
    %v4391 = vcombine.low %v4369, %v4376
    %v4392 = vcombine.low %v4383, %v4390
    %v4394 = vunpack.c.l.s4 1966171168
    %v4395 = vunpack.c.0.s8 %v4394
    %v4396 = vlaneseq
    %v4397 = vshrl.u32 %v4396, 7
    %v4398 = vsub.s32 %v4395, %v4397
    %v4399 = vrot.slane %v4391, %v4398
    %v4401 = vunpack.c.l.s4 1966171168
    %v4402 = vunpack.c.0.s8 %v4401
    %v4403 = vlaneseq
    %v4404 = vshrl.u32 %v4403, 7
    %v4405 = vsub.s32 %v4402, %v4404
    %v4406 = vrot.slane %v4392, %v4405
    %v4407 = vcombine.low %v4399, %v4406
    %v4408 = vcombine.low %v2091, %v2095
    %v4409 = vcombine.low %v2099, %v2103
    %v4410 = vcombine.low %v2107, %v2111
    %v4411 = vcombine.low %v2115, %v2119
    %v4413 = vunpack.c.l.s4 1966171168
    %v4414 = vunpack.c.0.s8 %v4413
    %v4415 = vlaneseq
    %v4416 = vshrl.u32 %v4415, 7
    %v4417 = vsub.s32 %v4414, %v4416
    %v4418 = vrot.slane %v4408, %v4417
    %v4420 = vunpack.c.l.s4 1966171168
    %v4421 = vunpack.c.0.s8 %v4420
    %v4422 = vlaneseq
    %v4423 = vshrl.u32 %v4422, 7
    %v4424 = vsub.s32 %v4421, %v4423
    %v4425 = vrot.slane %v4409, %v4424
    %v4427 = vunpack.c.l.s4 1966171168
    %v4428 = vunpack.c.0.s8 %v4427
    %v4429 = vlaneseq
    %v4430 = vshrl.u32 %v4429, 7
    %v4431 = vsub.s32 %v4428, %v4430
    %v4432 = vrot.slane %v4410, %v4431
    %v4434 = vunpack.c.l.s4 1966171168
    %v4435 = vunpack.c.0.s8 %v4434
    %v4436 = vlaneseq
    %v4437 = vshrl.u32 %v4436, 7
    %v4438 = vsub.s32 %v4435, %v4437
    %v4439 = vrot.slane %v4411, %v4438
    %v4440 = vcombine.low %v4418, %v4425
    %v4441 = vcombine.low %v4432, %v4439
    %v4443 = vunpack.c.l.s4 1966171168
    %v4444 = vunpack.c.0.s8 %v4443
    %v4445 = vlaneseq
    %v4446 = vshrl.u32 %v4445, 7
    %v4447 = vsub.s32 %v4444, %v4446
    %v4448 = vrot.slane %v4440, %v4447
    %v4450 = vunpack.c.l.s4 1966171168
    %v4451 = vunpack.c.0.s8 %v4450
    %v4452 = vlaneseq
    %v4453 = vshrl.u32 %v4452, 7
    %v4454 = vsub.s32 %v4451, %v4453
    %v4455 = vrot.slane %v4441, %v4454
    %v4456 = vcombine.low %v4448, %v4455
    %v4457 = vcombine.low %v2123, %v2127
    %v4458 = vcombine.low %v2131, %v2135
    %v4459 = vcombine.low %v2139, %v2143
    %v4460 = vcombine.low %v2147, %v2151
    %v4462 = vunpack.c.l.s4 1966171168
    %v4463 = vunpack.c.0.s8 %v4462
    %v4464 = vlaneseq
    %v4465 = vshrl.u32 %v4464, 7
    %v4466 = vsub.s32 %v4463, %v4465
    %v4467 = vrot.slane %v4457, %v4466
    %v4469 = vunpack.c.l.s4 1966171168
    %v4470 = vunpack.c.0.s8 %v4469
    %v4471 = vlaneseq
    %v4472 = vshrl.u32 %v4471, 7
    %v4473 = vsub.s32 %v4470, %v4472
    %v4474 = vrot.slane %v4458, %v4473
    %v4476 = vunpack.c.l.s4 1966171168
    %v4477 = vunpack.c.0.s8 %v4476
    %v4478 = vlaneseq
    %v4479 = vshrl.u32 %v4478, 7
    %v4480 = vsub.s32 %v4477, %v4479
    %v4481 = vrot.slane %v4459, %v4480
    %v4483 = vunpack.c.l.s4 1966171168
    %v4484 = vunpack.c.0.s8 %v4483
    %v4485 = vlaneseq
    %v4486 = vshrl.u32 %v4485, 7
    %v4487 = vsub.s32 %v4484, %v4486
    %v4488 = vrot.slane %v4460, %v4487
    %v4489 = vcombine.low %v4467, %v4474
    %v4490 = vcombine.low %v4481, %v4488
    %v4492 = vunpack.c.l.s4 1966171168
    %v4493 = vunpack.c.0.s8 %v4492
    %v4494 = vlaneseq
    %v4495 = vshrl.u32 %v4494, 7
    %v4496 = vsub.s32 %v4493, %v4495
    %v4497 = vrot.slane %v4489, %v4496
    %v4499 = vunpack.c.l.s4 1966171168
    %v4500 = vunpack.c.0.s8 %v4499
    %v4501 = vlaneseq
    %v4502 = vshrl.u32 %v4501, 7
    %v4503 = vsub.s32 %v4500, %v4502
    %v4504 = vrot.slane %v4490, %v4503
    %v4505 = vcombine.low %v4497, %v4504
    %v4506 = vcombine.low %v2155, %v2159
    %v4507 = vcombine.low %v2163, %v2167
    %v4508 = vcombine.low %v2171, %v2175
    %v4509 = vcombine.low %v2179, %v2183
    %v4511 = vunpack.c.l.s4 1966171168
    %v4512 = vunpack.c.0.s8 %v4511
    %v4513 = vlaneseq
    %v4514 = vshrl.u32 %v4513, 7
    %v4515 = vsub.s32 %v4512, %v4514
    %v4516 = vrot.slane %v4506, %v4515
    %v4518 = vunpack.c.l.s4 1966171168
    %v4519 = vunpack.c.0.s8 %v4518
    %v4520 = vlaneseq
    %v4521 = vshrl.u32 %v4520, 7
    %v4522 = vsub.s32 %v4519, %v4521
    %v4523 = vrot.slane %v4507, %v4522
    %v4525 = vunpack.c.l.s4 1966171168
    %v4526 = vunpack.c.0.s8 %v4525
    %v4527 = vlaneseq
    %v4528 = vshrl.u32 %v4527, 7
    %v4529 = vsub.s32 %v4526, %v4528
    %v4530 = vrot.slane %v4508, %v4529
    %v4532 = vunpack.c.l.s4 1966171168
    %v4533 = vunpack.c.0.s8 %v4532
    %v4534 = vlaneseq
    %v4535 = vshrl.u32 %v4534, 7
    %v4536 = vsub.s32 %v4533, %v4535
    %v4537 = vrot.slane %v4509, %v4536
    %v4538 = vcombine.low %v4516, %v4523
    %v4539 = vcombine.low %v4530, %v4537
    %v4541 = vunpack.c.l.s4 1966171168
    %v4542 = vunpack.c.0.s8 %v4541
    %v4543 = vlaneseq
    %v4544 = vshrl.u32 %v4543, 7
    %v4545 = vsub.s32 %v4542, %v4544
    %v4546 = vrot.slane %v4538, %v4545
    %v4548 = vunpack.c.l.s4 1966171168
    %v4549 = vunpack.c.0.s8 %v4548
    %v4550 = vlaneseq
    %v4551 = vshrl.u32 %v4550, 7
    %v4552 = vsub.s32 %v4549, %v4551
    %v4553 = vrot.slane %v4539, %v4552
    %v4554 = vcombine.low %v4546, %v4553
    %v4555 = vcombine.low %v2187, %v2191
    %v4556 = vcombine.low %v2195, %v2199
    %v4557 = vcombine.low %v2203, %v2207
    %v4558 = vcombine.low %v2211, %v2215
    %v4560 = vunpack.c.l.s4 1966171168
    %v4561 = vunpack.c.0.s8 %v4560
    %v4562 = vlaneseq
    %v4563 = vshrl.u32 %v4562, 7
    %v4564 = vsub.s32 %v4561, %v4563
    %v4565 = vrot.slane %v4555, %v4564
    %v4567 = vunpack.c.l.s4 1966171168
    %v4568 = vunpack.c.0.s8 %v4567
    %v4569 = vlaneseq
    %v4570 = vshrl.u32 %v4569, 7
    %v4571 = vsub.s32 %v4568, %v4570
    %v4572 = vrot.slane %v4556, %v4571
    %v4574 = vunpack.c.l.s4 1966171168
    %v4575 = vunpack.c.0.s8 %v4574
    %v4576 = vlaneseq
    %v4577 = vshrl.u32 %v4576, 7
    %v4578 = vsub.s32 %v4575, %v4577
    %v4579 = vrot.slane %v4557, %v4578
    %v4581 = vunpack.c.l.s4 1966171168
    %v4582 = vunpack.c.0.s8 %v4581
    %v4583 = vlaneseq
    %v4584 = vshrl.u32 %v4583, 7
    %v4585 = vsub.s32 %v4582, %v4584
    %v4586 = vrot.slane %v4558, %v4585
    %v4587 = vcombine.low %v4565, %v4572
    %v4588 = vcombine.low %v4579, %v4586
    %v4590 = vunpack.c.l.s4 1966171168
    %v4591 = vunpack.c.0.s8 %v4590
    %v4592 = vlaneseq
    %v4593 = vshrl.u32 %v4592, 7
    %v4594 = vsub.s32 %v4591, %v4593
    %v4595 = vrot.slane %v4587, %v4594
    %v4597 = vunpack.c.l.s4 1966171168
    %v4598 = vunpack.c.0.s8 %v4597
    %v4599 = vlaneseq
    %v4600 = vshrl.u32 %v4599, 7
    %v4601 = vsub.s32 %v4598, %v4600
    %v4602 = vrot.slane %v4588, %v4601
    %v4603 = vcombine.low %v4595, %v4602
    %v4604 = vcombine.low %v2219, %v2223
    %v4605 = vcombine.low %v2227, %v2231
    %v4606 = vcombine.low %v2235, %v2239
    %v4607 = vcombine.low %v2243, %v2247
    %v4609 = vunpack.c.l.s4 1966171168
    %v4610 = vunpack.c.0.s8 %v4609
    %v4611 = vlaneseq
    %v4612 = vshrl.u32 %v4611, 7
    %v4613 = vsub.s32 %v4610, %v4612
    %v4614 = vrot.slane %v4604, %v4613
    %v4616 = vunpack.c.l.s4 1966171168
    %v4617 = vunpack.c.0.s8 %v4616
    %v4618 = vlaneseq
    %v4619 = vshrl.u32 %v4618, 7
    %v4620 = vsub.s32 %v4617, %v4619
    %v4621 = vrot.slane %v4605, %v4620
    %v4623 = vunpack.c.l.s4 1966171168
    %v4624 = vunpack.c.0.s8 %v4623
    %v4625 = vlaneseq
    %v4626 = vshrl.u32 %v4625, 7
    %v4627 = vsub.s32 %v4624, %v4626
    %v4628 = vrot.slane %v4606, %v4627
    %v4630 = vunpack.c.l.s4 1966171168
    %v4631 = vunpack.c.0.s8 %v4630
    %v4632 = vlaneseq
    %v4633 = vshrl.u32 %v4632, 7
    %v4634 = vsub.s32 %v4631, %v4633
    %v4635 = vrot.slane %v4607, %v4634
    %v4636 = vcombine.low %v4614, %v4621
    %v4637 = vcombine.low %v4628, %v4635
    %v4639 = vunpack.c.l.s4 1966171168
    %v4640 = vunpack.c.0.s8 %v4639
    %v4641 = vlaneseq
    %v4642 = vshrl.u32 %v4641, 7
    %v4643 = vsub.s32 %v4640, %v4642
    %v4644 = vrot.slane %v4636, %v4643
    %v4646 = vunpack.c.l.s4 1966171168
    %v4647 = vunpack.c.0.s8 %v4646
    %v4648 = vlaneseq
    %v4649 = vshrl.u32 %v4648, 7
    %v4650 = vsub.s32 %v4647, %v4649
    %v4651 = vrot.slane %v4637, %v4650
    %v4652 = vcombine.low %v4644, %v4651
    %v4653 = vcombine.low %v2251, %v2255
    %v4654 = vcombine.low %v2259, %v2263
    %v4655 = vcombine.low %v2267, %v2271
    %v4656 = vcombine.low %v2275, %v2279
    %v4658 = vunpack.c.l.s4 1966171168
    %v4659 = vunpack.c.0.s8 %v4658
    %v4660 = vlaneseq
    %v4661 = vshrl.u32 %v4660, 7
    %v4662 = vsub.s32 %v4659, %v4661
    %v4663 = vrot.slane %v4653, %v4662
    %v4665 = vunpack.c.l.s4 1966171168
    %v4666 = vunpack.c.0.s8 %v4665
    %v4667 = vlaneseq
    %v4668 = vshrl.u32 %v4667, 7
    %v4669 = vsub.s32 %v4666, %v4668
    %v4670 = vrot.slane %v4654, %v4669
    %v4672 = vunpack.c.l.s4 1966171168
    %v4673 = vunpack.c.0.s8 %v4672
    %v4674 = vlaneseq
    %v4675 = vshrl.u32 %v4674, 7
    %v4676 = vsub.s32 %v4673, %v4675
    %v4677 = vrot.slane %v4655, %v4676
    %v4679 = vunpack.c.l.s4 1966171168
    %v4680 = vunpack.c.0.s8 %v4679
    %v4681 = vlaneseq
    %v4682 = vshrl.u32 %v4681, 7
    %v4683 = vsub.s32 %v4680, %v4682
    %v4684 = vrot.slane %v4656, %v4683
    %v4685 = vcombine.low %v4663, %v4670
    %v4686 = vcombine.low %v4677, %v4684
    %v4688 = vunpack.c.l.s4 1966171168
    %v4689 = vunpack.c.0.s8 %v4688
    %v4690 = vlaneseq
    %v4691 = vshrl.u32 %v4690, 7
    %v4692 = vsub.s32 %v4689, %v4691
    %v4693 = vrot.slane %v4685, %v4692
    %v4695 = vunpack.c.l.s4 1966171168
    %v4696 = vunpack.c.0.s8 %v4695
    %v4697 = vlaneseq
    %v4698 = vshrl.u32 %v4697, 7
    %v4699 = vsub.s32 %v4696, %v4698
    %v4700 = vrot.slane %v4686, %v4699
    %v4701 = vcombine.low %v4693, %v4700
    %v4702 = vcombine.low %v2283, %v2287
    %v4703 = vcombine.low %v2291, %v2295
    %v4704 = vcombine.low %v2299, %v2303
    %v4705 = vcombine.low %v2307, %v2311
    %v4707 = vunpack.c.l.s4 1966171168
    %v4708 = vunpack.c.0.s8 %v4707
    %v4709 = vlaneseq
    %v4710 = vshrl.u32 %v4709, 7
    %v4711 = vsub.s32 %v4708, %v4710
    %v4712 = vrot.slane %v4702, %v4711
    %v4714 = vunpack.c.l.s4 1966171168
    %v4715 = vunpack.c.0.s8 %v4714
    %v4716 = vlaneseq
    %v4717 = vshrl.u32 %v4716, 7
    %v4718 = vsub.s32 %v4715, %v4717
    %v4719 = vrot.slane %v4703, %v4718
    %v4721 = vunpack.c.l.s4 1966171168
    %v4722 = vunpack.c.0.s8 %v4721
    %v4723 = vlaneseq
    %v4724 = vshrl.u32 %v4723, 7
    %v4725 = vsub.s32 %v4722, %v4724
    %v4726 = vrot.slane %v4704, %v4725
    %v4728 = vunpack.c.l.s4 1966171168
    %v4729 = vunpack.c.0.s8 %v4728
    %v4730 = vlaneseq
    %v4731 = vshrl.u32 %v4730, 7
    %v4732 = vsub.s32 %v4729, %v4731
    %v4733 = vrot.slane %v4705, %v4732
    %v4734 = vcombine.low %v4712, %v4719
    %v4735 = vcombine.low %v4726, %v4733
    %v4737 = vunpack.c.l.s4 1966171168
    %v4738 = vunpack.c.0.s8 %v4737
    %v4739 = vlaneseq
    %v4740 = vshrl.u32 %v4739, 7
    %v4741 = vsub.s32 %v4738, %v4740
    %v4742 = vrot.slane %v4734, %v4741
    %v4744 = vunpack.c.l.s4 1966171168
    %v4745 = vunpack.c.0.s8 %v4744
    %v4746 = vlaneseq
    %v4747 = vshrl.u32 %v4746, 7
    %v4748 = vsub.s32 %v4745, %v4747
    %v4749 = vrot.slane %v4735, %v4748
    %v4750 = vcombine.low %v4742, %v4749
    %v4751 = vcombine.low %v2315, %v2319
    %v4752 = vcombine.low %v2323, %v2327
    %v4753 = vcombine.low %v2331, %v2335
    %v4754 = vcombine.low %v2339, %v2343
    %v4756 = vunpack.c.l.s4 1966171168
    %v4757 = vunpack.c.0.s8 %v4756
    %v4758 = vlaneseq
    %v4759 = vshrl.u32 %v4758, 7
    %v4760 = vsub.s32 %v4757, %v4759
    %v4761 = vrot.slane %v4751, %v4760
    %v4763 = vunpack.c.l.s4 1966171168
    %v4764 = vunpack.c.0.s8 %v4763
    %v4765 = vlaneseq
    %v4766 = vshrl.u32 %v4765, 7
    %v4767 = vsub.s32 %v4764, %v4766
    %v4768 = vrot.slane %v4752, %v4767
    %v4770 = vunpack.c.l.s4 1966171168
    %v4771 = vunpack.c.0.s8 %v4770
    %v4772 = vlaneseq
    %v4773 = vshrl.u32 %v4772, 7
    %v4774 = vsub.s32 %v4771, %v4773
    %v4775 = vrot.slane %v4753, %v4774
    %v4777 = vunpack.c.l.s4 1966171168
    %v4778 = vunpack.c.0.s8 %v4777
    %v4779 = vlaneseq
    %v4780 = vshrl.u32 %v4779, 7
    %v4781 = vsub.s32 %v4778, %v4780
    %v4782 = vrot.slane %v4754, %v4781
    %v4783 = vcombine.low %v4761, %v4768
    %v4784 = vcombine.low %v4775, %v4782
    %v4786 = vunpack.c.l.s4 1966171168
    %v4787 = vunpack.c.0.s8 %v4786
    %v4788 = vlaneseq
    %v4789 = vshrl.u32 %v4788, 7
    %v4790 = vsub.s32 %v4787, %v4789
    %v4791 = vrot.slane %v4783, %v4790
    %v4793 = vunpack.c.l.s4 1966171168
    %v4794 = vunpack.c.0.s8 %v4793
    %v4795 = vlaneseq
    %v4796 = vshrl.u32 %v4795, 7
    %v4797 = vsub.s32 %v4794, %v4796
    %v4798 = vrot.slane %v4784, %v4797
    %v4799 = vcombine.low %v4791, %v4798
    %v4800 = vcombine.low %v2347, %v2351
    %v4801 = vcombine.low %v2355, %v2359
    %v4802 = vcombine.low %v2363, %v2367
    %v4803 = vcombine.low %v2371, %v2375
    %v4805 = vunpack.c.l.s4 1966171168
    %v4806 = vunpack.c.0.s8 %v4805
    %v4807 = vlaneseq
    %v4808 = vshrl.u32 %v4807, 7
    %v4809 = vsub.s32 %v4806, %v4808
    %v4810 = vrot.slane %v4800, %v4809
    %v4812 = vunpack.c.l.s4 1966171168
    %v4813 = vunpack.c.0.s8 %v4812
    %v4814 = vlaneseq
    %v4815 = vshrl.u32 %v4814, 7
    %v4816 = vsub.s32 %v4813, %v4815
    %v4817 = vrot.slane %v4801, %v4816
    %v4819 = vunpack.c.l.s4 1966171168
    %v4820 = vunpack.c.0.s8 %v4819
    %v4821 = vlaneseq
    %v4822 = vshrl.u32 %v4821, 7
    %v4823 = vsub.s32 %v4820, %v4822
    %v4824 = vrot.slane %v4802, %v4823
    %v4826 = vunpack.c.l.s4 1966171168
    %v4827 = vunpack.c.0.s8 %v4826
    %v4828 = vlaneseq
    %v4829 = vshrl.u32 %v4828, 7
    %v4830 = vsub.s32 %v4827, %v4829
    %v4831 = vrot.slane %v4803, %v4830
    %v4832 = vcombine.low %v4810, %v4817
    %v4833 = vcombine.low %v4824, %v4831
    %v4835 = vunpack.c.l.s4 1966171168
    %v4836 = vunpack.c.0.s8 %v4835
    %v4837 = vlaneseq
    %v4838 = vshrl.u32 %v4837, 7
    %v4839 = vsub.s32 %v4836, %v4838
    %v4840 = vrot.slane %v4832, %v4839
    %v4842 = vunpack.c.l.s4 1966171168
    %v4843 = vunpack.c.0.s8 %v4842
    %v4844 = vlaneseq
    %v4845 = vshrl.u32 %v4844, 7
    %v4846 = vsub.s32 %v4843, %v4845
    %v4847 = vrot.slane %v4833, %v4846
    %v4848 = vcombine.low %v4840, %v4847
    %v4849 = vcombine.low %v2379, %v2383
    %v4850 = vcombine.low %v2387, %v2391
    %v4851 = vcombine.low %v2395, %v2399
    %v4852 = vcombine.low %v2403, %v2407
    %v4854 = vunpack.c.l.s4 1966171168
    %v4855 = vunpack.c.0.s8 %v4854
    %v4856 = vlaneseq
    %v4857 = vshrl.u32 %v4856, 7
    %v4858 = vsub.s32 %v4855, %v4857
    %v4859 = vrot.slane %v4849, %v4858
    %v4861 = vunpack.c.l.s4 1966171168
    %v4862 = vunpack.c.0.s8 %v4861
    %v4863 = vlaneseq
    %v4864 = vshrl.u32 %v4863, 7
    %v4865 = vsub.s32 %v4862, %v4864
    %v4866 = vrot.slane %v4850, %v4865
    %v4868 = vunpack.c.l.s4 1966171168
    %v4869 = vunpack.c.0.s8 %v4868
    %v4870 = vlaneseq
    %v4871 = vshrl.u32 %v4870, 7
    %v4872 = vsub.s32 %v4869, %v4871
    %v4873 = vrot.slane %v4851, %v4872
    %v4875 = vunpack.c.l.s4 1966171168
    %v4876 = vunpack.c.0.s8 %v4875
    %v4877 = vlaneseq
    %v4878 = vshrl.u32 %v4877, 7
    %v4879 = vsub.s32 %v4876, %v4878
    %v4880 = vrot.slane %v4852, %v4879
    %v4881 = vcombine.low %v4859, %v4866
    %v4882 = vcombine.low %v4873, %v4880
    %v4884 = vunpack.c.l.s4 1966171168
    %v4885 = vunpack.c.0.s8 %v4884
    %v4886 = vlaneseq
    %v4887 = vshrl.u32 %v4886, 7
    %v4888 = vsub.s32 %v4885, %v4887
    %v4889 = vrot.slane %v4881, %v4888
    %v4891 = vunpack.c.l.s4 1966171168
    %v4892 = vunpack.c.0.s8 %v4891
    %v4893 = vlaneseq
    %v4894 = vshrl.u32 %v4893, 7
    %v4895 = vsub.s32 %v4892, %v4894
    %v4896 = vrot.slane %v4882, %v4895
    %v4897 = vcombine.low %v4889, %v4896
    %v4898 = vcombine.low %v2411, %v2415
    %v4899 = vcombine.low %v2419, %v2423
    %v4900 = vcombine.low %v2427, %v2431
    %v4901 = vcombine.low %v2435, %v2439
    %v4903 = vunpack.c.l.s4 1966171168
    %v4904 = vunpack.c.0.s8 %v4903
    %v4905 = vlaneseq
    %v4906 = vshrl.u32 %v4905, 7
    %v4907 = vsub.s32 %v4904, %v4906
    %v4908 = vrot.slane %v4898, %v4907
    %v4910 = vunpack.c.l.s4 1966171168
    %v4911 = vunpack.c.0.s8 %v4910
    %v4912 = vlaneseq
    %v4913 = vshrl.u32 %v4912, 7
    %v4914 = vsub.s32 %v4911, %v4913
    %v4915 = vrot.slane %v4899, %v4914
    %v4917 = vunpack.c.l.s4 1966171168
    %v4918 = vunpack.c.0.s8 %v4917
    %v4919 = vlaneseq
    %v4920 = vshrl.u32 %v4919, 7
    %v4921 = vsub.s32 %v4918, %v4920
    %v4922 = vrot.slane %v4900, %v4921
    %v4924 = vunpack.c.l.s4 1966171168
    %v4925 = vunpack.c.0.s8 %v4924
    %v4926 = vlaneseq
    %v4927 = vshrl.u32 %v4926, 7
    %v4928 = vsub.s32 %v4925, %v4927
    %v4929 = vrot.slane %v4901, %v4928
    %v4930 = vcombine.low %v4908, %v4915
    %v4931 = vcombine.low %v4922, %v4929
    %v4933 = vunpack.c.l.s4 1966171168
    %v4934 = vunpack.c.0.s8 %v4933
    %v4935 = vlaneseq
    %v4936 = vshrl.u32 %v4935, 7
    %v4937 = vsub.s32 %v4934, %v4936
    %v4938 = vrot.slane %v4930, %v4937
    %v4940 = vunpack.c.l.s4 1966171168
    %v4941 = vunpack.c.0.s8 %v4940
    %v4942 = vlaneseq
    %v4943 = vshrl.u32 %v4942, 7
    %v4944 = vsub.s32 %v4941, %v4943
    %v4945 = vrot.slane %v4931, %v4944
    %v4946 = vcombine.low %v4938, %v4945
    %v4947 = vcombine.low %v2443, %v2447
    %v4948 = vcombine.low %v2451, %v2455
    %v4949 = vcombine.low %v2459, %v2463
    %v4950 = vcombine.low %v2467, %v2471
    %v4952 = vunpack.c.l.s4 1966171168
    %v4953 = vunpack.c.0.s8 %v4952
    %v4954 = vlaneseq
    %v4955 = vshrl.u32 %v4954, 7
    %v4956 = vsub.s32 %v4953, %v4955
    %v4957 = vrot.slane %v4947, %v4956
    %v4959 = vunpack.c.l.s4 1966171168
    %v4960 = vunpack.c.0.s8 %v4959
    %v4961 = vlaneseq
    %v4962 = vshrl.u32 %v4961, 7
    %v4963 = vsub.s32 %v4960, %v4962
    %v4964 = vrot.slane %v4948, %v4963
    %v4966 = vunpack.c.l.s4 1966171168
    %v4967 = vunpack.c.0.s8 %v4966
    %v4968 = vlaneseq
    %v4969 = vshrl.u32 %v4968, 7
    %v4970 = vsub.s32 %v4967, %v4969
    %v4971 = vrot.slane %v4949, %v4970
    %v4973 = vunpack.c.l.s4 1966171168
    %v4974 = vunpack.c.0.s8 %v4973
    %v4975 = vlaneseq
    %v4976 = vshrl.u32 %v4975, 7
    %v4977 = vsub.s32 %v4974, %v4976
    %v4978 = vrot.slane %v4950, %v4977
    %v4979 = vcombine.low %v4957, %v4964
    %v4980 = vcombine.low %v4971, %v4978
    %v4982 = vunpack.c.l.s4 1966171168
    %v4983 = vunpack.c.0.s8 %v4982
    %v4984 = vlaneseq
    %v4985 = vshrl.u32 %v4984, 7
    %v4986 = vsub.s32 %v4983, %v4985
    %v4987 = vrot.slane %v4979, %v4986
    %v4989 = vunpack.c.l.s4 1966171168
    %v4990 = vunpack.c.0.s8 %v4989
    %v4991 = vlaneseq
    %v4992 = vshrl.u32 %v4991, 7
    %v4993 = vsub.s32 %v4990, %v4992
    %v4994 = vrot.slane %v4980, %v4993
    %v4995 = vcombine.low %v4987, %v4994
    %v4996 = vcombine.low %v2475, %v2479
    %v4997 = vcombine.low %v2483, %v2487
    %v4998 = vcombine.low %v2491, %v2495
    %v4999 = vcombine.low %v2499, %v2503
    %v5001 = vunpack.c.l.s4 1966171168
    %v5002 = vunpack.c.0.s8 %v5001
    %v5003 = vlaneseq
    %v5004 = vshrl.u32 %v5003, 7
    %v5005 = vsub.s32 %v5002, %v5004
    %v5006 = vrot.slane %v4996, %v5005
    %v5008 = vunpack.c.l.s4 1966171168
    %v5009 = vunpack.c.0.s8 %v5008
    %v5010 = vlaneseq
    %v5011 = vshrl.u32 %v5010, 7
    %v5012 = vsub.s32 %v5009, %v5011
    %v5013 = vrot.slane %v4997, %v5012
    %v5015 = vunpack.c.l.s4 1966171168
    %v5016 = vunpack.c.0.s8 %v5015
    %v5017 = vlaneseq
    %v5018 = vshrl.u32 %v5017, 7
    %v5019 = vsub.s32 %v5016, %v5018
    %v5020 = vrot.slane %v4998, %v5019
    %v5022 = vunpack.c.l.s4 1966171168
    %v5023 = vunpack.c.0.s8 %v5022
    %v5024 = vlaneseq
    %v5025 = vshrl.u32 %v5024, 7
    %v5026 = vsub.s32 %v5023, %v5025
    %v5027 = vrot.slane %v4999, %v5026
    %v5028 = vcombine.low %v5006, %v5013
    %v5029 = vcombine.low %v5020, %v5027
    %v5031 = vunpack.c.l.s4 1966171168
    %v5032 = vunpack.c.0.s8 %v5031
    %v5033 = vlaneseq
    %v5034 = vshrl.u32 %v5033, 7
    %v5035 = vsub.s32 %v5032, %v5034
    %v5036 = vrot.slane %v5028, %v5035
    %v5038 = vunpack.c.l.s4 1966171168
    %v5039 = vunpack.c.0.s8 %v5038
    %v5040 = vlaneseq
    %v5041 = vshrl.u32 %v5040, 7
    %v5042 = vsub.s32 %v5039, %v5041
    %v5043 = vrot.slane %v5029, %v5042
    %v5044 = vcombine.low %v5036, %v5043
    %v5045 = vcombine.low %v2507, %v2511
    %v5046 = vcombine.low %v2515, %v2519
    %v5047 = vcombine.low %v2523, %v2527
    %v5048 = vcombine.low %v2531, %v2535
    %v5050 = vunpack.c.l.s4 1966171168
    %v5051 = vunpack.c.0.s8 %v5050
    %v5052 = vlaneseq
    %v5053 = vshrl.u32 %v5052, 7
    %v5054 = vsub.s32 %v5051, %v5053
    %v5055 = vrot.slane %v5045, %v5054
    %v5057 = vunpack.c.l.s4 1966171168
    %v5058 = vunpack.c.0.s8 %v5057
    %v5059 = vlaneseq
    %v5060 = vshrl.u32 %v5059, 7
    %v5061 = vsub.s32 %v5058, %v5060
    %v5062 = vrot.slane %v5046, %v5061
    %v5064 = vunpack.c.l.s4 1966171168
    %v5065 = vunpack.c.0.s8 %v5064
    %v5066 = vlaneseq
    %v5067 = vshrl.u32 %v5066, 7
    %v5068 = vsub.s32 %v5065, %v5067
    %v5069 = vrot.slane %v5047, %v5068
    %v5071 = vunpack.c.l.s4 1966171168
    %v5072 = vunpack.c.0.s8 %v5071
    %v5073 = vlaneseq
    %v5074 = vshrl.u32 %v5073, 7
    %v5075 = vsub.s32 %v5072, %v5074
    %v5076 = vrot.slane %v5048, %v5075
    %v5077 = vcombine.low %v5055, %v5062
    %v5078 = vcombine.low %v5069, %v5076
    %v5080 = vunpack.c.l.s4 1966171168
    %v5081 = vunpack.c.0.s8 %v5080
    %v5082 = vlaneseq
    %v5083 = vshrl.u32 %v5082, 7
    %v5084 = vsub.s32 %v5081, %v5083
    %v5085 = vrot.slane %v5077, %v5084
    %v5087 = vunpack.c.l.s4 1966171168
    %v5088 = vunpack.c.0.s8 %v5087
    %v5089 = vlaneseq
    %v5090 = vshrl.u32 %v5089, 7
    %v5091 = vsub.s32 %v5088, %v5090
    %v5092 = vrot.slane %v5078, %v5091
    %v5093 = vcombine.low %v5085, %v5092
    %v5094 = vcombine.low %v2539, %v2543
    %v5095 = vcombine.low %v2547, %v2551
    %v5096 = vcombine.low %v2555, %v2559
    %v5097 = vcombine.low %v2563, %v2567
    %v5099 = vunpack.c.l.s4 1966171168
    %v5100 = vunpack.c.0.s8 %v5099
    %v5101 = vlaneseq
    %v5102 = vshrl.u32 %v5101, 7
    %v5103 = vsub.s32 %v5100, %v5102
    %v5104 = vrot.slane %v5094, %v5103
    %v5106 = vunpack.c.l.s4 1966171168
    %v5107 = vunpack.c.0.s8 %v5106
    %v5108 = vlaneseq
    %v5109 = vshrl.u32 %v5108, 7
    %v5110 = vsub.s32 %v5107, %v5109
    %v5111 = vrot.slane %v5095, %v5110
    %v5113 = vunpack.c.l.s4 1966171168
    %v5114 = vunpack.c.0.s8 %v5113
    %v5115 = vlaneseq
    %v5116 = vshrl.u32 %v5115, 7
    %v5117 = vsub.s32 %v5114, %v5116
    %v5118 = vrot.slane %v5096, %v5117
    %v5120 = vunpack.c.l.s4 1966171168
    %v5121 = vunpack.c.0.s8 %v5120
    %v5122 = vlaneseq
    %v5123 = vshrl.u32 %v5122, 7
    %v5124 = vsub.s32 %v5121, %v5123
    %v5125 = vrot.slane %v5097, %v5124
    %v5126 = vcombine.low %v5104, %v5111
    %v5127 = vcombine.low %v5118, %v5125
    %v5129 = vunpack.c.l.s4 1966171168
    %v5130 = vunpack.c.0.s8 %v5129
    %v5131 = vlaneseq
    %v5132 = vshrl.u32 %v5131, 7
    %v5133 = vsub.s32 %v5130, %v5132
    %v5134 = vrot.slane %v5126, %v5133
    %v5136 = vunpack.c.l.s4 1966171168
    %v5137 = vunpack.c.0.s8 %v5136
    %v5138 = vlaneseq
    %v5139 = vshrl.u32 %v5138, 7
    %v5140 = vsub.s32 %v5137, %v5139
    %v5141 = vrot.slane %v5127, %v5140
    %v5142 = vcombine.low %v5134, %v5141
    %v5143 = vcombine.low %v2571, %v2575
    %v5144 = vcombine.low %v2579, %v2583
    %v5145 = vcombine.low %v2587, %v2591
    %v5146 = vcombine.low %v2595, %v2599
    %v5148 = vunpack.c.l.s4 1966171168
    %v5149 = vunpack.c.0.s8 %v5148
    %v5150 = vlaneseq
    %v5151 = vshrl.u32 %v5150, 7
    %v5152 = vsub.s32 %v5149, %v5151
    %v5153 = vrot.slane %v5143, %v5152
    %v5155 = vunpack.c.l.s4 1966171168
    %v5156 = vunpack.c.0.s8 %v5155
    %v5157 = vlaneseq
    %v5158 = vshrl.u32 %v5157, 7
    %v5159 = vsub.s32 %v5156, %v5158
    %v5160 = vrot.slane %v5144, %v5159
    %v5162 = vunpack.c.l.s4 1966171168
    %v5163 = vunpack.c.0.s8 %v5162
    %v5164 = vlaneseq
    %v5165 = vshrl.u32 %v5164, 7
    %v5166 = vsub.s32 %v5163, %v5165
    %v5167 = vrot.slane %v5145, %v5166
    %v5169 = vunpack.c.l.s4 1966171168
    %v5170 = vunpack.c.0.s8 %v5169
    %v5171 = vlaneseq
    %v5172 = vshrl.u32 %v5171, 7
    %v5173 = vsub.s32 %v5170, %v5172
    %v5174 = vrot.slane %v5146, %v5173
    %v5175 = vcombine.low %v5153, %v5160
    %v5176 = vcombine.low %v5167, %v5174
    %v5178 = vunpack.c.l.s4 1966171168
    %v5179 = vunpack.c.0.s8 %v5178
    %v5180 = vlaneseq
    %v5181 = vshrl.u32 %v5180, 7
    %v5182 = vsub.s32 %v5179, %v5181
    %v5183 = vrot.slane %v5175, %v5182
    %v5185 = vunpack.c.l.s4 1966171168
    %v5186 = vunpack.c.0.s8 %v5185
    %v5187 = vlaneseq
    %v5188 = vshrl.u32 %v5187, 7
    %v5189 = vsub.s32 %v5186, %v5188
    %v5190 = vrot.slane %v5176, %v5189
    %v5191 = vcombine.low %v5183, %v5190
    %v5192 = vcombine.low %v2603, %v2607
    %v5193 = vcombine.low %v2611, %v2615
    %v5194 = vcombine.low %v2619, %v2623
    %v5195 = vcombine.low %v2627, %v2631
    %v5197 = vunpack.c.l.s4 1966171168
    %v5198 = vunpack.c.0.s8 %v5197
    %v5199 = vlaneseq
    %v5200 = vshrl.u32 %v5199, 7
    %v5201 = vsub.s32 %v5198, %v5200
    %v5202 = vrot.slane %v5192, %v5201
    %v5204 = vunpack.c.l.s4 1966171168
    %v5205 = vunpack.c.0.s8 %v5204
    %v5206 = vlaneseq
    %v5207 = vshrl.u32 %v5206, 7
    %v5208 = vsub.s32 %v5205, %v5207
    %v5209 = vrot.slane %v5193, %v5208
    %v5211 = vunpack.c.l.s4 1966171168
    %v5212 = vunpack.c.0.s8 %v5211
    %v5213 = vlaneseq
    %v5214 = vshrl.u32 %v5213, 7
    %v5215 = vsub.s32 %v5212, %v5214
    %v5216 = vrot.slane %v5194, %v5215
    %v5218 = vunpack.c.l.s4 1966171168
    %v5219 = vunpack.c.0.s8 %v5218
    %v5220 = vlaneseq
    %v5221 = vshrl.u32 %v5220, 7
    %v5222 = vsub.s32 %v5219, %v5221
    %v5223 = vrot.slane %v5195, %v5222
    %v5224 = vcombine.low %v5202, %v5209
    %v5225 = vcombine.low %v5216, %v5223
    %v5227 = vunpack.c.l.s4 1966171168
    %v5228 = vunpack.c.0.s8 %v5227
    %v5229 = vlaneseq
    %v5230 = vshrl.u32 %v5229, 7
    %v5231 = vsub.s32 %v5228, %v5230
    %v5232 = vrot.slane %v5224, %v5231
    %v5234 = vunpack.c.l.s4 1966171168
    %v5235 = vunpack.c.0.s8 %v5234
    %v5236 = vlaneseq
    %v5237 = vshrl.u32 %v5236, 7
    %v5238 = vsub.s32 %v5235, %v5237
    %v5239 = vrot.slane %v5225, %v5238
    %v5240 = vcombine.low %v5232, %v5239
    %v5241 = vcombine.low %v2635, %v2639
    %v5242 = vcombine.low %v2643, %v2647
    %v5243 = vcombine.low %v2651, %v2655
    %v5244 = vcombine.low %v2659, %v2663
    %v5246 = vunpack.c.l.s4 1966171168
    %v5247 = vunpack.c.0.s8 %v5246
    %v5248 = vlaneseq
    %v5249 = vshrl.u32 %v5248, 7
    %v5250 = vsub.s32 %v5247, %v5249
    %v5251 = vrot.slane %v5241, %v5250
    %v5253 = vunpack.c.l.s4 1966171168
    %v5254 = vunpack.c.0.s8 %v5253
    %v5255 = vlaneseq
    %v5256 = vshrl.u32 %v5255, 7
    %v5257 = vsub.s32 %v5254, %v5256
    %v5258 = vrot.slane %v5242, %v5257
    %v5260 = vunpack.c.l.s4 1966171168
    %v5261 = vunpack.c.0.s8 %v5260
    %v5262 = vlaneseq
    %v5263 = vshrl.u32 %v5262, 7
    %v5264 = vsub.s32 %v5261, %v5263
    %v5265 = vrot.slane %v5243, %v5264
    %v5267 = vunpack.c.l.s4 1966171168
    %v5268 = vunpack.c.0.s8 %v5267
    %v5269 = vlaneseq
    %v5270 = vshrl.u32 %v5269, 7
    %v5271 = vsub.s32 %v5268, %v5270
    %v5272 = vrot.slane %v5244, %v5271
    %v5273 = vcombine.low %v5251, %v5258
    %v5274 = vcombine.low %v5265, %v5272
    %v5276 = vunpack.c.l.s4 1966171168
    %v5277 = vunpack.c.0.s8 %v5276
    %v5278 = vlaneseq
    %v5279 = vshrl.u32 %v5278, 7
    %v5280 = vsub.s32 %v5277, %v5279
    %v5281 = vrot.slane %v5273, %v5280
    %v5283 = vunpack.c.l.s4 1966171168
    %v5284 = vunpack.c.0.s8 %v5283
    %v5285 = vlaneseq
    %v5286 = vshrl.u32 %v5285, 7
    %v5287 = vsub.s32 %v5284, %v5286
    %v5288 = vrot.slane %v5274, %v5287
    %v5289 = vcombine.low %v5281, %v5288
    %v5290 = vcombine.low %v2667, %v2671
    %v5291 = vcombine.low %v2675, %v2679
    %v5292 = vcombine.low %v2683, %v2687
    %v5293 = vcombine.low %v2691, %v2695
    %v5295 = vunpack.c.l.s4 1966171168
    %v5296 = vunpack.c.0.s8 %v5295
    %v5297 = vlaneseq
    %v5298 = vshrl.u32 %v5297, 7
    %v5299 = vsub.s32 %v5296, %v5298
    %v5300 = vrot.slane %v5290, %v5299
    %v5302 = vunpack.c.l.s4 1966171168
    %v5303 = vunpack.c.0.s8 %v5302
    %v5304 = vlaneseq
    %v5305 = vshrl.u32 %v5304, 7
    %v5306 = vsub.s32 %v5303, %v5305
    %v5307 = vrot.slane %v5291, %v5306
    %v5309 = vunpack.c.l.s4 1966171168
    %v5310 = vunpack.c.0.s8 %v5309
    %v5311 = vlaneseq
    %v5312 = vshrl.u32 %v5311, 7
    %v5313 = vsub.s32 %v5310, %v5312
    %v5314 = vrot.slane %v5292, %v5313
    %v5316 = vunpack.c.l.s4 1966171168
    %v5317 = vunpack.c.0.s8 %v5316
    %v5318 = vlaneseq
    %v5319 = vshrl.u32 %v5318, 7
    %v5320 = vsub.s32 %v5317, %v5319
    %v5321 = vrot.slane %v5293, %v5320
    %v5322 = vcombine.low %v5300, %v5307
    %v5323 = vcombine.low %v5314, %v5321
    %v5325 = vunpack.c.l.s4 1966171168
    %v5326 = vunpack.c.0.s8 %v5325
    %v5327 = vlaneseq
    %v5328 = vshrl.u32 %v5327, 7
    %v5329 = vsub.s32 %v5326, %v5328
    %v5330 = vrot.slane %v5322, %v5329
    %v5332 = vunpack.c.l.s4 1966171168
    %v5333 = vunpack.c.0.s8 %v5332
    %v5334 = vlaneseq
    %v5335 = vshrl.u32 %v5334, 7
    %v5336 = vsub.s32 %v5333, %v5335
    %v5337 = vrot.slane %v5323, %v5336
    %v5338 = vcombine.low %v5330, %v5337
    %v5339 = vcombine.low %v2699, %v2703
    %v5340 = vcombine.low %v2707, %v2711
    %v5341 = vcombine.low %v2715, %v2719
    %v5342 = vcombine.low %v2723, %v2727
    %v5344 = vunpack.c.l.s4 1966171168
    %v5345 = vunpack.c.0.s8 %v5344
    %v5346 = vlaneseq
    %v5347 = vshrl.u32 %v5346, 7
    %v5348 = vsub.s32 %v5345, %v5347
    %v5349 = vrot.slane %v5339, %v5348
    %v5351 = vunpack.c.l.s4 1966171168
    %v5352 = vunpack.c.0.s8 %v5351
    %v5353 = vlaneseq
    %v5354 = vshrl.u32 %v5353, 7
    %v5355 = vsub.s32 %v5352, %v5354
    %v5356 = vrot.slane %v5340, %v5355
    %v5358 = vunpack.c.l.s4 1966171168
    %v5359 = vunpack.c.0.s8 %v5358
    %v5360 = vlaneseq
    %v5361 = vshrl.u32 %v5360, 7
    %v5362 = vsub.s32 %v5359, %v5361
    %v5363 = vrot.slane %v5341, %v5362
    %v5365 = vunpack.c.l.s4 1966171168
    %v5366 = vunpack.c.0.s8 %v5365
    %v5367 = vlaneseq
    %v5368 = vshrl.u32 %v5367, 7
    %v5369 = vsub.s32 %v5366, %v5368
    %v5370 = vrot.slane %v5342, %v5369
    %v5371 = vcombine.low %v5349, %v5356
    %v5372 = vcombine.low %v5363, %v5370
    %v5374 = vunpack.c.l.s4 1966171168
    %v5375 = vunpack.c.0.s8 %v5374
    %v5376 = vlaneseq
    %v5377 = vshrl.u32 %v5376, 7
    %v5378 = vsub.s32 %v5375, %v5377
    %v5379 = vrot.slane %v5371, %v5378
    %v5381 = vunpack.c.l.s4 1966171168
    %v5382 = vunpack.c.0.s8 %v5381
    %v5383 = vlaneseq
    %v5384 = vshrl.u32 %v5383, 7
    %v5385 = vsub.s32 %v5382, %v5384
    %v5386 = vrot.slane %v5372, %v5385
    %v5387 = vcombine.low %v5379, %v5386
    %v5388 = vcombine.low %v2731, %v2735
    %v5389 = vcombine.low %v2739, %v2743
    %v5390 = vcombine.low %v2747, %v2751
    %v5391 = vcombine.low %v2755, %v2759
    %v5393 = vunpack.c.l.s4 1966171168
    %v5394 = vunpack.c.0.s8 %v5393
    %v5395 = vlaneseq
    %v5396 = vshrl.u32 %v5395, 7
    %v5397 = vsub.s32 %v5394, %v5396
    %v5398 = vrot.slane %v5388, %v5397
    %v5400 = vunpack.c.l.s4 1966171168
    %v5401 = vunpack.c.0.s8 %v5400
    %v5402 = vlaneseq
    %v5403 = vshrl.u32 %v5402, 7
    %v5404 = vsub.s32 %v5401, %v5403
    %v5405 = vrot.slane %v5389, %v5404
    %v5407 = vunpack.c.l.s4 1966171168
    %v5408 = vunpack.c.0.s8 %v5407
    %v5409 = vlaneseq
    %v5410 = vshrl.u32 %v5409, 7
    %v5411 = vsub.s32 %v5408, %v5410
    %v5412 = vrot.slane %v5390, %v5411
    %v5414 = vunpack.c.l.s4 1966171168
    %v5415 = vunpack.c.0.s8 %v5414
    %v5416 = vlaneseq
    %v5417 = vshrl.u32 %v5416, 7
    %v5418 = vsub.s32 %v5415, %v5417
    %v5419 = vrot.slane %v5391, %v5418
    %v5420 = vcombine.low %v5398, %v5405
    %v5421 = vcombine.low %v5412, %v5419
    %v5423 = vunpack.c.l.s4 1966171168
    %v5424 = vunpack.c.0.s8 %v5423
    %v5425 = vlaneseq
    %v5426 = vshrl.u32 %v5425, 7
    %v5427 = vsub.s32 %v5424, %v5426
    %v5428 = vrot.slane %v5420, %v5427
    %v5430 = vunpack.c.l.s4 1966171168
    %v5431 = vunpack.c.0.s8 %v5430
    %v5432 = vlaneseq
    %v5433 = vshrl.u32 %v5432, 7
    %v5434 = vsub.s32 %v5431, %v5433
    %v5435 = vrot.slane %v5421, %v5434
    %v5436 = vcombine.low %v5428, %v5435
    %v5437 = vcombine.low %v2763, %v2767
    %v5438 = vcombine.low %v2771, %v2775
    %v5439 = vcombine.low %v2779, %v2783
    %v5440 = vcombine.low %v2787, %v2791
    %v5442 = vunpack.c.l.s4 1966171168
    %v5443 = vunpack.c.0.s8 %v5442
    %v5444 = vlaneseq
    %v5445 = vshrl.u32 %v5444, 7
    %v5446 = vsub.s32 %v5443, %v5445
    %v5447 = vrot.slane %v5437, %v5446
    %v5449 = vunpack.c.l.s4 1966171168
    %v5450 = vunpack.c.0.s8 %v5449
    %v5451 = vlaneseq
    %v5452 = vshrl.u32 %v5451, 7
    %v5453 = vsub.s32 %v5450, %v5452
    %v5454 = vrot.slane %v5438, %v5453
    %v5456 = vunpack.c.l.s4 1966171168
    %v5457 = vunpack.c.0.s8 %v5456
    %v5458 = vlaneseq
    %v5459 = vshrl.u32 %v5458, 7
    %v5460 = vsub.s32 %v5457, %v5459
    %v5461 = vrot.slane %v5439, %v5460
    %v5463 = vunpack.c.l.s4 1966171168
    %v5464 = vunpack.c.0.s8 %v5463
    %v5465 = vlaneseq
    %v5466 = vshrl.u32 %v5465, 7
    %v5467 = vsub.s32 %v5464, %v5466
    %v5468 = vrot.slane %v5440, %v5467
    %v5469 = vcombine.low %v5447, %v5454
    %v5470 = vcombine.low %v5461, %v5468
    %v5472 = vunpack.c.l.s4 1966171168
    %v5473 = vunpack.c.0.s8 %v5472
    %v5474 = vlaneseq
    %v5475 = vshrl.u32 %v5474, 7
    %v5476 = vsub.s32 %v5473, %v5475
    %v5477 = vrot.slane %v5469, %v5476
    %v5479 = vunpack.c.l.s4 1966171168
    %v5480 = vunpack.c.0.s8 %v5479
    %v5481 = vlaneseq
    %v5482 = vshrl.u32 %v5481, 7
    %v5483 = vsub.s32 %v5480, %v5482
    %v5484 = vrot.slane %v5470, %v5483
    %v5485 = vcombine.low %v5477, %v5484
    %v5486 = vcombine.low %v2795, %v2799
    %v5487 = vcombine.low %v2803, %v2807
    %v5488 = vcombine.low %v2811, %v2815
    %v5489 = vcombine.low %v2819, %v2823
    %v5491 = vunpack.c.l.s4 1966171168
    %v5492 = vunpack.c.0.s8 %v5491
    %v5493 = vlaneseq
    %v5494 = vshrl.u32 %v5493, 7
    %v5495 = vsub.s32 %v5492, %v5494
    %v5496 = vrot.slane %v5486, %v5495
    %v5498 = vunpack.c.l.s4 1966171168
    %v5499 = vunpack.c.0.s8 %v5498
    %v5500 = vlaneseq
    %v5501 = vshrl.u32 %v5500, 7
    %v5502 = vsub.s32 %v5499, %v5501
    %v5503 = vrot.slane %v5487, %v5502
    %v5505 = vunpack.c.l.s4 1966171168
    %v5506 = vunpack.c.0.s8 %v5505
    %v5507 = vlaneseq
    %v5508 = vshrl.u32 %v5507, 7
    %v5509 = vsub.s32 %v5506, %v5508
    %v5510 = vrot.slane %v5488, %v5509
    %v5512 = vunpack.c.l.s4 1966171168
    %v5513 = vunpack.c.0.s8 %v5512
    %v5514 = vlaneseq
    %v5515 = vshrl.u32 %v5514, 7
    %v5516 = vsub.s32 %v5513, %v5515
    %v5517 = vrot.slane %v5489, %v5516
    %v5518 = vcombine.low %v5496, %v5503
    %v5519 = vcombine.low %v5510, %v5517
    %v5521 = vunpack.c.l.s4 1966171168
    %v5522 = vunpack.c.0.s8 %v5521
    %v5523 = vlaneseq
    %v5524 = vshrl.u32 %v5523, 7
    %v5525 = vsub.s32 %v5522, %v5524
    %v5526 = vrot.slane %v5518, %v5525
    %v5528 = vunpack.c.l.s4 1966171168
    %v5529 = vunpack.c.0.s8 %v5528
    %v5530 = vlaneseq
    %v5531 = vshrl.u32 %v5530, 7
    %v5532 = vsub.s32 %v5529, %v5531
    %v5533 = vrot.slane %v5519, %v5532
    %v5534 = vcombine.low %v5526, %v5533
    %v5535 = vcombine.low %v2827, %v2831
    %v5536 = vcombine.low %v2835, %v2839
    %v5537 = vcombine.low %v2843, %v2847
    %v5538 = vcombine.low %v2851, %v2855
    %v5540 = vunpack.c.l.s4 1966171168
    %v5541 = vunpack.c.0.s8 %v5540
    %v5542 = vlaneseq
    %v5543 = vshrl.u32 %v5542, 7
    %v5544 = vsub.s32 %v5541, %v5543
    %v5545 = vrot.slane %v5535, %v5544
    %v5547 = vunpack.c.l.s4 1966171168
    %v5548 = vunpack.c.0.s8 %v5547
    %v5549 = vlaneseq
    %v5550 = vshrl.u32 %v5549, 7
    %v5551 = vsub.s32 %v5548, %v5550
    %v5552 = vrot.slane %v5536, %v5551
    %v5554 = vunpack.c.l.s4 1966171168
    %v5555 = vunpack.c.0.s8 %v5554
    %v5556 = vlaneseq
    %v5557 = vshrl.u32 %v5556, 7
    %v5558 = vsub.s32 %v5555, %v5557
    %v5559 = vrot.slane %v5537, %v5558
    %v5561 = vunpack.c.l.s4 1966171168
    %v5562 = vunpack.c.0.s8 %v5561
    %v5563 = vlaneseq
    %v5564 = vshrl.u32 %v5563, 7
    %v5565 = vsub.s32 %v5562, %v5564
    %v5566 = vrot.slane %v5538, %v5565
    %v5567 = vcombine.low %v5545, %v5552
    %v5568 = vcombine.low %v5559, %v5566
    %v5570 = vunpack.c.l.s4 1966171168
    %v5571 = vunpack.c.0.s8 %v5570
    %v5572 = vlaneseq
    %v5573 = vshrl.u32 %v5572, 7
    %v5574 = vsub.s32 %v5571, %v5573
    %v5575 = vrot.slane %v5567, %v5574
    %v5577 = vunpack.c.l.s4 1966171168
    %v5578 = vunpack.c.0.s8 %v5577
    %v5579 = vlaneseq
    %v5580 = vshrl.u32 %v5579, 7
    %v5581 = vsub.s32 %v5578, %v5580
    %v5582 = vrot.slane %v5568, %v5581
    %v5583 = vcombine.low %v5575, %v5582
    %v5584 = vcombine.low %v2859, %v2863
    %v5585 = vcombine.low %v2867, %v2871
    %v5586 = vcombine.low %v2875, %v2879
    %v5587 = vcombine.low %v2883, %v2887
    %v5589 = vunpack.c.l.s4 1966171168
    %v5590 = vunpack.c.0.s8 %v5589
    %v5591 = vlaneseq
    %v5592 = vshrl.u32 %v5591, 7
    %v5593 = vsub.s32 %v5590, %v5592
    %v5594 = vrot.slane %v5584, %v5593
    %v5596 = vunpack.c.l.s4 1966171168
    %v5597 = vunpack.c.0.s8 %v5596
    %v5598 = vlaneseq
    %v5599 = vshrl.u32 %v5598, 7
    %v5600 = vsub.s32 %v5597, %v5599
    %v5601 = vrot.slane %v5585, %v5600
    %v5603 = vunpack.c.l.s4 1966171168
    %v5604 = vunpack.c.0.s8 %v5603
    %v5605 = vlaneseq
    %v5606 = vshrl.u32 %v5605, 7
    %v5607 = vsub.s32 %v5604, %v5606
    %v5608 = vrot.slane %v5586, %v5607
    %v5610 = vunpack.c.l.s4 1966171168
    %v5611 = vunpack.c.0.s8 %v5610
    %v5612 = vlaneseq
    %v5613 = vshrl.u32 %v5612, 7
    %v5614 = vsub.s32 %v5611, %v5613
    %v5615 = vrot.slane %v5587, %v5614
    %v5616 = vcombine.low %v5594, %v5601
    %v5617 = vcombine.low %v5608, %v5615
    %v5619 = vunpack.c.l.s4 1966171168
    %v5620 = vunpack.c.0.s8 %v5619
    %v5621 = vlaneseq
    %v5622 = vshrl.u32 %v5621, 7
    %v5623 = vsub.s32 %v5620, %v5622
    %v5624 = vrot.slane %v5616, %v5623
    %v5626 = vunpack.c.l.s4 1966171168
    %v5627 = vunpack.c.0.s8 %v5626
    %v5628 = vlaneseq
    %v5629 = vshrl.u32 %v5628, 7
    %v5630 = vsub.s32 %v5627, %v5629
    %v5631 = vrot.slane %v5617, %v5630
    %v5632 = vcombine.low %v5624, %v5631
    %v5633 = vcombine.low %v2891, %v2895
    %v5634 = vcombine.low %v2899, %v2903
    %v5635 = vcombine.low %v2907, %v2911
    %v5636 = vcombine.low %v2915, %v2919
    %v5638 = vunpack.c.l.s4 1966171168
    %v5639 = vunpack.c.0.s8 %v5638
    %v5640 = vlaneseq
    %v5641 = vshrl.u32 %v5640, 7
    %v5642 = vsub.s32 %v5639, %v5641
    %v5643 = vrot.slane %v5633, %v5642
    %v5645 = vunpack.c.l.s4 1966171168
    %v5646 = vunpack.c.0.s8 %v5645
    %v5647 = vlaneseq
    %v5648 = vshrl.u32 %v5647, 7
    %v5649 = vsub.s32 %v5646, %v5648
    %v5650 = vrot.slane %v5634, %v5649
    %v5652 = vunpack.c.l.s4 1966171168
    %v5653 = vunpack.c.0.s8 %v5652
    %v5654 = vlaneseq
    %v5655 = vshrl.u32 %v5654, 7
    %v5656 = vsub.s32 %v5653, %v5655
    %v5657 = vrot.slane %v5635, %v5656
    %v5659 = vunpack.c.l.s4 1966171168
    %v5660 = vunpack.c.0.s8 %v5659
    %v5661 = vlaneseq
    %v5662 = vshrl.u32 %v5661, 7
    %v5663 = vsub.s32 %v5660, %v5662
    %v5664 = vrot.slane %v5636, %v5663
    %v5665 = vcombine.low %v5643, %v5650
    %v5666 = vcombine.low %v5657, %v5664
    %v5668 = vunpack.c.l.s4 1966171168
    %v5669 = vunpack.c.0.s8 %v5668
    %v5670 = vlaneseq
    %v5671 = vshrl.u32 %v5670, 7
    %v5672 = vsub.s32 %v5669, %v5671
    %v5673 = vrot.slane %v5665, %v5672
    %v5675 = vunpack.c.l.s4 1966171168
    %v5676 = vunpack.c.0.s8 %v5675
    %v5677 = vlaneseq
    %v5678 = vshrl.u32 %v5677, 7
    %v5679 = vsub.s32 %v5676, %v5678
    %v5680 = vrot.slane %v5666, %v5679
    %v5681 = vcombine.low %v5673, %v5680
    %v5682 = vcombine.low %v2923, %v2927
    %v5683 = vcombine.low %v2931, %v2935
    %v5684 = vcombine.low %v2939, %v2943
    %v5685 = vcombine.low %v2947, %v2951
    %v5687 = vunpack.c.l.s4 1966171168
    %v5688 = vunpack.c.0.s8 %v5687
    %v5689 = vlaneseq
    %v5690 = vshrl.u32 %v5689, 7
    %v5691 = vsub.s32 %v5688, %v5690
    %v5692 = vrot.slane %v5682, %v5691
    %v5694 = vunpack.c.l.s4 1966171168
    %v5695 = vunpack.c.0.s8 %v5694
    %v5696 = vlaneseq
    %v5697 = vshrl.u32 %v5696, 7
    %v5698 = vsub.s32 %v5695, %v5697
    %v5699 = vrot.slane %v5683, %v5698
    %v5701 = vunpack.c.l.s4 1966171168
    %v5702 = vunpack.c.0.s8 %v5701
    %v5703 = vlaneseq
    %v5704 = vshrl.u32 %v5703, 7
    %v5705 = vsub.s32 %v5702, %v5704
    %v5706 = vrot.slane %v5684, %v5705
    %v5708 = vunpack.c.l.s4 1966171168
    %v5709 = vunpack.c.0.s8 %v5708
    %v5710 = vlaneseq
    %v5711 = vshrl.u32 %v5710, 7
    %v5712 = vsub.s32 %v5709, %v5711
    %v5713 = vrot.slane %v5685, %v5712
    %v5714 = vcombine.low %v5692, %v5699
    %v5715 = vcombine.low %v5706, %v5713
    %v5717 = vunpack.c.l.s4 1966171168
    %v5718 = vunpack.c.0.s8 %v5717
    %v5719 = vlaneseq
    %v5720 = vshrl.u32 %v5719, 7
    %v5721 = vsub.s32 %v5718, %v5720
    %v5722 = vrot.slane %v5714, %v5721
    %v5724 = vunpack.c.l.s4 1966171168
    %v5725 = vunpack.c.0.s8 %v5724
    %v5726 = vlaneseq
    %v5727 = vshrl.u32 %v5726, 7
    %v5728 = vsub.s32 %v5725, %v5727
    %v5729 = vrot.slane %v5715, %v5728
    %v5730 = vcombine.low %v5722, %v5729
    %v5731 = vcombine.low %v2955, %v2959
    %v5732 = vcombine.low %v2963, %v2967
    %v5733 = vcombine.low %v2971, %v2975
    %v5734 = vcombine.low %v2979, %v2983
    %v5736 = vunpack.c.l.s4 1966171168
    %v5737 = vunpack.c.0.s8 %v5736
    %v5738 = vlaneseq
    %v5739 = vshrl.u32 %v5738, 7
    %v5740 = vsub.s32 %v5737, %v5739
    %v5741 = vrot.slane %v5731, %v5740
    %v5743 = vunpack.c.l.s4 1966171168
    %v5744 = vunpack.c.0.s8 %v5743
    %v5745 = vlaneseq
    %v5746 = vshrl.u32 %v5745, 7
    %v5747 = vsub.s32 %v5744, %v5746
    %v5748 = vrot.slane %v5732, %v5747
    %v5750 = vunpack.c.l.s4 1966171168
    %v5751 = vunpack.c.0.s8 %v5750
    %v5752 = vlaneseq
    %v5753 = vshrl.u32 %v5752, 7
    %v5754 = vsub.s32 %v5751, %v5753
    %v5755 = vrot.slane %v5733, %v5754
    %v5757 = vunpack.c.l.s4 1966171168
    %v5758 = vunpack.c.0.s8 %v5757
    %v5759 = vlaneseq
    %v5760 = vshrl.u32 %v5759, 7
    %v5761 = vsub.s32 %v5758, %v5760
    %v5762 = vrot.slane %v5734, %v5761
    %v5763 = vcombine.low %v5741, %v5748
    %v5764 = vcombine.low %v5755, %v5762
    %v5766 = vunpack.c.l.s4 1966171168
    %v5767 = vunpack.c.0.s8 %v5766
    %v5768 = vlaneseq
    %v5769 = vshrl.u32 %v5768, 7
    %v5770 = vsub.s32 %v5767, %v5769
    %v5771 = vrot.slane %v5763, %v5770
    %v5773 = vunpack.c.l.s4 1966171168
    %v5774 = vunpack.c.0.s8 %v5773
    %v5775 = vlaneseq
    %v5776 = vshrl.u32 %v5775, 7
    %v5777 = vsub.s32 %v5774, %v5776
    %v5778 = vrot.slane %v5764, %v5777
    %v5779 = vcombine.low %v5771, %v5778
    %v5780 = vcombine.low %v2987, %v2991
    %v5781 = vcombine.low %v2995, %v2999
    %v5782 = vcombine.low %v3003, %v3007
    %v5783 = vcombine.low %v3011, %v3015
    %v5785 = vunpack.c.l.s4 1966171168
    %v5786 = vunpack.c.0.s8 %v5785
    %v5787 = vlaneseq
    %v5788 = vshrl.u32 %v5787, 7
    %v5789 = vsub.s32 %v5786, %v5788
    %v5790 = vrot.slane %v5780, %v5789
    %v5792 = vunpack.c.l.s4 1966171168
    %v5793 = vunpack.c.0.s8 %v5792
    %v5794 = vlaneseq
    %v5795 = vshrl.u32 %v5794, 7
    %v5796 = vsub.s32 %v5793, %v5795
    %v5797 = vrot.slane %v5781, %v5796
    %v5799 = vunpack.c.l.s4 1966171168
    %v5800 = vunpack.c.0.s8 %v5799
    %v5801 = vlaneseq
    %v5802 = vshrl.u32 %v5801, 7
    %v5803 = vsub.s32 %v5800, %v5802
    %v5804 = vrot.slane %v5782, %v5803
    %v5806 = vunpack.c.l.s4 1966171168
    %v5807 = vunpack.c.0.s8 %v5806
    %v5808 = vlaneseq
    %v5809 = vshrl.u32 %v5808, 7
    %v5810 = vsub.s32 %v5807, %v5809
    %v5811 = vrot.slane %v5783, %v5810
    %v5812 = vcombine.low %v5790, %v5797
    %v5813 = vcombine.low %v5804, %v5811
    %v5815 = vunpack.c.l.s4 1966171168
    %v5816 = vunpack.c.0.s8 %v5815
    %v5817 = vlaneseq
    %v5818 = vshrl.u32 %v5817, 7
    %v5819 = vsub.s32 %v5816, %v5818
    %v5820 = vrot.slane %v5812, %v5819
    %v5822 = vunpack.c.l.s4 1966171168
    %v5823 = vunpack.c.0.s8 %v5822
    %v5824 = vlaneseq
    %v5825 = vshrl.u32 %v5824, 7
    %v5826 = vsub.s32 %v5823, %v5825
    %v5827 = vrot.slane %v5813, %v5826
    %v5828 = vcombine.low %v5820, %v5827
    %v5829 = vcombine.low %v3019, %v3023
    %v5830 = vcombine.low %v3027, %v3031
    %v5831 = vcombine.low %v3035, %v3039
    %v5832 = vcombine.low %v3043, %v3047
    %v5834 = vunpack.c.l.s4 1966171168
    %v5835 = vunpack.c.0.s8 %v5834
    %v5836 = vlaneseq
    %v5837 = vshrl.u32 %v5836, 7
    %v5838 = vsub.s32 %v5835, %v5837
    %v5839 = vrot.slane %v5829, %v5838
    %v5841 = vunpack.c.l.s4 1966171168
    %v5842 = vunpack.c.0.s8 %v5841
    %v5843 = vlaneseq
    %v5844 = vshrl.u32 %v5843, 7
    %v5845 = vsub.s32 %v5842, %v5844
    %v5846 = vrot.slane %v5830, %v5845
    %v5848 = vunpack.c.l.s4 1966171168
    %v5849 = vunpack.c.0.s8 %v5848
    %v5850 = vlaneseq
    %v5851 = vshrl.u32 %v5850, 7
    %v5852 = vsub.s32 %v5849, %v5851
    %v5853 = vrot.slane %v5831, %v5852
    %v5855 = vunpack.c.l.s4 1966171168
    %v5856 = vunpack.c.0.s8 %v5855
    %v5857 = vlaneseq
    %v5858 = vshrl.u32 %v5857, 7
    %v5859 = vsub.s32 %v5856, %v5858
    %v5860 = vrot.slane %v5832, %v5859
    %v5861 = vcombine.low %v5839, %v5846
    %v5862 = vcombine.low %v5853, %v5860
    %v5864 = vunpack.c.l.s4 1966171168
    %v5865 = vunpack.c.0.s8 %v5864
    %v5866 = vlaneseq
    %v5867 = vshrl.u32 %v5866, 7
    %v5868 = vsub.s32 %v5865, %v5867
    %v5869 = vrot.slane %v5861, %v5868
    %v5871 = vunpack.c.l.s4 1966171168
    %v5872 = vunpack.c.0.s8 %v5871
    %v5873 = vlaneseq
    %v5874 = vshrl.u32 %v5873, 7
    %v5875 = vsub.s32 %v5872, %v5874
    %v5876 = vrot.slane %v5862, %v5875
    %v5877 = vcombine.low %v5869, %v5876
    %v5878 = vcombine.low %v3051, %v3055
    %v5879 = vcombine.low %v3059, %v3063
    %v5880 = vcombine.low %v3067, %v3071
    %v5881 = vcombine.low %v3075, %v3079
    %v5883 = vunpack.c.l.s4 1966171168
    %v5884 = vunpack.c.0.s8 %v5883
    %v5885 = vlaneseq
    %v5886 = vshrl.u32 %v5885, 7
    %v5887 = vsub.s32 %v5884, %v5886
    %v5888 = vrot.slane %v5878, %v5887
    %v5890 = vunpack.c.l.s4 1966171168
    %v5891 = vunpack.c.0.s8 %v5890
    %v5892 = vlaneseq
    %v5893 = vshrl.u32 %v5892, 7
    %v5894 = vsub.s32 %v5891, %v5893
    %v5895 = vrot.slane %v5879, %v5894
    %v5897 = vunpack.c.l.s4 1966171168
    %v5898 = vunpack.c.0.s8 %v5897
    %v5899 = vlaneseq
    %v5900 = vshrl.u32 %v5899, 7
    %v5901 = vsub.s32 %v5898, %v5900
    %v5902 = vrot.slane %v5880, %v5901
    %v5904 = vunpack.c.l.s4 1966171168
    %v5905 = vunpack.c.0.s8 %v5904
    %v5906 = vlaneseq
    %v5907 = vshrl.u32 %v5906, 7
    %v5908 = vsub.s32 %v5905, %v5907
    %v5909 = vrot.slane %v5881, %v5908
    %v5910 = vcombine.low %v5888, %v5895
    %v5911 = vcombine.low %v5902, %v5909
    %v5913 = vunpack.c.l.s4 1966171168
    %v5914 = vunpack.c.0.s8 %v5913
    %v5915 = vlaneseq
    %v5916 = vshrl.u32 %v5915, 7
    %v5917 = vsub.s32 %v5914, %v5916
    %v5918 = vrot.slane %v5910, %v5917
    %v5920 = vunpack.c.l.s4 1966171168
    %v5921 = vunpack.c.0.s8 %v5920
    %v5922 = vlaneseq
    %v5923 = vshrl.u32 %v5922, 7
    %v5924 = vsub.s32 %v5921, %v5923
    %v5925 = vrot.slane %v5911, %v5924
    %v5926 = vcombine.low %v5918, %v5925
    %v5927 = vcombine.low %v3083, %v3087
    %v5928 = vcombine.low %v3091, %v3095
    %v5929 = vcombine.low %v3099, %v3103
    %v5930 = vcombine.low %v3107, %v3111
    %v5932 = vunpack.c.l.s4 1966171168
    %v5933 = vunpack.c.0.s8 %v5932
    %v5934 = vlaneseq
    %v5935 = vshrl.u32 %v5934, 7
    %v5936 = vsub.s32 %v5933, %v5935
    %v5937 = vrot.slane %v5927, %v5936
    %v5939 = vunpack.c.l.s4 1966171168
    %v5940 = vunpack.c.0.s8 %v5939
    %v5941 = vlaneseq
    %v5942 = vshrl.u32 %v5941, 7
    %v5943 = vsub.s32 %v5940, %v5942
    %v5944 = vrot.slane %v5928, %v5943
    %v5946 = vunpack.c.l.s4 1966171168
    %v5947 = vunpack.c.0.s8 %v5946
    %v5948 = vlaneseq
    %v5949 = vshrl.u32 %v5948, 7
    %v5950 = vsub.s32 %v5947, %v5949
    %v5951 = vrot.slane %v5929, %v5950
    %v5953 = vunpack.c.l.s4 1966171168
    %v5954 = vunpack.c.0.s8 %v5953
    %v5955 = vlaneseq
    %v5956 = vshrl.u32 %v5955, 7
    %v5957 = vsub.s32 %v5954, %v5956
    %v5958 = vrot.slane %v5930, %v5957
    %v5959 = vcombine.low %v5937, %v5944
    %v5960 = vcombine.low %v5951, %v5958
    %v5962 = vunpack.c.l.s4 1966171168
    %v5963 = vunpack.c.0.s8 %v5962
    %v5964 = vlaneseq
    %v5965 = vshrl.u32 %v5964, 7
    %v5966 = vsub.s32 %v5963, %v5965
    %v5967 = vrot.slane %v5959, %v5966
    %v5969 = vunpack.c.l.s4 1966171168
    %v5970 = vunpack.c.0.s8 %v5969
    %v5971 = vlaneseq
    %v5972 = vshrl.u32 %v5971, 7
    %v5973 = vsub.s32 %v5970, %v5972
    %v5974 = vrot.slane %v5960, %v5973
    %v5975 = vcombine.low %v5967, %v5974
    %v5976 = vcombine.low %v3115, %v3119
    %v5977 = vcombine.low %v3123, %v3127
    %v5978 = vcombine.low %v3131, %v3135
    %v5979 = vcombine.low %v3139, %v3143
    %v5981 = vunpack.c.l.s4 1966171168
    %v5982 = vunpack.c.0.s8 %v5981
    %v5983 = vlaneseq
    %v5984 = vshrl.u32 %v5983, 7
    %v5985 = vsub.s32 %v5982, %v5984
    %v5986 = vrot.slane %v5976, %v5985
    %v5988 = vunpack.c.l.s4 1966171168
    %v5989 = vunpack.c.0.s8 %v5988
    %v5990 = vlaneseq
    %v5991 = vshrl.u32 %v5990, 7
    %v5992 = vsub.s32 %v5989, %v5991
    %v5993 = vrot.slane %v5977, %v5992
    %v5995 = vunpack.c.l.s4 1966171168
    %v5996 = vunpack.c.0.s8 %v5995
    %v5997 = vlaneseq
    %v5998 = vshrl.u32 %v5997, 7
    %v5999 = vsub.s32 %v5996, %v5998
    %v6000 = vrot.slane %v5978, %v5999
    %v6002 = vunpack.c.l.s4 1966171168
    %v6003 = vunpack.c.0.s8 %v6002
    %v6004 = vlaneseq
    %v6005 = vshrl.u32 %v6004, 7
    %v6006 = vsub.s32 %v6003, %v6005
    %v6007 = vrot.slane %v5979, %v6006
    %v6008 = vcombine.low %v5986, %v5993
    %v6009 = vcombine.low %v6000, %v6007
    %v6011 = vunpack.c.l.s4 1966171168
    %v6012 = vunpack.c.0.s8 %v6011
    %v6013 = vlaneseq
    %v6014 = vshrl.u32 %v6013, 7
    %v6015 = vsub.s32 %v6012, %v6014
    %v6016 = vrot.slane %v6008, %v6015
    %v6018 = vunpack.c.l.s4 1966171168
    %v6019 = vunpack.c.0.s8 %v6018
    %v6020 = vlaneseq
    %v6021 = vshrl.u32 %v6020, 7
    %v6022 = vsub.s32 %v6019, %v6021
    %v6023 = vrot.slane %v6009, %v6022
    %v6024 = vcombine.low %v6016, %v6023
    %v6025 = vcombine.low %v3147, %v3151
    %v6026 = vcombine.low %v3155, %v3159
    %v6027 = vcombine.low %v3163, %v3167
    %v6028 = vcombine.low %v3171, %v3175
    %v6030 = vunpack.c.l.s4 1966171168
    %v6031 = vunpack.c.0.s8 %v6030
    %v6032 = vlaneseq
    %v6033 = vshrl.u32 %v6032, 7
    %v6034 = vsub.s32 %v6031, %v6033
    %v6035 = vrot.slane %v6025, %v6034
    %v6037 = vunpack.c.l.s4 1966171168
    %v6038 = vunpack.c.0.s8 %v6037
    %v6039 = vlaneseq
    %v6040 = vshrl.u32 %v6039, 7
    %v6041 = vsub.s32 %v6038, %v6040
    %v6042 = vrot.slane %v6026, %v6041
    %v6044 = vunpack.c.l.s4 1966171168
    %v6045 = vunpack.c.0.s8 %v6044
    %v6046 = vlaneseq
    %v6047 = vshrl.u32 %v6046, 7
    %v6048 = vsub.s32 %v6045, %v6047
    %v6049 = vrot.slane %v6027, %v6048
    %v6051 = vunpack.c.l.s4 1966171168
    %v6052 = vunpack.c.0.s8 %v6051
    %v6053 = vlaneseq
    %v6054 = vshrl.u32 %v6053, 7
    %v6055 = vsub.s32 %v6052, %v6054
    %v6056 = vrot.slane %v6028, %v6055
    %v6057 = vcombine.low %v6035, %v6042
    %v6058 = vcombine.low %v6049, %v6056
    %v6060 = vunpack.c.l.s4 1966171168
    %v6061 = vunpack.c.0.s8 %v6060
    %v6062 = vlaneseq
    %v6063 = vshrl.u32 %v6062, 7
    %v6064 = vsub.s32 %v6061, %v6063
    %v6065 = vrot.slane %v6057, %v6064
    %v6067 = vunpack.c.l.s4 1966171168
    %v6068 = vunpack.c.0.s8 %v6067
    %v6069 = vlaneseq
    %v6070 = vshrl.u32 %v6069, 7
    %v6071 = vsub.s32 %v6068, %v6070
    %v6072 = vrot.slane %v6058, %v6071
    %v6073 = vcombine.low %v6065, %v6072
    %v6074 = vcombine.low %v3179, %v3183
    %v6075 = vcombine.low %v3187, %v3191
    %v6076 = vcombine.low %v3195, %v3199
    %v6077 = vcombine.low %v3203, %v3207
    %v6079 = vunpack.c.l.s4 1966171168
    %v6080 = vunpack.c.0.s8 %v6079
    %v6081 = vlaneseq
    %v6082 = vshrl.u32 %v6081, 7
    %v6083 = vsub.s32 %v6080, %v6082
    %v6084 = vrot.slane %v6074, %v6083
    %v6086 = vunpack.c.l.s4 1966171168
    %v6087 = vunpack.c.0.s8 %v6086
    %v6088 = vlaneseq
    %v6089 = vshrl.u32 %v6088, 7
    %v6090 = vsub.s32 %v6087, %v6089
    %v6091 = vrot.slane %v6075, %v6090
    %v6093 = vunpack.c.l.s4 1966171168
    %v6094 = vunpack.c.0.s8 %v6093
    %v6095 = vlaneseq
    %v6096 = vshrl.u32 %v6095, 7
    %v6097 = vsub.s32 %v6094, %v6096
    %v6098 = vrot.slane %v6076, %v6097
    %v6100 = vunpack.c.l.s4 1966171168
    %v6101 = vunpack.c.0.s8 %v6100
    %v6102 = vlaneseq
    %v6103 = vshrl.u32 %v6102, 7
    %v6104 = vsub.s32 %v6101, %v6103
    %v6105 = vrot.slane %v6077, %v6104
    %v6106 = vcombine.low %v6084, %v6091
    %v6107 = vcombine.low %v6098, %v6105
    %v6109 = vunpack.c.l.s4 1966171168
    %v6110 = vunpack.c.0.s8 %v6109
    %v6111 = vlaneseq
    %v6112 = vshrl.u32 %v6111, 7
    %v6113 = vsub.s32 %v6110, %v6112
    %v6114 = vrot.slane %v6106, %v6113
    %v6116 = vunpack.c.l.s4 1966171168
    %v6117 = vunpack.c.0.s8 %v6116
    %v6118 = vlaneseq
    %v6119 = vshrl.u32 %v6118, 7
    %v6120 = vsub.s32 %v6117, %v6119
    %v6121 = vrot.slane %v6107, %v6120
    %v6122 = vcombine.low %v6114, %v6121
    %v6123 = vcombine.low %v3211, %v3215
    %v6124 = vcombine.low %v3219, %v3223
    %v6125 = vcombine.low %v3227, %v3231
    %v6126 = vcombine.low %v3235, %v3239
    %v6128 = vunpack.c.l.s4 1966171168
    %v6129 = vunpack.c.0.s8 %v6128
    %v6130 = vlaneseq
    %v6131 = vshrl.u32 %v6130, 7
    %v6132 = vsub.s32 %v6129, %v6131
    %v6133 = vrot.slane %v6123, %v6132
    %v6135 = vunpack.c.l.s4 1966171168
    %v6136 = vunpack.c.0.s8 %v6135
    %v6137 = vlaneseq
    %v6138 = vshrl.u32 %v6137, 7
    %v6139 = vsub.s32 %v6136, %v6138
    %v6140 = vrot.slane %v6124, %v6139
    %v6142 = vunpack.c.l.s4 1966171168
    %v6143 = vunpack.c.0.s8 %v6142
    %v6144 = vlaneseq
    %v6145 = vshrl.u32 %v6144, 7
    %v6146 = vsub.s32 %v6143, %v6145
    %v6147 = vrot.slane %v6125, %v6146
    %v6149 = vunpack.c.l.s4 1966171168
    %v6150 = vunpack.c.0.s8 %v6149
    %v6151 = vlaneseq
    %v6152 = vshrl.u32 %v6151, 7
    %v6153 = vsub.s32 %v6150, %v6152
    %v6154 = vrot.slane %v6126, %v6153
    %v6155 = vcombine.low %v6133, %v6140
    %v6156 = vcombine.low %v6147, %v6154
    %v6158 = vunpack.c.l.s4 1966171168
    %v6159 = vunpack.c.0.s8 %v6158
    %v6160 = vlaneseq
    %v6161 = vshrl.u32 %v6160, 7
    %v6162 = vsub.s32 %v6159, %v6161
    %v6163 = vrot.slane %v6155, %v6162
    %v6165 = vunpack.c.l.s4 1966171168
    %v6166 = vunpack.c.0.s8 %v6165
    %v6167 = vlaneseq
    %v6168 = vshrl.u32 %v6167, 7
    %v6169 = vsub.s32 %v6166, %v6168
    %v6170 = vrot.slane %v6156, %v6169
    %v6171 = vcombine.low %v6163, %v6170
    %v6172 = vcombine.low %v3243, %v3247
    %v6173 = vcombine.low %v3251, %v3255
    %v6174 = vcombine.low %v3259, %v3263
    %v6175 = vcombine.low %v3267, %v3271
    %v6177 = vunpack.c.l.s4 1966171168
    %v6178 = vunpack.c.0.s8 %v6177
    %v6179 = vlaneseq
    %v6180 = vshrl.u32 %v6179, 7
    %v6181 = vsub.s32 %v6178, %v6180
    %v6182 = vrot.slane %v6172, %v6181
    %v6184 = vunpack.c.l.s4 1966171168
    %v6185 = vunpack.c.0.s8 %v6184
    %v6186 = vlaneseq
    %v6187 = vshrl.u32 %v6186, 7
    %v6188 = vsub.s32 %v6185, %v6187
    %v6189 = vrot.slane %v6173, %v6188
    %v6191 = vunpack.c.l.s4 1966171168
    %v6192 = vunpack.c.0.s8 %v6191
    %v6193 = vlaneseq
    %v6194 = vshrl.u32 %v6193, 7
    %v6195 = vsub.s32 %v6192, %v6194
    %v6196 = vrot.slane %v6174, %v6195
    %v6198 = vunpack.c.l.s4 1966171168
    %v6199 = vunpack.c.0.s8 %v6198
    %v6200 = vlaneseq
    %v6201 = vshrl.u32 %v6200, 7
    %v6202 = vsub.s32 %v6199, %v6201
    %v6203 = vrot.slane %v6175, %v6202
    %v6204 = vcombine.low %v6182, %v6189
    %v6205 = vcombine.low %v6196, %v6203
    %v6207 = vunpack.c.l.s4 1966171168
    %v6208 = vunpack.c.0.s8 %v6207
    %v6209 = vlaneseq
    %v6210 = vshrl.u32 %v6209, 7
    %v6211 = vsub.s32 %v6208, %v6210
    %v6212 = vrot.slane %v6204, %v6211
    %v6214 = vunpack.c.l.s4 1966171168
    %v6215 = vunpack.c.0.s8 %v6214
    %v6216 = vlaneseq
    %v6217 = vshrl.u32 %v6216, 7
    %v6218 = vsub.s32 %v6215, %v6217
    %v6219 = vrot.slane %v6205, %v6218
    %v6220 = vcombine.low %v6212, %v6219
    %v6221 = vcombine.low %v3275, %v3279
    %v6222 = vcombine.low %v3283, %v3287
    %v6223 = vcombine.low %v3291, %v3295
    %v6224 = vcombine.low %v3299, %v3303
    %v6226 = vunpack.c.l.s4 1966171168
    %v6227 = vunpack.c.0.s8 %v6226
    %v6228 = vlaneseq
    %v6229 = vshrl.u32 %v6228, 7
    %v6230 = vsub.s32 %v6227, %v6229
    %v6231 = vrot.slane %v6221, %v6230
    %v6233 = vunpack.c.l.s4 1966171168
    %v6234 = vunpack.c.0.s8 %v6233
    %v6235 = vlaneseq
    %v6236 = vshrl.u32 %v6235, 7
    %v6237 = vsub.s32 %v6234, %v6236
    %v6238 = vrot.slane %v6222, %v6237
    %v6240 = vunpack.c.l.s4 1966171168
    %v6241 = vunpack.c.0.s8 %v6240
    %v6242 = vlaneseq
    %v6243 = vshrl.u32 %v6242, 7
    %v6244 = vsub.s32 %v6241, %v6243
    %v6245 = vrot.slane %v6223, %v6244
    %v6247 = vunpack.c.l.s4 1966171168
    %v6248 = vunpack.c.0.s8 %v6247
    %v6249 = vlaneseq
    %v6250 = vshrl.u32 %v6249, 7
    %v6251 = vsub.s32 %v6248, %v6250
    %v6252 = vrot.slane %v6224, %v6251
    %v6253 = vcombine.low %v6231, %v6238
    %v6254 = vcombine.low %v6245, %v6252
    %v6256 = vunpack.c.l.s4 1966171168
    %v6257 = vunpack.c.0.s8 %v6256
    %v6258 = vlaneseq
    %v6259 = vshrl.u32 %v6258, 7
    %v6260 = vsub.s32 %v6257, %v6259
    %v6261 = vrot.slane %v6253, %v6260
    %v6263 = vunpack.c.l.s4 1966171168
    %v6264 = vunpack.c.0.s8 %v6263
    %v6265 = vlaneseq
    %v6266 = vshrl.u32 %v6265, 7
    %v6267 = vsub.s32 %v6264, %v6266
    %v6268 = vrot.slane %v6254, %v6267
    %v6269 = vcombine.low %v6261, %v6268
    %v6270 = vcombine.low %v3307, %v3311
    %v6271 = vcombine.low %v3315, %v3319
    %v6272 = vcombine.low %v3323, %v3327
    %v6273 = vcombine.low %v3331, %v3335
    %v6275 = vunpack.c.l.s4 1966171168
    %v6276 = vunpack.c.0.s8 %v6275
    %v6277 = vlaneseq
    %v6278 = vshrl.u32 %v6277, 7
    %v6279 = vsub.s32 %v6276, %v6278
    %v6280 = vrot.slane %v6270, %v6279
    %v6282 = vunpack.c.l.s4 1966171168
    %v6283 = vunpack.c.0.s8 %v6282
    %v6284 = vlaneseq
    %v6285 = vshrl.u32 %v6284, 7
    %v6286 = vsub.s32 %v6283, %v6285
    %v6287 = vrot.slane %v6271, %v6286
    %v6289 = vunpack.c.l.s4 1966171168
    %v6290 = vunpack.c.0.s8 %v6289
    %v6291 = vlaneseq
    %v6292 = vshrl.u32 %v6291, 7
    %v6293 = vsub.s32 %v6290, %v6292
    %v6294 = vrot.slane %v6272, %v6293
    %v6296 = vunpack.c.l.s4 1966171168
    %v6297 = vunpack.c.0.s8 %v6296
    %v6298 = vlaneseq
    %v6299 = vshrl.u32 %v6298, 7
    %v6300 = vsub.s32 %v6297, %v6299
    %v6301 = vrot.slane %v6273, %v6300
    %v6302 = vcombine.low %v6280, %v6287
    %v6303 = vcombine.low %v6294, %v6301
    %v6305 = vunpack.c.l.s4 1966171168
    %v6306 = vunpack.c.0.s8 %v6305
    %v6307 = vlaneseq
    %v6308 = vshrl.u32 %v6307, 7
    %v6309 = vsub.s32 %v6306, %v6308
    %v6310 = vrot.slane %v6302, %v6309
    %v6312 = vunpack.c.l.s4 1966171168
    %v6313 = vunpack.c.0.s8 %v6312
    %v6314 = vlaneseq
    %v6315 = vshrl.u32 %v6314, 7
    %v6316 = vsub.s32 %v6313, %v6315
    %v6317 = vrot.slane %v6303, %v6316
    %v6318 = vcombine.low %v6310, %v6317
    %v6319 = vcombine.low %v3339, %v3343
    %v6320 = vcombine.low %v3347, %v3351
    %v6321 = vcombine.low %v3355, %v3359
    %v6322 = vcombine.low %v3363, %v3367
    %v6324 = vunpack.c.l.s4 1966171168
    %v6325 = vunpack.c.0.s8 %v6324
    %v6326 = vlaneseq
    %v6327 = vshrl.u32 %v6326, 7
    %v6328 = vsub.s32 %v6325, %v6327
    %v6329 = vrot.slane %v6319, %v6328
    %v6331 = vunpack.c.l.s4 1966171168
    %v6332 = vunpack.c.0.s8 %v6331
    %v6333 = vlaneseq
    %v6334 = vshrl.u32 %v6333, 7
    %v6335 = vsub.s32 %v6332, %v6334
    %v6336 = vrot.slane %v6320, %v6335
    %v6338 = vunpack.c.l.s4 1966171168
    %v6339 = vunpack.c.0.s8 %v6338
    %v6340 = vlaneseq
    %v6341 = vshrl.u32 %v6340, 7
    %v6342 = vsub.s32 %v6339, %v6341
    %v6343 = vrot.slane %v6321, %v6342
    %v6345 = vunpack.c.l.s4 1966171168
    %v6346 = vunpack.c.0.s8 %v6345
    %v6347 = vlaneseq
    %v6348 = vshrl.u32 %v6347, 7
    %v6349 = vsub.s32 %v6346, %v6348
    %v6350 = vrot.slane %v6322, %v6349
    %v6351 = vcombine.low %v6329, %v6336
    %v6352 = vcombine.low %v6343, %v6350
    %v6354 = vunpack.c.l.s4 1966171168
    %v6355 = vunpack.c.0.s8 %v6354
    %v6356 = vlaneseq
    %v6357 = vshrl.u32 %v6356, 7
    %v6358 = vsub.s32 %v6355, %v6357
    %v6359 = vrot.slane %v6351, %v6358
    %v6361 = vunpack.c.l.s4 1966171168
    %v6362 = vunpack.c.0.s8 %v6361
    %v6363 = vlaneseq
    %v6364 = vshrl.u32 %v6363, 7
    %v6365 = vsub.s32 %v6362, %v6364
    %v6366 = vrot.slane %v6352, %v6365
    %v6367 = vcombine.low %v6359, %v6366
    %v6368 = vcombine.low %v3371, %v3375
    %v6369 = vcombine.low %v3379, %v3383
    %v6370 = vcombine.low %v3387, %v3391
    %v6371 = vcombine.low %v3395, %v3399
    %v6373 = vunpack.c.l.s4 1966171168
    %v6374 = vunpack.c.0.s8 %v6373
    %v6375 = vlaneseq
    %v6376 = vshrl.u32 %v6375, 7
    %v6377 = vsub.s32 %v6374, %v6376
    %v6378 = vrot.slane %v6368, %v6377
    %v6380 = vunpack.c.l.s4 1966171168
    %v6381 = vunpack.c.0.s8 %v6380
    %v6382 = vlaneseq
    %v6383 = vshrl.u32 %v6382, 7
    %v6384 = vsub.s32 %v6381, %v6383
    %v6385 = vrot.slane %v6369, %v6384
    %v6387 = vunpack.c.l.s4 1966171168
    %v6388 = vunpack.c.0.s8 %v6387
    %v6389 = vlaneseq
    %v6390 = vshrl.u32 %v6389, 7
    %v6391 = vsub.s32 %v6388, %v6390
    %v6392 = vrot.slane %v6370, %v6391
    %v6394 = vunpack.c.l.s4 1966171168
    %v6395 = vunpack.c.0.s8 %v6394
    %v6396 = vlaneseq
    %v6397 = vshrl.u32 %v6396, 7
    %v6398 = vsub.s32 %v6395, %v6397
    %v6399 = vrot.slane %v6371, %v6398
    %v6400 = vcombine.low %v6378, %v6385
    %v6401 = vcombine.low %v6392, %v6399
    %v6403 = vunpack.c.l.s4 1966171168
    %v6404 = vunpack.c.0.s8 %v6403
    %v6405 = vlaneseq
    %v6406 = vshrl.u32 %v6405, 7
    %v6407 = vsub.s32 %v6404, %v6406
    %v6408 = vrot.slane %v6400, %v6407
    %v6410 = vunpack.c.l.s4 1966171168
    %v6411 = vunpack.c.0.s8 %v6410
    %v6412 = vlaneseq
    %v6413 = vshrl.u32 %v6412, 7
    %v6414 = vsub.s32 %v6411, %v6413
    %v6415 = vrot.slane %v6401, %v6414
    %v6416 = vcombine.low %v6408, %v6415
    %v6417 = vcombine.low %v3403, %v3407
    %v6418 = vcombine.low %v3411, %v3415
    %v6419 = vcombine.low %v3419, %v3423
    %v6420 = vcombine.low %v3427, %v3431
    %v6422 = vunpack.c.l.s4 1966171168
    %v6423 = vunpack.c.0.s8 %v6422
    %v6424 = vlaneseq
    %v6425 = vshrl.u32 %v6424, 7
    %v6426 = vsub.s32 %v6423, %v6425
    %v6427 = vrot.slane %v6417, %v6426
    %v6429 = vunpack.c.l.s4 1966171168
    %v6430 = vunpack.c.0.s8 %v6429
    %v6431 = vlaneseq
    %v6432 = vshrl.u32 %v6431, 7
    %v6433 = vsub.s32 %v6430, %v6432
    %v6434 = vrot.slane %v6418, %v6433
    %v6436 = vunpack.c.l.s4 1966171168
    %v6437 = vunpack.c.0.s8 %v6436
    %v6438 = vlaneseq
    %v6439 = vshrl.u32 %v6438, 7
    %v6440 = vsub.s32 %v6437, %v6439
    %v6441 = vrot.slane %v6419, %v6440
    %v6443 = vunpack.c.l.s4 1966171168
    %v6444 = vunpack.c.0.s8 %v6443
    %v6445 = vlaneseq
    %v6446 = vshrl.u32 %v6445, 7
    %v6447 = vsub.s32 %v6444, %v6446
    %v6448 = vrot.slane %v6420, %v6447
    %v6449 = vcombine.low %v6427, %v6434
    %v6450 = vcombine.low %v6441, %v6448
    %v6452 = vunpack.c.l.s4 1966171168
    %v6453 = vunpack.c.0.s8 %v6452
    %v6454 = vlaneseq
    %v6455 = vshrl.u32 %v6454, 7
    %v6456 = vsub.s32 %v6453, %v6455
    %v6457 = vrot.slane %v6449, %v6456
    %v6459 = vunpack.c.l.s4 1966171168
    %v6460 = vunpack.c.0.s8 %v6459
    %v6461 = vlaneseq
    %v6462 = vshrl.u32 %v6461, 7
    %v6463 = vsub.s32 %v6460, %v6462
    %v6464 = vrot.slane %v6450, %v6463
    %v6465 = vcombine.low %v6457, %v6464
    %v6466 = vcombine.low %v3435, %v3439
    %v6467 = vcombine.low %v3443, %v3447
    %v6468 = vcombine.low %v3451, %v3455
    %v6469 = vcombine.low %v3459, %v3463
    %v6471 = vunpack.c.l.s4 1966171168
    %v6472 = vunpack.c.0.s8 %v6471
    %v6473 = vlaneseq
    %v6474 = vshrl.u32 %v6473, 7
    %v6475 = vsub.s32 %v6472, %v6474
    %v6476 = vrot.slane %v6466, %v6475
    %v6478 = vunpack.c.l.s4 1966171168
    %v6479 = vunpack.c.0.s8 %v6478
    %v6480 = vlaneseq
    %v6481 = vshrl.u32 %v6480, 7
    %v6482 = vsub.s32 %v6479, %v6481
    %v6483 = vrot.slane %v6467, %v6482
    %v6485 = vunpack.c.l.s4 1966171168
    %v6486 = vunpack.c.0.s8 %v6485
    %v6487 = vlaneseq
    %v6488 = vshrl.u32 %v6487, 7
    %v6489 = vsub.s32 %v6486, %v6488
    %v6490 = vrot.slane %v6468, %v6489
    %v6492 = vunpack.c.l.s4 1966171168
    %v6493 = vunpack.c.0.s8 %v6492
    %v6494 = vlaneseq
    %v6495 = vshrl.u32 %v6494, 7
    %v6496 = vsub.s32 %v6493, %v6495
    %v6497 = vrot.slane %v6469, %v6496
    %v6498 = vcombine.low %v6476, %v6483
    %v6499 = vcombine.low %v6490, %v6497
    %v6501 = vunpack.c.l.s4 1966171168
    %v6502 = vunpack.c.0.s8 %v6501
    %v6503 = vlaneseq
    %v6504 = vshrl.u32 %v6503, 7
    %v6505 = vsub.s32 %v6502, %v6504
    %v6506 = vrot.slane %v6498, %v6505
    %v6508 = vunpack.c.l.s4 1966171168
    %v6509 = vunpack.c.0.s8 %v6508
    %v6510 = vlaneseq
    %v6511 = vshrl.u32 %v6510, 7
    %v6512 = vsub.s32 %v6509, %v6511
    %v6513 = vrot.slane %v6499, %v6512
    %v6514 = vcombine.low %v6506, %v6513
    %v6515 = vcombine.low %v3467, %v3471
    %v6516 = vcombine.low %v3475, %v3479
    %v6517 = vcombine.low %v3483, %v3487
    %v6518 = vcombine.low %v3491, %v3495
    %v6520 = vunpack.c.l.s4 1966171168
    %v6521 = vunpack.c.0.s8 %v6520
    %v6522 = vlaneseq
    %v6523 = vshrl.u32 %v6522, 7
    %v6524 = vsub.s32 %v6521, %v6523
    %v6525 = vrot.slane %v6515, %v6524
    %v6527 = vunpack.c.l.s4 1966171168
    %v6528 = vunpack.c.0.s8 %v6527
    %v6529 = vlaneseq
    %v6530 = vshrl.u32 %v6529, 7
    %v6531 = vsub.s32 %v6528, %v6530
    %v6532 = vrot.slane %v6516, %v6531
    %v6534 = vunpack.c.l.s4 1966171168
    %v6535 = vunpack.c.0.s8 %v6534
    %v6536 = vlaneseq
    %v6537 = vshrl.u32 %v6536, 7
    %v6538 = vsub.s32 %v6535, %v6537
    %v6539 = vrot.slane %v6517, %v6538
    %v6541 = vunpack.c.l.s4 1966171168
    %v6542 = vunpack.c.0.s8 %v6541
    %v6543 = vlaneseq
    %v6544 = vshrl.u32 %v6543, 7
    %v6545 = vsub.s32 %v6542, %v6544
    %v6546 = vrot.slane %v6518, %v6545
    %v6547 = vcombine.low %v6525, %v6532
    %v6548 = vcombine.low %v6539, %v6546
    %v6550 = vunpack.c.l.s4 1966171168
    %v6551 = vunpack.c.0.s8 %v6550
    %v6552 = vlaneseq
    %v6553 = vshrl.u32 %v6552, 7
    %v6554 = vsub.s32 %v6551, %v6553
    %v6555 = vrot.slane %v6547, %v6554
    %v6557 = vunpack.c.l.s4 1966171168
    %v6558 = vunpack.c.0.s8 %v6557
    %v6559 = vlaneseq
    %v6560 = vshrl.u32 %v6559, 7
    %v6561 = vsub.s32 %v6558, %v6560
    %v6562 = vrot.slane %v6548, %v6561
    %v6563 = vcombine.low %v6555, %v6562
    %v6564 = vcombine.low %v3499, %v3503
    %v6565 = vcombine.low %v3507, %v3511
    %v6566 = vcombine.low %v3515, %v3519
    %v6567 = vcombine.low %v3523, %v3527
    %v6569 = vunpack.c.l.s4 1966171168
    %v6570 = vunpack.c.0.s8 %v6569
    %v6571 = vlaneseq
    %v6572 = vshrl.u32 %v6571, 7
    %v6573 = vsub.s32 %v6570, %v6572
    %v6574 = vrot.slane %v6564, %v6573
    %v6576 = vunpack.c.l.s4 1966171168
    %v6577 = vunpack.c.0.s8 %v6576
    %v6578 = vlaneseq
    %v6579 = vshrl.u32 %v6578, 7
    %v6580 = vsub.s32 %v6577, %v6579
    %v6581 = vrot.slane %v6565, %v6580
    %v6583 = vunpack.c.l.s4 1966171168
    %v6584 = vunpack.c.0.s8 %v6583
    %v6585 = vlaneseq
    %v6586 = vshrl.u32 %v6585, 7
    %v6587 = vsub.s32 %v6584, %v6586
    %v6588 = vrot.slane %v6566, %v6587
    %v6590 = vunpack.c.l.s4 1966171168
    %v6591 = vunpack.c.0.s8 %v6590
    %v6592 = vlaneseq
    %v6593 = vshrl.u32 %v6592, 7
    %v6594 = vsub.s32 %v6591, %v6593
    %v6595 = vrot.slane %v6567, %v6594
    %v6596 = vcombine.low %v6574, %v6581
    %v6597 = vcombine.low %v6588, %v6595
    %v6599 = vunpack.c.l.s4 1966171168
    %v6600 = vunpack.c.0.s8 %v6599
    %v6601 = vlaneseq
    %v6602 = vshrl.u32 %v6601, 7
    %v6603 = vsub.s32 %v6600, %v6602
    %v6604 = vrot.slane %v6596, %v6603
    %v6606 = vunpack.c.l.s4 1966171168
    %v6607 = vunpack.c.0.s8 %v6606
    %v6608 = vlaneseq
    %v6609 = vshrl.u32 %v6608, 7
    %v6610 = vsub.s32 %v6607, %v6609
    %v6611 = vrot.slane %v6597, %v6610
    %v6612 = vcombine.low %v6604, %v6611
    %v6613 = vcombine.low %v3531, %v3535
    %v6614 = vcombine.low %v3539, %v3543
    %v6615 = vcombine.low %v3547, %v3551
    %v6616 = vcombine.low %v3555, %v3559
    %v6618 = vunpack.c.l.s4 1966171168
    %v6619 = vunpack.c.0.s8 %v6618
    %v6620 = vlaneseq
    %v6621 = vshrl.u32 %v6620, 7
    %v6622 = vsub.s32 %v6619, %v6621
    %v6623 = vrot.slane %v6613, %v6622
    %v6625 = vunpack.c.l.s4 1966171168
    %v6626 = vunpack.c.0.s8 %v6625
    %v6627 = vlaneseq
    %v6628 = vshrl.u32 %v6627, 7
    %v6629 = vsub.s32 %v6626, %v6628
    %v6630 = vrot.slane %v6614, %v6629
    %v6632 = vunpack.c.l.s4 1966171168
    %v6633 = vunpack.c.0.s8 %v6632
    %v6634 = vlaneseq
    %v6635 = vshrl.u32 %v6634, 7
    %v6636 = vsub.s32 %v6633, %v6635
    %v6637 = vrot.slane %v6615, %v6636
    %v6639 = vunpack.c.l.s4 1966171168
    %v6640 = vunpack.c.0.s8 %v6639
    %v6641 = vlaneseq
    %v6642 = vshrl.u32 %v6641, 7
    %v6643 = vsub.s32 %v6640, %v6642
    %v6644 = vrot.slane %v6616, %v6643
    %v6645 = vcombine.low %v6623, %v6630
    %v6646 = vcombine.low %v6637, %v6644
    %v6648 = vunpack.c.l.s4 1966171168
    %v6649 = vunpack.c.0.s8 %v6648
    %v6650 = vlaneseq
    %v6651 = vshrl.u32 %v6650, 7
    %v6652 = vsub.s32 %v6649, %v6651
    %v6653 = vrot.slane %v6645, %v6652
    %v6655 = vunpack.c.l.s4 1966171168
    %v6656 = vunpack.c.0.s8 %v6655
    %v6657 = vlaneseq
    %v6658 = vshrl.u32 %v6657, 7
    %v6659 = vsub.s32 %v6656, %v6658
    %v6660 = vrot.slane %v6646, %v6659
    %v6661 = vcombine.low %v6653, %v6660
    %v6662 = vcombine.low %v3563, %v3567
    %v6663 = vcombine.low %v3571, %v3575
    %v6664 = vcombine.low %v3579, %v3583
    %v6665 = vcombine.low %v3587, %v3591
    %v6667 = vunpack.c.l.s4 1966171168
    %v6668 = vunpack.c.0.s8 %v6667
    %v6669 = vlaneseq
    %v6670 = vshrl.u32 %v6669, 7
    %v6671 = vsub.s32 %v6668, %v6670
    %v6672 = vrot.slane %v6662, %v6671
    %v6674 = vunpack.c.l.s4 1966171168
    %v6675 = vunpack.c.0.s8 %v6674
    %v6676 = vlaneseq
    %v6677 = vshrl.u32 %v6676, 7
    %v6678 = vsub.s32 %v6675, %v6677
    %v6679 = vrot.slane %v6663, %v6678
    %v6681 = vunpack.c.l.s4 1966171168
    %v6682 = vunpack.c.0.s8 %v6681
    %v6683 = vlaneseq
    %v6684 = vshrl.u32 %v6683, 7
    %v6685 = vsub.s32 %v6682, %v6684
    %v6686 = vrot.slane %v6664, %v6685
    %v6688 = vunpack.c.l.s4 1966171168
    %v6689 = vunpack.c.0.s8 %v6688
    %v6690 = vlaneseq
    %v6691 = vshrl.u32 %v6690, 7
    %v6692 = vsub.s32 %v6689, %v6691
    %v6693 = vrot.slane %v6665, %v6692
    %v6694 = vcombine.low %v6672, %v6679
    %v6695 = vcombine.low %v6686, %v6693
    %v6697 = vunpack.c.l.s4 1966171168
    %v6698 = vunpack.c.0.s8 %v6697
    %v6699 = vlaneseq
    %v6700 = vshrl.u32 %v6699, 7
    %v6701 = vsub.s32 %v6698, %v6700
    %v6702 = vrot.slane %v6694, %v6701
    %v6704 = vunpack.c.l.s4 1966171168
    %v6705 = vunpack.c.0.s8 %v6704
    %v6706 = vlaneseq
    %v6707 = vshrl.u32 %v6706, 7
    %v6708 = vsub.s32 %v6705, %v6707
    %v6709 = vrot.slane %v6695, %v6708
    %v6710 = vcombine.low %v6702, %v6709
    %v6711 = vcombine.low %v3595, %v3599
    %v6712 = vcombine.low %v3603, %v3607
    %v6713 = vcombine.low %v3611, %v3615
    %v6714 = vcombine.low %v3619, %v3623
    %v6716 = vunpack.c.l.s4 1966171168
    %v6717 = vunpack.c.0.s8 %v6716
    %v6718 = vlaneseq
    %v6719 = vshrl.u32 %v6718, 7
    %v6720 = vsub.s32 %v6717, %v6719
    %v6721 = vrot.slane %v6711, %v6720
    %v6723 = vunpack.c.l.s4 1966171168
    %v6724 = vunpack.c.0.s8 %v6723
    %v6725 = vlaneseq
    %v6726 = vshrl.u32 %v6725, 7
    %v6727 = vsub.s32 %v6724, %v6726
    %v6728 = vrot.slane %v6712, %v6727
    %v6730 = vunpack.c.l.s4 1966171168
    %v6731 = vunpack.c.0.s8 %v6730
    %v6732 = vlaneseq
    %v6733 = vshrl.u32 %v6732, 7
    %v6734 = vsub.s32 %v6731, %v6733
    %v6735 = vrot.slane %v6713, %v6734
    %v6737 = vunpack.c.l.s4 1966171168
    %v6738 = vunpack.c.0.s8 %v6737
    %v6739 = vlaneseq
    %v6740 = vshrl.u32 %v6739, 7
    %v6741 = vsub.s32 %v6738, %v6740
    %v6742 = vrot.slane %v6714, %v6741
    %v6743 = vcombine.low %v6721, %v6728
    %v6744 = vcombine.low %v6735, %v6742
    %v6746 = vunpack.c.l.s4 1966171168
    %v6747 = vunpack.c.0.s8 %v6746
    %v6748 = vlaneseq
    %v6749 = vshrl.u32 %v6748, 7
    %v6750 = vsub.s32 %v6747, %v6749
    %v6751 = vrot.slane %v6743, %v6750
    %v6753 = vunpack.c.l.s4 1966171168
    %v6754 = vunpack.c.0.s8 %v6753
    %v6755 = vlaneseq
    %v6756 = vshrl.u32 %v6755, 7
    %v6757 = vsub.s32 %v6754, %v6756
    %v6758 = vrot.slane %v6744, %v6757
    %v6759 = vcombine.low %v6751, %v6758
    %6760 = vset.pattern.permute.xlu0 0
    %6761 = vperm.xlu0 %6760, %v3672
    %v6762 = vpop.permute.xlu0 %6761
    %6763 = vset.pattern.permute.xlu0 0
    %6764 = vperm.xlu0 %6763, %v3721
    %v6765 = vpop.permute.xlu0 %6764
    %6766 = vset.pattern.permute.xlu0 0
    %6767 = vperm.xlu0 %6766, %v3770
    %v6768 = vpop.permute.xlu0 %6767
    %6769 = vset.pattern.permute.xlu0 0
    %6770 = vperm.xlu0 %6769, %v3819
    %v6771 = vpop.permute.xlu0 %6770
    %6772 = vset.pattern.permute.xlu0 0
    %6773 = vperm.xlu0 %6772, %v3868
    %v6774 = vpop.permute.xlu0 %6773
    %6775 = vset.pattern.permute.xlu0 0
    %6776 = vperm.xlu0 %6775, %v3917
    %v6777 = vpop.permute.xlu0 %6776
    %6778 = vset.pattern.permute.xlu0 0
    %6779 = vperm.xlu0 %6778, %v3966
    %v6780 = vpop.permute.xlu0 %6779
    %6781 = vset.pattern.permute.xlu0 0
    %6782 = vperm.xlu0 %6781, %v4015
    %v6783 = vpop.permute.xlu0 %6782
    %6784 = vset.pattern.permute.xlu0 0
    %6785 = vperm.xlu0 %6784, %v4064
    %v6786 = vpop.permute.xlu0 %6785
    %6787 = vset.pattern.permute.xlu0 0
    %6788 = vperm.xlu0 %6787, %v4113
    %v6789 = vpop.permute.xlu0 %6788
    %6790 = vset.pattern.permute.xlu0 0
    %6791 = vperm.xlu0 %6790, %v4162
    %v6792 = vpop.permute.xlu0 %6791
    %6793 = vset.pattern.permute.xlu0 0
    %6794 = vperm.xlu0 %6793, %v4211
    %v6795 = vpop.permute.xlu0 %6794
    %6796 = vset.pattern.permute.xlu0 0
    %6797 = vperm.xlu0 %6796, %v4260
    %v6798 = vpop.permute.xlu0 %6797
    %6799 = vset.pattern.permute.xlu0 0
    %6800 = vperm.xlu0 %6799, %v4309
    %v6801 = vpop.permute.xlu0 %6800
    %6802 = vset.pattern.permute.xlu0 0
    %6803 = vperm.xlu0 %6802, %v4358
    %v6804 = vpop.permute.xlu0 %6803
    %6805 = vset.pattern.permute.xlu0 0
    %6806 = vperm.xlu0 %6805, %v4407
    %v6807 = vpop.permute.xlu0 %6806
    %6808 = vset.pattern.permute.xlu0 0
    %6809 = vperm.xlu0 %6808, %v4456
    %v6810 = vpop.permute.xlu0 %6809
    %6811 = vset.pattern.permute.xlu0 0
    %6812 = vperm.xlu0 %6811, %v4505
    %v6813 = vpop.permute.xlu0 %6812
    %6814 = vset.pattern.permute.xlu0 0
    %6815 = vperm.xlu0 %6814, %v4554
    %v6816 = vpop.permute.xlu0 %6815
    %6817 = vset.pattern.permute.xlu0 0
    %6818 = vperm.xlu0 %6817, %v4603
    %v6819 = vpop.permute.xlu0 %6818
    %6820 = vset.pattern.permute.xlu0 0
    %6821 = vperm.xlu0 %6820, %v4652
    %v6822 = vpop.permute.xlu0 %6821
    %6823 = vset.pattern.permute.xlu0 0
    %6824 = vperm.xlu0 %6823, %v4701
    %v6825 = vpop.permute.xlu0 %6824
    %6826 = vset.pattern.permute.xlu0 0
    %6827 = vperm.xlu0 %6826, %v4750
    %v6828 = vpop.permute.xlu0 %6827
    %6829 = vset.pattern.permute.xlu0 0
    %6830 = vperm.xlu0 %6829, %v4799
    %v6831 = vpop.permute.xlu0 %6830
    %6832 = vset.pattern.permute.xlu0 0
    %6833 = vperm.xlu0 %6832, %v4848
    %v6834 = vpop.permute.xlu0 %6833
    %6835 = vset.pattern.permute.xlu0 0
    %6836 = vperm.xlu0 %6835, %v4897
    %v6837 = vpop.permute.xlu0 %6836
    %6838 = vset.pattern.permute.xlu0 0
    %6839 = vperm.xlu0 %6838, %v4946
    %v6840 = vpop.permute.xlu0 %6839
    %6841 = vset.pattern.permute.xlu0 0
    %6842 = vperm.xlu0 %6841, %v4995
    %v6843 = vpop.permute.xlu0 %6842
    %6844 = vset.pattern.permute.xlu0 0
    %6845 = vperm.xlu0 %6844, %v5044
    %v6846 = vpop.permute.xlu0 %6845
    %6847 = vset.pattern.permute.xlu0 0
    %6848 = vperm.xlu0 %6847, %v5093
    %v6849 = vpop.permute.xlu0 %6848
    %6850 = vset.pattern.permute.xlu0 0
    %6851 = vperm.xlu0 %6850, %v5142
    %v6852 = vpop.permute.xlu0 %6851
    %6853 = vset.pattern.permute.xlu0 0
    %6854 = vperm.xlu0 %6853, %v5191
    %v6855 = vpop.permute.xlu0 %6854
    %6856 = vset.pattern.permute.xlu0 0
    %6857 = vperm.xlu0 %6856, %v5240
    %v6858 = vpop.permute.xlu0 %6857
    %6859 = vset.pattern.permute.xlu0 0
    %6860 = vperm.xlu0 %6859, %v5289
    %v6861 = vpop.permute.xlu0 %6860
    %6862 = vset.pattern.permute.xlu0 0
    %6863 = vperm.xlu0 %6862, %v5338
    %v6864 = vpop.permute.xlu0 %6863
    %6865 = vset.pattern.permute.xlu0 0
    %6866 = vperm.xlu0 %6865, %v5387
    %v6867 = vpop.permute.xlu0 %6866
    %6868 = vset.pattern.permute.xlu0 0
    %6869 = vperm.xlu0 %6868, %v5436
    %v6870 = vpop.permute.xlu0 %6869
    %6871 = vset.pattern.permute.xlu0 0
    %6872 = vperm.xlu0 %6871, %v5485
    %v6873 = vpop.permute.xlu0 %6872
    %6874 = vset.pattern.permute.xlu0 0
    %6875 = vperm.xlu0 %6874, %v5534
    %v6876 = vpop.permute.xlu0 %6875
    %6877 = vset.pattern.permute.xlu0 0
    %6878 = vperm.xlu0 %6877, %v5583
    %v6879 = vpop.permute.xlu0 %6878
    %6880 = vset.pattern.permute.xlu0 0
    %6881 = vperm.xlu0 %6880, %v5632
    %v6882 = vpop.permute.xlu0 %6881
    %6883 = vset.pattern.permute.xlu0 0
    %6884 = vperm.xlu0 %6883, %v5681
    %v6885 = vpop.permute.xlu0 %6884
    %6886 = vset.pattern.permute.xlu0 0
    %6887 = vperm.xlu0 %6886, %v5730
    %v6888 = vpop.permute.xlu0 %6887
    %6889 = vset.pattern.permute.xlu0 0
    %6890 = vperm.xlu0 %6889, %v5779
    %v6891 = vpop.permute.xlu0 %6890
    %6892 = vset.pattern.permute.xlu0 0
    %6893 = vperm.xlu0 %6892, %v5828
    %v6894 = vpop.permute.xlu0 %6893
    %6895 = vset.pattern.permute.xlu0 0
    %6896 = vperm.xlu0 %6895, %v5877
    %v6897 = vpop.permute.xlu0 %6896
    %6898 = vset.pattern.permute.xlu0 0
    %6899 = vperm.xlu0 %6898, %v5926
    %v6900 = vpop.permute.xlu0 %6899
    %6901 = vset.pattern.permute.xlu0 0
    %6902 = vperm.xlu0 %6901, %v5975
    %v6903 = vpop.permute.xlu0 %6902
    %6904 = vset.pattern.permute.xlu0 0
    %6905 = vperm.xlu0 %6904, %v6024
    %v6906 = vpop.permute.xlu0 %6905
    %6907 = vset.pattern.permute.xlu0 0
    %6908 = vperm.xlu0 %6907, %v6073
    %v6909 = vpop.permute.xlu0 %6908
    %6910 = vset.pattern.permute.xlu0 0
    %6911 = vperm.xlu0 %6910, %v6122
    %v6912 = vpop.permute.xlu0 %6911
    %6913 = vset.pattern.permute.xlu0 0
    %6914 = vperm.xlu0 %6913, %v6171
    %v6915 = vpop.permute.xlu0 %6914
    %6916 = vset.pattern.permute.xlu0 0
    %6917 = vperm.xlu0 %6916, %v6220
    %v6918 = vpop.permute.xlu0 %6917
    %6919 = vset.pattern.permute.xlu0 0
    %6920 = vperm.xlu0 %6919, %v6269
    %v6921 = vpop.permute.xlu0 %6920
    %6922 = vset.pattern.permute.xlu0 0
    %6923 = vperm.xlu0 %6922, %v6318
    %v6924 = vpop.permute.xlu0 %6923
    %6925 = vset.pattern.permute.xlu0 0
    %6926 = vperm.xlu0 %6925, %v6367
    %v6927 = vpop.permute.xlu0 %6926
    %6928 = vset.pattern.permute.xlu0 0
    %6929 = vperm.xlu0 %6928, %v6416
    %v6930 = vpop.permute.xlu0 %6929
    %6931 = vset.pattern.permute.xlu0 0
    %6932 = vperm.xlu0 %6931, %v6465
    %v6933 = vpop.permute.xlu0 %6932
    %6934 = vset.pattern.permute.xlu0 0
    %6935 = vperm.xlu0 %6934, %v6514
    %v6936 = vpop.permute.xlu0 %6935
    %6937 = vset.pattern.permute.xlu0 0
    %6938 = vperm.xlu0 %6937, %v6563
    %v6939 = vpop.permute.xlu0 %6938
    %6940 = vset.pattern.permute.xlu0 0
    %6941 = vperm.xlu0 %6940, %v6612
    %v6942 = vpop.permute.xlu0 %6941
    %6943 = vset.pattern.permute.xlu0 0
    %6944 = vperm.xlu0 %6943, %v6661
    %v6945 = vpop.permute.xlu0 %6944
    %6946 = vset.pattern.permute.xlu0 0
    %6947 = vperm.xlu0 %6946, %v6710
    %v6948 = vpop.permute.xlu0 %6947
    %6949 = vset.pattern.permute.xlu0 0
    %6950 = vperm.xlu0 %6949, %v6759
    %v6951 = vpop.permute.xlu0 %6950
    %v6952 = vlaneseq
    %v6953 = vand.u32 %v6952, 127
    %v6954 = vlaneseq
    %v6955 = vshrl.u32 %v6954, 7
    %v6956 = vsub.s32 %v6953, %v6955
    %v6957 = vrot.slane %v6762, %v6956
    %v6958 = vadd.s32 %v6953, 4294967288
    %v6959 = vlaneseq
    %v6960 = vshrl.u32 %v6959, 7
    %v6961 = vsub.s32 %v6958, %v6960
    %v6962 = vrot.slane %v6765, %v6961
    %vm6963 = vcmask 130112
    %v6964 = vsel %vm6963, %v6962, %v6957
    %v6965 = vadd.s32 %v6953, 4294967280
    %v6966 = vlaneseq
    %v6967 = vshrl.u32 %v6966, 7
    %v6968 = vsub.s32 %v6965, %v6967
    %v6969 = vrot.slane %v6768, %v6968
    %vm6970 = vcmask 195712
    %v6971 = vsel %vm6970, %v6969, %v6964
    %v6972 = vadd.s32 %v6953, 4294967272
    %v6973 = vlaneseq
    %v6974 = vshrl.u32 %v6973, 7
    %v6975 = vsub.s32 %v6972, %v6974
    %v6976 = vrot.slane %v6771, %v6975
    %vm6977 = vcmask 261312
    %v6978 = vsel %vm6977, %v6976, %v6971
    %v6979 = vadd.s32 %v6953, 4294967264
    %v6980 = vlaneseq
    %v6981 = vshrl.u32 %v6980, 7
    %v6982 = vsub.s32 %v6979, %v6981
    %v6983 = vrot.slane %v6774, %v6982
    %vm6984 = vcmask 326912
    %v6985 = vsel %vm6984, %v6983, %v6978
    %v6986 = vadd.s32 %v6953, 4294967256
    %v6987 = vlaneseq
    %v6988 = vshrl.u32 %v6987, 7
    %v6989 = vsub.s32 %v6986, %v6988
    %v6990 = vrot.slane %v6777, %v6989
    %vm6991 = vcmask 392512
    %v6992 = vsel %vm6991, %v6990, %v6985
    %v6993 = vadd.s32 %v6953, 4294967248
    %v6994 = vlaneseq
    %v6995 = vshrl.u32 %v6994, 7
    %v6996 = vsub.s32 %v6993, %v6995
    %v6997 = vrot.slane %v6780, %v6996
    %vm6998 = vcmask 458112
    %v6999 = vsel %vm6998, %v6997, %v6992
    %v7000 = vadd.s32 %v6953, 4294967240
    %v7001 = vlaneseq
    %v7002 = vshrl.u32 %v7001, 7
    %v7003 = vsub.s32 %v7000, %v7002
    %v7004 = vrot.slane %v6783, %v7003
    %vm7005 = vcmask 523712
    %v7006 = vsel %vm7005, %v7004, %v6999
    %v7007 = vadd.s32 %v6953, 4294967232
    %v7008 = vlaneseq
    %v7009 = vshrl.u32 %v7008, 7
    %v7010 = vsub.s32 %v7007, %v7009
    %v7011 = vrot.slane %v6786, %v7010
    %vm7012 = vcmask 589312
    %v7013 = vsel %vm7012, %v7011, %v7006
    %v7014 = vadd.s32 %v6953, 4294967224
    %v7015 = vlaneseq
    %v7016 = vshrl.u32 %v7015, 7
    %v7017 = vsub.s32 %v7014, %v7016
    %v7018 = vrot.slane %v6789, %v7017
    %vm7019 = vcmask 654912
    %v7020 = vsel %vm7019, %v7018, %v7013
    %v7021 = vadd.s32 %v6953, 4294967216
    %v7022 = vlaneseq
    %v7023 = vshrl.u32 %v7022, 7
    %v7024 = vsub.s32 %v7021, %v7023
    %v7025 = vrot.slane %v6792, %v7024
    %vm7026 = vcmask 720512
    %v7027 = vsel %vm7026, %v7025, %v7020
    %v7028 = vadd.s32 %v6953, 4294967208
    %v7029 = vlaneseq
    %v7030 = vshrl.u32 %v7029, 7
    %v7031 = vsub.s32 %v7028, %v7030
    %v7032 = vrot.slane %v6795, %v7031
    %vm7033 = vcmask 786112
    %v7034 = vsel %vm7033, %v7032, %v7027
    %v7035 = vadd.s32 %v6953, 4294967200
    %v7036 = vlaneseq
    %v7037 = vshrl.u32 %v7036, 7
    %v7038 = vsub.s32 %v7035, %v7037
    %v7039 = vrot.slane %v6798, %v7038
    %vm7040 = vcmask 851712
    %v7041 = vsel %vm7040, %v7039, %v7034
    %v7042 = vadd.s32 %v6953, 4294967192
    %v7043 = vlaneseq
    %v7044 = vshrl.u32 %v7043, 7
    %v7045 = vsub.s32 %v7042, %v7044
    %v7046 = vrot.slane %v6801, %v7045
    %vm7047 = vcmask 917312
    %v7048 = vsel %vm7047, %v7046, %v7041
    %v7049 = vadd.s32 %v6953, 4294967184
    %v7050 = vlaneseq
    %v7051 = vshrl.u32 %v7050, 7
    %v7052 = vsub.s32 %v7049, %v7051
    %v7053 = vrot.slane %v6804, %v7052
    %vm7054 = vcmask 982912
    %v7055 = vsel %vm7054, %v7053, %v7048
    %v7056 = vadd.s32 %v6953, 4294967176
    %v7057 = vlaneseq
    %v7058 = vshrl.u32 %v7057, 7
    %v7059 = vsub.s32 %v7056, %v7058
    %v7060 = vrot.slane %v6807, %v7059
    %vm7061 = vcmask 1048512
    %v7062 = vsel %vm7061, %v7060, %v7055
    %v7063 = vlaneseq
    %v7064 = vshrl.u32 %v7063, 7
    %v7065 = vsub.s32 %v6953, %v7064
    %v7066 = vrot.slane %v6810, %v7065
    %v7067 = vlaneseq
    %v7068 = vshrl.u32 %v7067, 7
    %v7069 = vsub.s32 %v6958, %v7068
    %v7070 = vrot.slane %v6813, %v7069
    %v7071 = vsel %vm6963, %v7070, %v7066
    %v7072 = vlaneseq
    %v7073 = vshrl.u32 %v7072, 7
    %v7074 = vsub.s32 %v6965, %v7073
    %v7075 = vrot.slane %v6816, %v7074
    %v7076 = vsel %vm6970, %v7075, %v7071
    %v7077 = vlaneseq
    %v7078 = vshrl.u32 %v7077, 7
    %v7079 = vsub.s32 %v6972, %v7078
    %v7080 = vrot.slane %v6819, %v7079
    %v7081 = vsel %vm6977, %v7080, %v7076
    %v7082 = vlaneseq
    %v7083 = vshrl.u32 %v7082, 7
    %v7084 = vsub.s32 %v6979, %v7083
    %v7085 = vrot.slane %v6822, %v7084
    %v7086 = vsel %vm6984, %v7085, %v7081
    %v7087 = vlaneseq
    %v7088 = vshrl.u32 %v7087, 7
    %v7089 = vsub.s32 %v6986, %v7088
    %v7090 = vrot.slane %v6825, %v7089
    %v7091 = vsel %vm6991, %v7090, %v7086
    %v7092 = vlaneseq
    %v7093 = vshrl.u32 %v7092, 7
    %v7094 = vsub.s32 %v6993, %v7093
    %v7095 = vrot.slane %v6828, %v7094
    %v7096 = vsel %vm6998, %v7095, %v7091
    %v7097 = vlaneseq
    %v7098 = vshrl.u32 %v7097, 7
    %v7099 = vsub.s32 %v7000, %v7098
    %v7100 = vrot.slane %v6831, %v7099
    %v7101 = vsel %vm7005, %v7100, %v7096
    %v7102 = vlaneseq
    %v7103 = vshrl.u32 %v7102, 7
    %v7104 = vsub.s32 %v7007, %v7103
    %v7105 = vrot.slane %v6834, %v7104
    %v7106 = vsel %vm7012, %v7105, %v7101
    %v7107 = vlaneseq
    %v7108 = vshrl.u32 %v7107, 7
    %v7109 = vsub.s32 %v7014, %v7108
    %v7110 = vrot.slane %v6837, %v7109
    %v7111 = vsel %vm7019, %v7110, %v7106
    %v7112 = vlaneseq
    %v7113 = vshrl.u32 %v7112, 7
    %v7114 = vsub.s32 %v7021, %v7113
    %v7115 = vrot.slane %v6840, %v7114
    %v7116 = vsel %vm7026, %v7115, %v7111
    %v7117 = vlaneseq
    %v7118 = vshrl.u32 %v7117, 7
    %v7119 = vsub.s32 %v7028, %v7118
    %v7120 = vrot.slane %v6843, %v7119
    %v7121 = vsel %vm7033, %v7120, %v7116
    %v7122 = vlaneseq
    %v7123 = vshrl.u32 %v7122, 7
    %v7124 = vsub.s32 %v7035, %v7123
    %v7125 = vrot.slane %v6846, %v7124
    %v7126 = vsel %vm7040, %v7125, %v7121
    %v7127 = vlaneseq
    %v7128 = vshrl.u32 %v7127, 7
    %v7129 = vsub.s32 %v7042, %v7128
    %v7130 = vrot.slane %v6849, %v7129
    %v7131 = vsel %vm7047, %v7130, %v7126
    %v7132 = vlaneseq
    %v7133 = vshrl.u32 %v7132, 7
    %v7134 = vsub.s32 %v7049, %v7133
    %v7135 = vrot.slane %v6852, %v7134
    %v7136 = vsel %vm7054, %v7135, %v7131
    %v7137 = vlaneseq
    %v7138 = vshrl.u32 %v7137, 7
    %v7139 = vsub.s32 %v7056, %v7138
    %v7140 = vrot.slane %v6855, %v7139
    %v7141 = vsel %vm7061, %v7140, %v7136
    %v7142 = vlaneseq
    %v7143 = vshrl.u32 %v7142, 7
    %v7144 = vsub.s32 %v6953, %v7143
    %v7145 = vrot.slane %v6858, %v7144
    %v7146 = vlaneseq
    %v7147 = vshrl.u32 %v7146, 7
    %v7148 = vsub.s32 %v6958, %v7147
    %v7149 = vrot.slane %v6861, %v7148
    %v7150 = vsel %vm6963, %v7149, %v7145
    %v7151 = vlaneseq
    %v7152 = vshrl.u32 %v7151, 7
    %v7153 = vsub.s32 %v6965, %v7152
    %v7154 = vrot.slane %v6864, %v7153
    %v7155 = vsel %vm6970, %v7154, %v7150
    %v7156 = vlaneseq
    %v7157 = vshrl.u32 %v7156, 7
    %v7158 = vsub.s32 %v6972, %v7157
    %v7159 = vrot.slane %v6867, %v7158
    %v7160 = vsel %vm6977, %v7159, %v7155
    %v7161 = vlaneseq
    %v7162 = vshrl.u32 %v7161, 7
    %v7163 = vsub.s32 %v6979, %v7162
    %v7164 = vrot.slane %v6870, %v7163
    %v7165 = vsel %vm6984, %v7164, %v7160
    %v7166 = vlaneseq
    %v7167 = vshrl.u32 %v7166, 7
    %v7168 = vsub.s32 %v6986, %v7167
    %v7169 = vrot.slane %v6873, %v7168
    %v7170 = vsel %vm6991, %v7169, %v7165
    %v7171 = vlaneseq
    %v7172 = vshrl.u32 %v7171, 7
    %v7173 = vsub.s32 %v6993, %v7172
    %v7174 = vrot.slane %v6876, %v7173
    %v7175 = vsel %vm6998, %v7174, %v7170
    %v7176 = vlaneseq
    %v7177 = vshrl.u32 %v7176, 7
    %v7178 = vsub.s32 %v7000, %v7177
    %v7179 = vrot.slane %v6879, %v7178
    %v7180 = vsel %vm7005, %v7179, %v7175
    %v7181 = vlaneseq
    %v7182 = vshrl.u32 %v7181, 7
    %v7183 = vsub.s32 %v7007, %v7182
    %v7184 = vrot.slane %v6882, %v7183
    %v7185 = vsel %vm7012, %v7184, %v7180
    %v7186 = vlaneseq
    %v7187 = vshrl.u32 %v7186, 7
    %v7188 = vsub.s32 %v7014, %v7187
    %v7189 = vrot.slane %v6885, %v7188
    %v7190 = vsel %vm7019, %v7189, %v7185
    %v7191 = vlaneseq
    %v7192 = vshrl.u32 %v7191, 7
    %v7193 = vsub.s32 %v7021, %v7192
    %v7194 = vrot.slane %v6888, %v7193
    %v7195 = vsel %vm7026, %v7194, %v7190
    %v7196 = vlaneseq
    %v7197 = vshrl.u32 %v7196, 7
    %v7198 = vsub.s32 %v7028, %v7197
    %v7199 = vrot.slane %v6891, %v7198
    %v7200 = vsel %vm7033, %v7199, %v7195
    %v7201 = vlaneseq
    %v7202 = vshrl.u32 %v7201, 7
    %v7203 = vsub.s32 %v7035, %v7202
    %v7204 = vrot.slane %v6894, %v7203
    %v7205 = vsel %vm7040, %v7204, %v7200
    %v7206 = vlaneseq
    %v7207 = vshrl.u32 %v7206, 7
    %v7208 = vsub.s32 %v7042, %v7207
    %v7209 = vrot.slane %v6897, %v7208
    %v7210 = vsel %vm7047, %v7209, %v7205
    %v7211 = vlaneseq
    %v7212 = vshrl.u32 %v7211, 7
    %v7213 = vsub.s32 %v7049, %v7212
    %v7214 = vrot.slane %v6900, %v7213
    %v7215 = vsel %vm7054, %v7214, %v7210
    %v7216 = vlaneseq
    %v7217 = vshrl.u32 %v7216, 7
    %v7218 = vsub.s32 %v7056, %v7217
    %v7219 = vrot.slane %v6903, %v7218
    %v7220 = vsel %vm7061, %v7219, %v7215
    %v7221 = vlaneseq
    %v7222 = vshrl.u32 %v7221, 7
    %v7223 = vsub.s32 %v6953, %v7222
    %v7224 = vrot.slane %v6906, %v7223
    %v7225 = vlaneseq
    %v7226 = vshrl.u32 %v7225, 7
    %v7227 = vsub.s32 %v6958, %v7226
    %v7228 = vrot.slane %v6909, %v7227
    %v7229 = vsel %vm6963, %v7228, %v7224
    %v7230 = vlaneseq
    %v7231 = vshrl.u32 %v7230, 7
    %v7232 = vsub.s32 %v6965, %v7231
    %v7233 = vrot.slane %v6912, %v7232
    %v7234 = vsel %vm6970, %v7233, %v7229
    %v7235 = vlaneseq
    %v7236 = vshrl.u32 %v7235, 7
    %v7237 = vsub.s32 %v6972, %v7236
    %v7238 = vrot.slane %v6915, %v7237
    %v7239 = vsel %vm6977, %v7238, %v7234
    %v7240 = vlaneseq
    %v7241 = vshrl.u32 %v7240, 7
    %v7242 = vsub.s32 %v6979, %v7241
    %v7243 = vrot.slane %v6918, %v7242
    %v7244 = vsel %vm6984, %v7243, %v7239
    %v7245 = vlaneseq
    %v7246 = vshrl.u32 %v7245, 7
    %v7247 = vsub.s32 %v6986, %v7246
    %v7248 = vrot.slane %v6921, %v7247
    %v7249 = vsel %vm6991, %v7248, %v7244
    %v7250 = vlaneseq
    %v7251 = vshrl.u32 %v7250, 7
    %v7252 = vsub.s32 %v6993, %v7251
    %v7253 = vrot.slane %v6924, %v7252
    %v7254 = vsel %vm6998, %v7253, %v7249
    %v7255 = vlaneseq
    %v7256 = vshrl.u32 %v7255, 7
    %v7257 = vsub.s32 %v7000, %v7256
    %v7258 = vrot.slane %v6927, %v7257
    %v7259 = vsel %vm7005, %v7258, %v7254
    %v7260 = vlaneseq
    %v7261 = vshrl.u32 %v7260, 7
    %v7262 = vsub.s32 %v7007, %v7261
    %v7263 = vrot.slane %v6930, %v7262
    %v7264 = vsel %vm7012, %v7263, %v7259
    %v7265 = vlaneseq
    %v7266 = vshrl.u32 %v7265, 7
    %v7267 = vsub.s32 %v7014, %v7266
    %v7268 = vrot.slane %v6933, %v7267
    %v7269 = vsel %vm7019, %v7268, %v7264
    %v7270 = vlaneseq
    %v7271 = vshrl.u32 %v7270, 7
    %v7272 = vsub.s32 %v7021, %v7271
    %v7273 = vrot.slane %v6936, %v7272
    %v7274 = vsel %vm7026, %v7273, %v7269
    %v7275 = vlaneseq
    %v7276 = vshrl.u32 %v7275, 7
    %v7277 = vsub.s32 %v7028, %v7276
    %v7278 = vrot.slane %v6939, %v7277
    %v7279 = vsel %vm7033, %v7278, %v7274
    %v7280 = vlaneseq
    %v7281 = vshrl.u32 %v7280, 7
    %v7282 = vsub.s32 %v7035, %v7281
    %v7283 = vrot.slane %v6942, %v7282
    %v7284 = vsel %vm7040, %v7283, %v7279
    %v7285 = vlaneseq
    %v7286 = vshrl.u32 %v7285, 7
    %v7287 = vsub.s32 %v7042, %v7286
    %v7288 = vrot.slane %v6945, %v7287
    %v7289 = vsel %vm7047, %v7288, %v7284
    %v7290 = vlaneseq
    %v7291 = vshrl.u32 %v7290, 7
    %v7292 = vsub.s32 %v7049, %v7291
    %v7293 = vrot.slane %v6948, %v7292
    %v7294 = vsel %vm7054, %v7293, %v7289
    %v7295 = vlaneseq
    %v7296 = vshrl.u32 %v7295, 7
    %v7297 = vsub.s32 %v7056, %v7296
    %v7298 = vrot.slane %v6951, %v7297
    %v7299 = vsel %vm7061, %v7298, %v7294
    %v7300 = vcombine.low %v7062, %v7141
    %v7301 = vcombine.low %v7220, %v7299
    %v7303 = vunpack.c.l.s4 1966171168
    %v7304 = vunpack.c.0.s8 %v7303
    %v7305 = vlaneseq
    %v7306 = vshrl.u32 %v7305, 7
    %v7307 = vsub.s32 %v7304, %v7306
    %v7308 = vrot.slane %v7300, %v7307
    %v7310 = vunpack.c.l.s4 1966171168
    %v7311 = vunpack.c.0.s8 %v7310
    %v7312 = vlaneseq
    %v7313 = vshrl.u32 %v7312, 7
    %v7314 = vsub.s32 %v7311, %v7313
    %v7315 = vrot.slane %v7301, %v7314
    %v7316 = vcombine.low %v7308, %v7315
    %v7318 = vunpack.c.l.s4 1966171168
    %v7319 = vunpack.c.0.s8 %v7318
    %v7320 = vlaneseq
    %v7321 = vshrl.u32 %v7320, 7
    %v7322 = vsub.s32 %v7319, %v7321
    %v7323 = vrot.slane %v7316, %v7322
    %v7325 = vlaneseq
    %vm7326 = vcmp.ge.s32.totalorder %v7325, 0
    %vm7327 = vcmp.lt.s32.totalorder %v7325, 512
    %vm7328 = vmand %vm7326, %vm7327
    %7329 = vst.msk [vmem:[#allocation3] sm:$0xf] %vm7328, %v7323
    // Predicated region
    $region30: #{tpu_custom_call.1} parent=1 // pred_check
      _
    $region31: #{tpu_custom_call.1} parent=1 // pred_check_branch
      %7331 = sbr.rel (0) target = $region33
    $region32: #{tpu_custom_call.1} parent=1 // pred_region
      %s7333 = ssub.s32 64, 64
      %7334 = vsyncadd [#allocation4], %s7333
      %s7336 = sshll.u32 [#allocation3], 4
      %s7337 = int_to_ptr.vmem [resolvable:$true] %s7336
      %7339 = dma.vmem_to_hbm [thread:$0]  %s7337, 64, %s7, [#allocation4]
    $region33: #{tpu_custom_call.1} parent=1 // pred_fallthru
      _
    // Predicated region
    $region34: #{tpu_custom_call.1} parent=1 // pred_check
      _
    $region35: #{tpu_custom_call.1} parent=1 // pred_check_branch
      %7341 = sbr.rel (0) target = $region37
    $region36: #{tpu_custom_call.1} parent=1 // pred_region
      %7342 = dma.done [#allocation4], 64
    $region37: #{tpu_custom_call.1} parent=1 // pred_fallthru
      _
    %7343 = vsyncpa [#allocation4], 1

</llo_original>
